<compile_context>
chip_gen: v7x
topology: tpu7x:2x2x1
jax: 0.10.0
libtpu: 0.0.40
codegen_flags: <defaults>
</compile_context>

<pallas_src>
import jax
import jax.numpy as jnp
from jax.experimental import pallas as pl
from jax.experimental.pallas import tpu as pltpu

HP = 128   # padded per-gate hidden width (one full lane tile)
CP = 128   # padded combined head output width (lane dense)


# ------------------------------ fused kernel ----------------------------------

def _make_fused_kernel(num_layers, hp):
    """Kernel: refs = [x, (W,U,b)*num_layers, fc_w, fc_b, out]."""

    def kernel(*refs):
        x_ref = refs[0]
        layer_refs = refs[1:1 + 3 * num_layers]
        wfc_ref = refs[1 + 3 * num_layers]
        bfc_ref = refs[2 + 3 * num_layers]
        out_ref = refs[3 + 3 * num_layers]

        S, B, _ = x_ref.shape

        # Load every weight once; reused across all timesteps.
        layer_w = []
        for l in range(num_layers):
            W = layer_refs[3 * l][...]       # (in_dim, 4*HP)
            U = layer_refs[3 * l + 1][...]   # (HP, 4*HP)
            b = layer_refs[3 * l + 2][...]   # (1, 4*HP)
            layer_w.append((W, U, b))

        def cell(inp, h_prev, c_prev, W, U, b):
            gates = (
                jnp.dot(inp, W, preferred_element_type=jnp.float32)
                + jnp.dot(h_prev, U, preferred_element_type=jnp.float32)
                + b
            )  # (B, 4*HP); PyTorch gate order [i, f, g, o], one lane tile each.
            # Slices below are at 128-lane boundaries -> whole-vreg selects;
            # sigmoid/tanh run full-width on the EUP.
            i_g = jax.nn.sigmoid(gates[:, 0 * hp:1 * hp])
            f_g = jax.nn.sigmoid(gates[:, 1 * hp:2 * hp])
            g_g = jnp.tanh(gates[:, 2 * hp:3 * hp])
            o_g = jax.nn.sigmoid(gates[:, 3 * hp:4 * hp])
            c_new = f_g * c_prev + i_g * g_g
            h_new = o_g * jnp.tanh(c_new)
            return h_new, c_new

        def step(t, carry):
            hs, cs = carry
            inp = x_ref[t]                   # (B, D) current timestep input
            new_hs, new_cs = [], []
            for l in range(num_layers):
                W, U, b = layer_w[l]
                h_new, c_new = cell(inp, hs[l], cs[l], W, U, b)
                new_hs.append(h_new)
                new_cs.append(c_new)
                inp = h_new                  # inter-layer dropout: identity (eval)
            return tuple(new_hs), tuple(new_cs)

        zeros = jnp.zeros((B, hp), jnp.float32)
        init = (tuple(zeros for _ in range(num_layers)),
                tuple(zeros for _ in range(num_layers)))
        hs, _ = jax.lax.fori_loop(0, S, step, init, unroll=True)

        # Fused fc_label + fc_type head, lane-dense (B, CP) output.
        out_ref[...] = (
            jnp.dot(hs[-1], wfc_ref[...], preferred_element_type=jnp.float32)
            + bfc_ref[...]
        ).astype(out_ref.dtype)

    return kernel


def _fused_lstm_forward(x_tm, layers, fc_w, fc_b):
    """x_tm: (S, B, D) time-major f32. layers: list of packed (W, U, b)."""
    S, B, D = x_tm.shape
    num_layers = len(layers)
    cp = fc_w.shape[1]

    flat = [x_tm]
    in_specs = [pl.BlockSpec((S, B, D), lambda i: (0, 0, 0))]
    for (W, U, b) in layers:
        flat += [W, U, b]
        in_specs += [
            pl.BlockSpec(W.shape, lambda i: (0, 0)),
            pl.BlockSpec(U.shape, lambda i: (0, 0)),
            pl.BlockSpec(b.shape, lambda i: (0, 0)),
        ]
    flat += [fc_w, fc_b]
    in_specs += [
        pl.BlockSpec(fc_w.shape, lambda i: (0, 0)),
        pl.BlockSpec(fc_b.shape, lambda i: (0, 0)),
    ]

    return pl.pallas_call(
        _make_fused_kernel(num_layers, HP),
        out_shape=jax.ShapeDtypeStruct((B, cp), jnp.float32),
        grid_spec=pltpu.PrefetchScalarGridSpec(
            num_scalar_prefetch=0,
            grid=(1,),
            in_specs=in_specs,
            out_specs=pl.BlockSpec((B, cp), lambda i: (0, 0)),
        ),
        compiler_params=pltpu.CompilerParams(
            dimension_semantics=("arbitrary",)),
    )(*flat)


# ------------------------------ parameter packing ------------------------------

def init_params(key, input_size, hidden_size, num_layers,
                num_classes_label, num_classes_type):
    """PyTorch-layout params, U(-1/sqrt(H), 1/sqrt(H)) init (like nn.LSTM/Linear)."""
    params = {"lstm": []}
    k = 1.0 / jnp.sqrt(jnp.float32(hidden_size))
    for layer in range(num_layers):
        in_dim = input_size if layer == 0 else hidden_size
        key, k1, k2, k3, k4 = jax.random.split(key, 5)
        params["lstm"].append({
            "w_ih": jax.random.uniform(k1, (4 * hidden_size, in_dim),
                                       jnp.float32, -k, k),
            "w_hh": jax.random.uniform(k2, (4 * hidden_size, hidden_size),
                                       jnp.float32, -k, k),
            "b_ih": jax.random.uniform(k3, (4 * hidden_size,),
                                       jnp.float32, -k, k),
            "b_hh": jax.random.uniform(k4, (4 * hidden_size,),
                                       jnp.float32, -k, k),
        })
    key, k1, k2, k3, k4 = jax.random.split(key, 5)
    params["fc_label_w"] = jax.random.uniform(
        k1, (num_classes_label, hidden_size), jnp.float32, -k, k)
    params["fc_label_b"] = jax.random.uniform(
        k2, (num_classes_label,), jnp.float32, -k, k)
    params["fc_type_w"] = jax.random.uniform(
        k3, (num_classes_type, hidden_size), jnp.float32, -k, k)
    params["fc_type_b"] = jax.random.uniform(
        k4, (num_classes_type,), jnp.float32, -k, k)
    return params


def pack_params(params, hidden_size, num_classes_label, num_classes_type):
    """One-time repack: transpose, fuse biases, lane-pad each gate to HP=128.

    Padding lanes have zero weights/bias, so padded h/c lanes stay exactly 0
    through the recurrence (f=i=o=0.5, g=0, c0=0 => c stays 0, h stays 0).
    """
    H = hidden_size
    assert H <= HP

    def pack_gate_matrix(w, pad_rows):
        # w: PyTorch layout (4H, in_dim) -> (rows, 4*HP), transposed, each gate's
        # H output columns at the start of its own HP-wide lane tile.
        w_t = jnp.asarray(w, jnp.float32).T            # (in_dim, 4H)
        in_dim = w_t.shape[0]
        rows = in_dim if pad_rows is None else pad_rows
        out = jnp.zeros((rows, 4 * HP), jnp.float32)
        for g in range(4):
            out = out.at[:in_dim, g * HP:g * HP + H].set(w_t[:, g * H:(g + 1) * H])
        return out

    def pack_gate_bias(b_ih, b_hh):
        b = jnp.asarray(b_ih, jnp.float32) + jnp.asarray(b_hh, jnp.float32)
        out = jnp.zeros((4 * HP,), jnp.float32)
        for g in range(4):
            out = out.at[g * HP:g * HP + H].set(b[g * H:(g + 1) * H])
        return out.reshape(1, 4 * HP)

    layers = []
    for i, lp in enumerate(params["lstm"]):
        W = pack_gate_matrix(lp["w_ih"], pad_rows=None if i == 0 else HP)
        U = pack_gate_matrix(lp["w_hh"], pad_rows=HP)
        b = pack_gate_bias(lp["b_ih"], lp["b_hh"])
        layers.append((W, U, b))

    ncl, nct = num_classes_label, num_classes_type
    assert ncl + nct <= CP
    fc_w = jnp.zeros((HP, CP), jnp.float32)
    fc_w = fc_w.at[:H, :ncl].set(jnp.asarray(params["fc_label_w"], jnp.float32).T)
    fc_w = fc_w.at[:H, ncl:ncl + nct].set(
        jnp.asarray(params["fc_type_w"], jnp.float32).T)
    fc_b = jnp.zeros((CP,), jnp.float32)
    fc_b = fc_b.at[:ncl].set(jnp.asarray(params["fc_label_b"], jnp.float32))
    fc_b = fc_b.at[ncl:ncl + nct].set(jnp.asarray(params["fc_type_b"], jnp.float32))

    return {"layers": layers, "fc_w": fc_w, "fc_b": fc_b.reshape(1, CP)}


# --------------------------------- forward -------------------------------------

def make_forward(num_classes_label, num_classes_type):
    @jax.jit
    def forward(packed, x):
        """x: (batch, seq, input_size), batch_first like the PyTorch module."""
        x_tm = jnp.transpose(x, (1, 0, 2)).astype(jnp.float32)   # (S, B, D)
        out = _fused_lstm_forward(x_tm, packed["layers"],
                                  packed["fc_w"], packed["fc_b"])
        label_out = out[:, :num_classes_label]
        type_out = out[:, num_classes_label:num_classes_label + num_classes_type]
        return label_out, type_out
    return forward


# --------------------------- pure-JAX reference --------------------------------

def reference_forward(params, x):
    hp = jnp.transpose(x, (1, 0, 2)).astype(jnp.float32)  # (S, B, D)
    S, B, _ = hp.shape
    for lp in params["lstm"]:
        H = lp["w_hh"].shape[1]
        h = jnp.zeros((B, H), jnp.float32)
        c = jnp.zeros((B, H), jnp.float32)
        outs = []
        for t in range(S):
            gates = (hp[t] @ lp["w_ih"].T + h @ lp["w_hh"].T
                     + lp["b_ih"] + lp["b_hh"])
            i = jax.nn.sigmoid(gates[:, :H])
            f = jax.nn.sigmoid(gates[:, H:2 * H])
            g = jnp.tanh(gates[:, 2 * H:3 * H])
            o = jax.nn.sigmoid(gates[:, 3 * H:4 * H])
            c = f * c + i * g
            h = o * jnp.tanh(c)
            outs.append(h)
        hp = jnp.stack(outs, axis=0)
    last = hp[-1]
    label = last @ params["fc_label_w"].T + params["fc_label_b"]
    typ = last @ params["fc_type_w"].T + params["fc_type_b"]
    return label, typ


# ------------------------------------ main --------------------------------------

if __name__ == "__main__":
    batch = 2
    seq = 8
    input_size = 16
    hidden_size = 32
    num_layers = 2
    num_classes_label = 5
    num_classes_type = 3

    key = jax.random.PRNGKey(0)
    key, pkey, xkey = jax.random.split(key, 3)

    params = init_params(pkey, input_size, hidden_size, num_layers,
                         num_classes_label, num_classes_type)
    packed = pack_params(params, hidden_size, num_classes_label, num_classes_type)
    x = jax.random.normal(xkey, (batch, seq, input_size), jnp.float32)

    forward = make_forward(num_classes_label, num_classes_type)
    label_out, type_out = forward(packed, x)
    jax.block_until_ready((label_out, type_out))

    assert label_out.shape == (batch, num_classes_label)
    assert type_out.shape == (batch, num_classes_type)

    ref_label, ref_type = reference_forward(params, x)
    assert bool(jnp.allclose(label_out, ref_label, atol=2e-2, rtol=2e-2))
    assert bool(jnp.allclose(type_out, ref_type, atol=2e-2, rtol=2e-2))

    print("KERNEL_OK")
</pallas_src>

<mosaic_0001>
module attributes {stable_mosaic.version = 11 : i64} {
  func.func @kernel(%arg0: i32, %arg1: memref<8x2x16xf32, #tpu.memory_space<vmem>>, %arg2: memref<16x512xf32, #tpu.memory_space<vmem>>, %arg3: memref<128x512xf32, #tpu.memory_space<vmem>>, %arg4: memref<1x512xf32, #tpu.memory_space<vmem>>, %arg5: memref<128x512xf32, #tpu.memory_space<vmem>>, %arg6: memref<128x512xf32, #tpu.memory_space<vmem>>, %arg7: memref<1x512xf32, #tpu.memory_space<vmem>>, %arg8: memref<128x128xf32, #tpu.memory_space<vmem>>, %arg9: memref<1x128xf32, #tpu.memory_space<vmem>>, %arg10: memref<2x128xf32, #tpu.memory_space<vmem>>) attributes {dimension_semantics = [#tpu.dimension_semantics<arbitrary>], iteration_bounds = array<i64: 1>, scalar_prefetch = 0 : i64, scratch_operands = 0 : i64, tpu.core_type = #tpu.core_type<tc>, window_params = [{pipeline_mode = #tpu.pipeline_mode<synchronous>, transform_indices = @transform_0, window_bounds = array<i64: 8, 2, 16>}, {pipeline_mode = #tpu.pipeline_mode<synchronous>, transform_indices = @transform_1, window_bounds = array<i64: 16, 512>}, {pipeline_mode = #tpu.pipeline_mode<synchronous>, transform_indices = @transform_2, window_bounds = array<i64: 128, 512>}, {pipeline_mode = #tpu.pipeline_mode<synchronous>, transform_indices = @transform_3, window_bounds = array<i64: 1, 512>}, {pipeline_mode = #tpu.pipeline_mode<synchronous>, transform_indices = @transform_4, window_bounds = array<i64: 128, 512>}, {pipeline_mode = #tpu.pipeline_mode<synchronous>, transform_indices = @transform_5, window_bounds = array<i64: 128, 512>}, {pipeline_mode = #tpu.pipeline_mode<synchronous>, transform_indices = @transform_6, window_bounds = array<i64: 1, 512>}, {pipeline_mode = #tpu.pipeline_mode<synchronous>, transform_indices = @transform_7, window_bounds = array<i64: 128, 128>}, {pipeline_mode = #tpu.pipeline_mode<synchronous>, transform_indices = @transform_8, window_bounds = array<i64: 1, 128>}, {pipeline_mode = #tpu.pipeline_mode<synchronous>, transform_indices = @transform_9, window_bounds = array<i64: 2, 128>}]} {
    %c0 = arith.constant 0 : index
    %c0_0 = arith.constant 0 : index
    %0 = vector.load %arg2[%c0, %c0_0] : memref<16x512xf32, #tpu.memory_space<vmem>>, vector<16x512xf32>
    %c0_1 = arith.constant 0 : index
    %c0_2 = arith.constant 0 : index
    %1 = vector.load %arg3[%c0_1, %c0_2] : memref<128x512xf32, #tpu.memory_space<vmem>>, vector<128x512xf32>
    %c0_3 = arith.constant 0 : index
    %c0_4 = arith.constant 0 : index
    %2 = vector.load %arg4[%c0_3, %c0_4] : memref<1x512xf32, #tpu.memory_space<vmem>>, vector<1x512xf32>
    %c0_5 = arith.constant 0 : index
    %c0_6 = arith.constant 0 : index
    %3 = vector.load %arg5[%c0_5, %c0_6] : memref<128x512xf32, #tpu.memory_space<vmem>>, vector<128x512xf32>
    %c0_7 = arith.constant 0 : index
    %c0_8 = arith.constant 0 : index
    %4 = vector.load %arg6[%c0_7, %c0_8] : memref<128x512xf32, #tpu.memory_space<vmem>>, vector<128x512xf32>
    %c0_9 = arith.constant 0 : index
    %c0_10 = arith.constant 0 : index
    %5 = vector.load %arg7[%c0_9, %c0_10] : memref<1x512xf32, #tpu.memory_space<vmem>>, vector<1x512xf32>
    %cst = arith.constant 0.000000e+00 : f32
    %6 = vector.broadcast %cst : f32 to vector<2x128xf32>
    %c0_i32 = arith.constant 0 : i32
    %7 = arith.index_cast %c0_i32 : i32 to index
    %c0_11 = arith.constant 0 : index
    %c0_12 = arith.constant 0 : index
    %8 = vector.load %arg1[%7, %c0_11, %c0_12] : memref<8x2x16xf32, #tpu.memory_space<vmem>>, vector<1x2x16xf32>
    %9 = vector.shape_cast %8 : vector<1x2x16xf32> to vector<2x16xf32>
    %cst_13 = arith.constant dense<0.000000e+00> : vector<2x512xf32>
    %10 = tpu.matmul %9, %0, %cst_13 {dimension_numbers = #tpu.dot_dimension_numbers<[1], [0], [0], [1], [0, 0, 1, 1], [], []>} : vector<2x16xf32>, vector<16x512xf32>, vector<2x512xf32> -> vector<2x512xf32>
    %cst_14 = arith.constant dense<0.000000e+00> : vector<2x512xf32>
    %11 = tpu.matmul %6, %1, %cst_14 {dimension_numbers = #tpu.dot_dimension_numbers<[1], [0], [0], [1], [0, 0, 1, 1], [], []>} : vector<2x128xf32>, vector<128x512xf32>, vector<2x512xf32> -> vector<2x512xf32>
    %12 = arith.addf %10, %11 : vector<2x512xf32>
    %13 = vector.broadcast %2 : vector<1x512xf32> to vector<2x512xf32>
    %14 = arith.addf %12, %13 : vector<2x512xf32>
    %15 = vector.extract_strided_slice %14 {offsets = [0, 0], sizes = [2, 128], strides = [1, 1]} : vector<2x512xf32> to vector<2x128xf32>
    %16 = arith.negf %15 : vector<2x128xf32>
    %17 = math.exp %16 : vector<2x128xf32>
    %cst_15 = arith.constant 1.000000e+00 : f32
    %18 = vector.broadcast %cst_15 : f32 to vector<2x128xf32>
    %19 = arith.addf %18, %17 : vector<2x128xf32>
    %20 = arith.divf %18, %19 : vector<2x128xf32>
    %21 = vector.extract_strided_slice %14 {offsets = [0, 128], sizes = [2, 128], strides = [1, 1]} : vector<2x512xf32> to vector<2x128xf32>
    %22 = arith.negf %21 : vector<2x128xf32>
    %23 = math.exp %22 : vector<2x128xf32>
    %cst_16 = arith.constant 1.000000e+00 : f32
    %24 = vector.broadcast %cst_16 : f32 to vector<2x128xf32>
    %25 = arith.addf %24, %23 : vector<2x128xf32>
    %26 = arith.divf %24, %25 : vector<2x128xf32>
    %27 = vector.extract_strided_slice %14 {offsets = [0, 256], sizes = [2, 128], strides = [1, 1]} : vector<2x512xf32> to vector<2x128xf32>
    %28 = math.tanh %27 : vector<2x128xf32>
    %29 = vector.extract_strided_slice %14 {offsets = [0, 384], sizes = [2, 128], strides = [1, 1]} : vector<2x512xf32> to vector<2x128xf32>
    %30 = arith.negf %29 : vector<2x128xf32>
    %31 = math.exp %30 : vector<2x128xf32>
    %cst_17 = arith.constant 1.000000e+00 : f32
    %32 = vector.broadcast %cst_17 : f32 to vector<2x128xf32>
    %33 = arith.addf %32, %31 : vector<2x128xf32>
    %34 = arith.divf %32, %33 : vector<2x128xf32>
    %35 = arith.mulf %26, %6 : vector<2x128xf32>
    %36 = arith.mulf %20, %28 : vector<2x128xf32>
    %37 = arith.addf %35, %36 : vector<2x128xf32>
    %38 = math.tanh %37 : vector<2x128xf32>
    %39 = arith.mulf %34, %38 : vector<2x128xf32>
    %cst_18 = arith.constant dense<0.000000e+00> : vector<2x512xf32>
    %40 = tpu.matmul %39, %3, %cst_18 {dimension_numbers = #tpu.dot_dimension_numbers<[1], [0], [0], [1], [0, 0, 1, 1], [], []>} : vector<2x128xf32>, vector<128x512xf32>, vector<2x512xf32> -> vector<2x512xf32>
    %cst_19 = arith.constant dense<0.000000e+00> : vector<2x512xf32>
    %41 = tpu.matmul %6, %4, %cst_19 {dimension_numbers = #tpu.dot_dimension_numbers<[1], [0], [0], [1], [0, 0, 1, 1], [], []>} : vector<2x128xf32>, vector<128x512xf32>, vector<2x512xf32> -> vector<2x512xf32>
    %42 = arith.addf %40, %41 : vector<2x512xf32>
    %43 = vector.broadcast %5 : vector<1x512xf32> to vector<2x512xf32>
    %44 = arith.addf %42, %43 : vector<2x512xf32>
    %45 = vector.extract_strided_slice %44 {offsets = [0, 0], sizes = [2, 128], strides = [1, 1]} : vector<2x512xf32> to vector<2x128xf32>
    %46 = arith.negf %45 : vector<2x128xf32>
    %47 = math.exp %46 : vector<2x128xf32>
    %cst_20 = arith.constant 1.000000e+00 : f32
    %48 = vector.broadcast %cst_20 : f32 to vector<2x128xf32>
    %49 = arith.addf %48, %47 : vector<2x128xf32>
    %50 = arith.divf %48, %49 : vector<2x128xf32>
    %51 = vector.extract_strided_slice %44 {offsets = [0, 128], sizes = [2, 128], strides = [1, 1]} : vector<2x512xf32> to vector<2x128xf32>
    %52 = arith.negf %51 : vector<2x128xf32>
    %53 = math.exp %52 : vector<2x128xf32>
    %cst_21 = arith.constant 1.000000e+00 : f32
    %54 = vector.broadcast %cst_21 : f32 to vector<2x128xf32>
    %55 = arith.addf %54, %53 : vector<2x128xf32>
    %56 = arith.divf %54, %55 : vector<2x128xf32>
    %57 = vector.extract_strided_slice %44 {offsets = [0, 256], sizes = [2, 128], strides = [1, 1]} : vector<2x512xf32> to vector<2x128xf32>
    %58 = math.tanh %57 : vector<2x128xf32>
    %59 = vector.extract_strided_slice %44 {offsets = [0, 384], sizes = [2, 128], strides = [1, 1]} : vector<2x512xf32> to vector<2x128xf32>
    %60 = arith.negf %59 : vector<2x128xf32>
    %61 = math.exp %60 : vector<2x128xf32>
    %cst_22 = arith.constant 1.000000e+00 : f32
    %62 = vector.broadcast %cst_22 : f32 to vector<2x128xf32>
    %63 = arith.addf %62, %61 : vector<2x128xf32>
    %64 = arith.divf %62, %63 : vector<2x128xf32>
    %65 = arith.mulf %56, %6 : vector<2x128xf32>
    %66 = arith.mulf %50, %58 : vector<2x128xf32>
    %67 = arith.addf %65, %66 : vector<2x128xf32>
    %68 = math.tanh %67 : vector<2x128xf32>
    %69 = arith.mulf %64, %68 : vector<2x128xf32>
    %c1_i32 = arith.constant 1 : i32
    %70 = arith.index_cast %c1_i32 : i32 to index
    %c0_23 = arith.constant 0 : index
    %c0_24 = arith.constant 0 : index
    %71 = vector.load %arg1[%70, %c0_23, %c0_24] : memref<8x2x16xf32, #tpu.memory_space<vmem>>, vector<1x2x16xf32>
    %72 = vector.shape_cast %71 : vector<1x2x16xf32> to vector<2x16xf32>
    %cst_25 = arith.constant dense<0.000000e+00> : vector<2x512xf32>
    %73 = tpu.matmul %72, %0, %cst_25 {dimension_numbers = #tpu.dot_dimension_numbers<[1], [0], [0], [1], [0, 0, 1, 1], [], []>} : vector<2x16xf32>, vector<16x512xf32>, vector<2x512xf32> -> vector<2x512xf32>
    %cst_26 = arith.constant dense<0.000000e+00> : vector<2x512xf32>
    %74 = tpu.matmul %39, %1, %cst_26 {dimension_numbers = #tpu.dot_dimension_numbers<[1], [0], [0], [1], [0, 0, 1, 1], [], []>} : vector<2x128xf32>, vector<128x512xf32>, vector<2x512xf32> -> vector<2x512xf32>
    %75 = arith.addf %73, %74 : vector<2x512xf32>
    %76 = vector.broadcast %2 : vector<1x512xf32> to vector<2x512xf32>
    %77 = arith.addf %75, %76 : vector<2x512xf32>
    %78 = vector.extract_strided_slice %77 {offsets = [0, 0], sizes = [2, 128], strides = [1, 1]} : vector<2x512xf32> to vector<2x128xf32>
    %79 = arith.negf %78 : vector<2x128xf32>
    %80 = math.exp %79 : vector<2x128xf32>
    %cst_27 = arith.constant 1.000000e+00 : f32
    %81 = vector.broadcast %cst_27 : f32 to vector<2x128xf32>
    %82 = arith.addf %81, %80 : vector<2x128xf32>
    %83 = arith.divf %81, %82 : vector<2x128xf32>
    %84 = vector.extract_strided_slice %77 {offsets = [0, 128], sizes = [2, 128], strides = [1, 1]} : vector<2x512xf32> to vector<2x128xf32>
    %85 = arith.negf %84 : vector<2x128xf32>
    %86 = math.exp %85 : vector<2x128xf32>
    %cst_28 = arith.constant 1.000000e+00 : f32
    %87 = vector.broadcast %cst_28 : f32 to vector<2x128xf32>
    %88 = arith.addf %87, %86 : vector<2x128xf32>
    %89 = arith.divf %87, %88 : vector<2x128xf32>
    %90 = vector.extract_strided_slice %77 {offsets = [0, 256], sizes = [2, 128], strides = [1, 1]} : vector<2x512xf32> to vector<2x128xf32>
    %91 = math.tanh %90 : vector<2x128xf32>
    %92 = vector.extract_strided_slice %77 {offsets = [0, 384], sizes = [2, 128], strides = [1, 1]} : vector<2x512xf32> to vector<2x128xf32>
    %93 = arith.negf %92 : vector<2x128xf32>
    %94 = math.exp %93 : vector<2x128xf32>
    %cst_29 = arith.constant 1.000000e+00 : f32
    %95 = vector.broadcast %cst_29 : f32 to vector<2x128xf32>
    %96 = arith.addf %95, %94 : vector<2x128xf32>
    %97 = arith.divf %95, %96 : vector<2x128xf32>
    %98 = arith.mulf %89, %37 : vector<2x128xf32>
    %99 = arith.mulf %83, %91 : vector<2x128xf32>
    %100 = arith.addf %98, %99 : vector<2x128xf32>
    %101 = math.tanh %100 : vector<2x128xf32>
    %102 = arith.mulf %97, %101 : vector<2x128xf32>
    %cst_30 = arith.constant dense<0.000000e+00> : vector<2x512xf32>
    %103 = tpu.matmul %102, %3, %cst_30 {dimension_numbers = #tpu.dot_dimension_numbers<[1], [0], [0], [1], [0, 0, 1, 1], [], []>} : vector<2x128xf32>, vector<128x512xf32>, vector<2x512xf32> -> vector<2x512xf32>
    %cst_31 = arith.constant dense<0.000000e+00> : vector<2x512xf32>
    %104 = tpu.matmul %69, %4, %cst_31 {dimension_numbers = #tpu.dot_dimension_numbers<[1], [0], [0], [1], [0, 0, 1, 1], [], []>} : vector<2x128xf32>, vector<128x512xf32>, vector<2x512xf32> -> vector<2x512xf32>
    %105 = arith.addf %103, %104 : vector<2x512xf32>
    %106 = vector.broadcast %5 : vector<1x512xf32> to vector<2x512xf32>
    %107 = arith.addf %105, %106 : vector<2x512xf32>
    %108 = vector.extract_strided_slice %107 {offsets = [0, 0], sizes = [2, 128], strides = [1, 1]} : vector<2x512xf32> to vector<2x128xf32>
    %109 = arith.negf %108 : vector<2x128xf32>
    %110 = math.exp %109 : vector<2x128xf32>
    %cst_32 = arith.constant 1.000000e+00 : f32
    %111 = vector.broadcast %cst_32 : f32 to vector<2x128xf32>
    %112 = arith.addf %111, %110 : vector<2x128xf32>
    %113 = arith.divf %111, %112 : vector<2x128xf32>
    %114 = vector.extract_strided_slice %107 {offsets = [0, 128], sizes = [2, 128], strides = [1, 1]} : vector<2x512xf32> to vector<2x128xf32>
    %115 = arith.negf %114 : vector<2x128xf32>
    %116 = math.exp %115 : vector<2x128xf32>
    %cst_33 = arith.constant 1.000000e+00 : f32
    %117 = vector.broadcast %cst_33 : f32 to vector<2x128xf32>
    %118 = arith.addf %117, %116 : vector<2x128xf32>
    %119 = arith.divf %117, %118 : vector<2x128xf32>
    %120 = vector.extract_strided_slice %107 {offsets = [0, 256], sizes = [2, 128], strides = [1, 1]} : vector<2x512xf32> to vector<2x128xf32>
    %121 = math.tanh %120 : vector<2x128xf32>
    %122 = vector.extract_strided_slice %107 {offsets = [0, 384], sizes = [2, 128], strides = [1, 1]} : vector<2x512xf32> to vector<2x128xf32>
    %123 = arith.negf %122 : vector<2x128xf32>
    %124 = math.exp %123 : vector<2x128xf32>
    %cst_34 = arith.constant 1.000000e+00 : f32
    %125 = vector.broadcast %cst_34 : f32 to vector<2x128xf32>
    %126 = arith.addf %125, %124 : vector<2x128xf32>
    %127 = arith.divf %125, %126 : vector<2x128xf32>
    %128 = arith.mulf %119, %67 : vector<2x128xf32>
    %129 = arith.mulf %113, %121 : vector<2x128xf32>
    %130 = arith.addf %128, %129 : vector<2x128xf32>
    %131 = math.tanh %130 : vector<2x128xf32>
    %132 = arith.mulf %127, %131 : vector<2x128xf32>
    %c2_i32 = arith.constant 2 : i32
    %133 = arith.index_cast %c2_i32 : i32 to index
    %c0_35 = arith.constant 0 : index
    %c0_36 = arith.constant 0 : index
    %134 = vector.load %arg1[%133, %c0_35, %c0_36] : memref<8x2x16xf32, #tpu.memory_space<vmem>>, vector<1x2x16xf32>
    %135 = vector.shape_cast %134 : vector<1x2x16xf32> to vector<2x16xf32>
    %cst_37 = arith.constant dense<0.000000e+00> : vector<2x512xf32>
    %136 = tpu.matmul %135, %0, %cst_37 {dimension_numbers = #tpu.dot_dimension_numbers<[1], [0], [0], [1], [0, 0, 1, 1], [], []>} : vector<2x16xf32>, vector<16x512xf32>, vector<2x512xf32> -> vector<2x512xf32>
    %cst_38 = arith.constant dense<0.000000e+00> : vector<2x512xf32>
    %137 = tpu.matmul %102, %1, %cst_38 {dimension_numbers = #tpu.dot_dimension_numbers<[1], [0], [0], [1], [0, 0, 1, 1], [], []>} : vector<2x128xf32>, vector<128x512xf32>, vector<2x512xf32> -> vector<2x512xf32>
    %138 = arith.addf %136, %137 : vector<2x512xf32>
    %139 = vector.broadcast %2 : vector<1x512xf32> to vector<2x512xf32>
    %140 = arith.addf %138, %139 : vector<2x512xf32>
    %141 = vector.extract_strided_slice %140 {offsets = [0, 0], sizes = [2, 128], strides = [1, 1]} : vector<2x512xf32> to vector<2x128xf32>
    %142 = arith.negf %141 : vector<2x128xf32>
    %143 = math.exp %142 : vector<2x128xf32>
    %cst_39 = arith.constant 1.000000e+00 : f32
    %144 = vector.broadcast %cst_39 : f32 to vector<2x128xf32>
    %145 = arith.addf %144, %143 : vector<2x128xf32>
    %146 = arith.divf %144, %145 : vector<2x128xf32>
    %147 = vector.extract_strided_slice %140 {offsets = [0, 128], sizes = [2, 128], strides = [1, 1]} : vector<2x512xf32> to vector<2x128xf32>
    %148 = arith.negf %147 : vector<2x128xf32>
    %149 = math.exp %148 : vector<2x128xf32>
    %cst_40 = arith.constant 1.000000e+00 : f32
    %150 = vector.broadcast %cst_40 : f32 to vector<2x128xf32>
    %151 = arith.addf %150, %149 : vector<2x128xf32>
    %152 = arith.divf %150, %151 : vector<2x128xf32>
    %153 = vector.extract_strided_slice %140 {offsets = [0, 256], sizes = [2, 128], strides = [1, 1]} : vector<2x512xf32> to vector<2x128xf32>
    %154 = math.tanh %153 : vector<2x128xf32>
    %155 = vector.extract_strided_slice %140 {offsets = [0, 384], sizes = [2, 128], strides = [1, 1]} : vector<2x512xf32> to vector<2x128xf32>
    %156 = arith.negf %155 : vector<2x128xf32>
    %157 = math.exp %156 : vector<2x128xf32>
    %cst_41 = arith.constant 1.000000e+00 : f32
    %158 = vector.broadcast %cst_41 : f32 to vector<2x128xf32>
    %159 = arith.addf %158, %157 : vector<2x128xf32>
    %160 = arith.divf %158, %159 : vector<2x128xf32>
    %161 = arith.mulf %152, %100 : vector<2x128xf32>
    %162 = arith.mulf %146, %154 : vector<2x128xf32>
    %163 = arith.addf %161, %162 : vector<2x128xf32>
    %164 = math.tanh %163 : vector<2x128xf32>
    %165 = arith.mulf %160, %164 : vector<2x128xf32>
    %cst_42 = arith.constant dense<0.000000e+00> : vector<2x512xf32>
    %166 = tpu.matmul %165, %3, %cst_42 {dimension_numbers = #tpu.dot_dimension_numbers<[1], [0], [0], [1], [0, 0, 1, 1], [], []>} : vector<2x128xf32>, vector<128x512xf32>, vector<2x512xf32> -> vector<2x512xf32>
    %cst_43 = arith.constant dense<0.000000e+00> : vector<2x512xf32>
    %167 = tpu.matmul %132, %4, %cst_43 {dimension_numbers = #tpu.dot_dimension_numbers<[1], [0], [0], [1], [0, 0, 1, 1], [], []>} : vector<2x128xf32>, vector<128x512xf32>, vector<2x512xf32> -> vector<2x512xf32>
    %168 = arith.addf %166, %167 : vector<2x512xf32>
    %169 = vector.broadcast %5 : vector<1x512xf32> to vector<2x512xf32>
    %170 = arith.addf %168, %169 : vector<2x512xf32>
    %171 = vector.extract_strided_slice %170 {offsets = [0, 0], sizes = [2, 128], strides = [1, 1]} : vector<2x512xf32> to vector<2x128xf32>
    %172 = arith.negf %171 : vector<2x128xf32>
    %173 = math.exp %172 : vector<2x128xf32>
    %cst_44 = arith.constant 1.000000e+00 : f32
    %174 = vector.broadcast %cst_44 : f32 to vector<2x128xf32>
    %175 = arith.addf %174, %173 : vector<2x128xf32>
    %176 = arith.divf %174, %175 : vector<2x128xf32>
    %177 = vector.extract_strided_slice %170 {offsets = [0, 128], sizes = [2, 128], strides = [1, 1]} : vector<2x512xf32> to vector<2x128xf32>
    %178 = arith.negf %177 : vector<2x128xf32>
    %179 = math.exp %178 : vector<2x128xf32>
    %cst_45 = arith.constant 1.000000e+00 : f32
    %180 = vector.broadcast %cst_45 : f32 to vector<2x128xf32>
    %181 = arith.addf %180, %179 : vector<2x128xf32>
    %182 = arith.divf %180, %181 : vector<2x128xf32>
    %183 = vector.extract_strided_slice %170 {offsets = [0, 256], sizes = [2, 128], strides = [1, 1]} : vector<2x512xf32> to vector<2x128xf32>
    %184 = math.tanh %183 : vector<2x128xf32>
    %185 = vector.extract_strided_slice %170 {offsets = [0, 384], sizes = [2, 128], strides = [1, 1]} : vector<2x512xf32> to vector<2x128xf32>
    %186 = arith.negf %185 : vector<2x128xf32>
    %187 = math.exp %186 : vector<2x128xf32>
    %cst_46 = arith.constant 1.000000e+00 : f32
    %188 = vector.broadcast %cst_46 : f32 to vector<2x128xf32>
    %189 = arith.addf %188, %187 : vector<2x128xf32>
    %190 = arith.divf %188, %189 : vector<2x128xf32>
    %191 = arith.mulf %182, %130 : vector<2x128xf32>
    %192 = arith.mulf %176, %184 : vector<2x128xf32>
    %193 = arith.addf %191, %192 : vector<2x128xf32>
    %194 = math.tanh %193 : vector<2x128xf32>
    %195 = arith.mulf %190, %194 : vector<2x128xf32>
    %c3_i32 = arith.constant 3 : i32
    %196 = arith.index_cast %c3_i32 : i32 to index
    %c0_47 = arith.constant 0 : index
    %c0_48 = arith.constant 0 : index
    %197 = vector.load %arg1[%196, %c0_47, %c0_48] : memref<8x2x16xf32, #tpu.memory_space<vmem>>, vector<1x2x16xf32>
    %198 = vector.shape_cast %197 : vector<1x2x16xf32> to vector<2x16xf32>
    %cst_49 = arith.constant dense<0.000000e+00> : vector<2x512xf32>
    %199 = tpu.matmul %198, %0, %cst_49 {dimension_numbers = #tpu.dot_dimension_numbers<[1], [0], [0], [1], [0, 0, 1, 1], [], []>} : vector<2x16xf32>, vector<16x512xf32>, vector<2x512xf32> -> vector<2x512xf32>
    %cst_50 = arith.constant dense<0.000000e+00> : vector<2x512xf32>
    %200 = tpu.matmul %165, %1, %cst_50 {dimension_numbers = #tpu.dot_dimension_numbers<[1], [0], [0], [1], [0, 0, 1, 1], [], []>} : vector<2x128xf32>, vector<128x512xf32>, vector<2x512xf32> -> vector<2x512xf32>
    %201 = arith.addf %199, %200 : vector<2x512xf32>
    %202 = vector.broadcast %2 : vector<1x512xf32> to vector<2x512xf32>
    %203 = arith.addf %201, %202 : vector<2x512xf32>
    %204 = vector.extract_strided_slice %203 {offsets = [0, 0], sizes = [2, 128], strides = [1, 1]} : vector<2x512xf32> to vector<2x128xf32>
    %205 = arith.negf %204 : vector<2x128xf32>
    %206 = math.exp %205 : vector<2x128xf32>
    %cst_51 = arith.constant 1.000000e+00 : f32
    %207 = vector.broadcast %cst_51 : f32 to vector<2x128xf32>
    %208 = arith.addf %207, %206 : vector<2x128xf32>
    %209 = arith.divf %207, %208 : vector<2x128xf32>
    %210 = vector.extract_strided_slice %203 {offsets = [0, 128], sizes = [2, 128], strides = [1, 1]} : vector<2x512xf32> to vector<2x128xf32>
    %211 = arith.negf %210 : vector<2x128xf32>
    %212 = math.exp %211 : vector<2x128xf32>
    %cst_52 = arith.constant 1.000000e+00 : f32
    %213 = vector.broadcast %cst_52 : f32 to vector<2x128xf32>
    %214 = arith.addf %213, %212 : vector<2x128xf32>
    %215 = arith.divf %213, %214 : vector<2x128xf32>
    %216 = vector.extract_strided_slice %203 {offsets = [0, 256], sizes = [2, 128], strides = [1, 1]} : vector<2x512xf32> to vector<2x128xf32>
    %217 = math.tanh %216 : vector<2x128xf32>
    %218 = vector.extract_strided_slice %203 {offsets = [0, 384], sizes = [2, 128], strides = [1, 1]} : vector<2x512xf32> to vector<2x128xf32>
    %219 = arith.negf %218 : vector<2x128xf32>
    %220 = math.exp %219 : vector<2x128xf32>
    %cst_53 = arith.constant 1.000000e+00 : f32
    %221 = vector.broadcast %cst_53 : f32 to vector<2x128xf32>
    %222 = arith.addf %221, %220 : vector<2x128xf32>
    %223 = arith.divf %221, %222 : vector<2x128xf32>
    %224 = arith.mulf %215, %163 : vector<2x128xf32>
    %225 = arith.mulf %209, %217 : vector<2x128xf32>
    %226 = arith.addf %224, %225 : vector<2x128xf32>
    %227 = math.tanh %226 : vector<2x128xf32>
    %228 = arith.mulf %223, %227 : vector<2x128xf32>
    %cst_54 = arith.constant dense<0.000000e+00> : vector<2x512xf32>
    %229 = tpu.matmul %228, %3, %cst_54 {dimension_numbers = #tpu.dot_dimension_numbers<[1], [0], [0], [1], [0, 0, 1, 1], [], []>} : vector<2x128xf32>, vector<128x512xf32>, vector<2x512xf32> -> vector<2x512xf32>
    %cst_55 = arith.constant dense<0.000000e+00> : vector<2x512xf32>
    %230 = tpu.matmul %195, %4, %cst_55 {dimension_numbers = #tpu.dot_dimension_numbers<[1], [0], [0], [1], [0, 0, 1, 1], [], []>} : vector<2x128xf32>, vector<128x512xf32>, vector<2x512xf32> -> vector<2x512xf32>
    %231 = arith.addf %229, %230 : vector<2x512xf32>
    %232 = vector.broadcast %5 : vector<1x512xf32> to vector<2x512xf32>
    %233 = arith.addf %231, %232 : vector<2x512xf32>
    %234 = vector.extract_strided_slice %233 {offsets = [0, 0], sizes = [2, 128], strides = [1, 1]} : vector<2x512xf32> to vector<2x128xf32>
    %235 = arith.negf %234 : vector<2x128xf32>
    %236 = math.exp %235 : vector<2x128xf32>
    %cst_56 = arith.constant 1.000000e+00 : f32
    %237 = vector.broadcast %cst_56 : f32 to vector<2x128xf32>
    %238 = arith.addf %237, %236 : vector<2x128xf32>
    %239 = arith.divf %237, %238 : vector<2x128xf32>
    %240 = vector.extract_strided_slice %233 {offsets = [0, 128], sizes = [2, 128], strides = [1, 1]} : vector<2x512xf32> to vector<2x128xf32>
    %241 = arith.negf %240 : vector<2x128xf32>
    %242 = math.exp %241 : vector<2x128xf32>
    %cst_57 = arith.constant 1.000000e+00 : f32
    %243 = vector.broadcast %cst_57 : f32 to vector<2x128xf32>
    %244 = arith.addf %243, %242 : vector<2x128xf32>
    %245 = arith.divf %243, %244 : vector<2x128xf32>
    %246 = vector.extract_strided_slice %233 {offsets = [0, 256], sizes = [2, 128], strides = [1, 1]} : vector<2x512xf32> to vector<2x128xf32>
    %247 = math.tanh %246 : vector<2x128xf32>
    %248 = vector.extract_strided_slice %233 {offsets = [0, 384], sizes = [2, 128], strides = [1, 1]} : vector<2x512xf32> to vector<2x128xf32>
    %249 = arith.negf %248 : vector<2x128xf32>
    %250 = math.exp %249 : vector<2x128xf32>
    %cst_58 = arith.constant 1.000000e+00 : f32
    %251 = vector.broadcast %cst_58 : f32 to vector<2x128xf32>
    %252 = arith.addf %251, %250 : vector<2x128xf32>
    %253 = arith.divf %251, %252 : vector<2x128xf32>
    %254 = arith.mulf %245, %193 : vector<2x128xf32>
    %255 = arith.mulf %239, %247 : vector<2x128xf32>
    %256 = arith.addf %254, %255 : vector<2x128xf32>
    %257 = math.tanh %256 : vector<2x128xf32>
    %258 = arith.mulf %253, %257 : vector<2x128xf32>
    %c4_i32 = arith.constant 4 : i32
    %259 = arith.index_cast %c4_i32 : i32 to index
    %c0_59 = arith.constant 0 : index
    %c0_60 = arith.constant 0 : index
    %260 = vector.load %arg1[%259, %c0_59, %c0_60] : memref<8x2x16xf32, #tpu.memory_space<vmem>>, vector<1x2x16xf32>
    %261 = vector.shape_cast %260 : vector<1x2x16xf32> to vector<2x16xf32>
    %cst_61 = arith.constant dense<0.000000e+00> : vector<2x512xf32>
    %262 = tpu.matmul %261, %0, %cst_61 {dimension_numbers = #tpu.dot_dimension_numbers<[1], [0], [0], [1], [0, 0, 1, 1], [], []>} : vector<2x16xf32>, vector<16x512xf32>, vector<2x512xf32> -> vector<2x512xf32>
    %cst_62 = arith.constant dense<0.000000e+00> : vector<2x512xf32>
    %263 = tpu.matmul %228, %1, %cst_62 {dimension_numbers = #tpu.dot_dimension_numbers<[1], [0], [0], [1], [0, 0, 1, 1], [], []>} : vector<2x128xf32>, vector<128x512xf32>, vector<2x512xf32> -> vector<2x512xf32>
    %264 = arith.addf %262, %263 : vector<2x512xf32>
    %265 = vector.broadcast %2 : vector<1x512xf32> to vector<2x512xf32>
    %266 = arith.addf %264, %265 : vector<2x512xf32>
    %267 = vector.extract_strided_slice %266 {offsets = [0, 0], sizes = [2, 128], strides = [1, 1]} : vector<2x512xf32> to vector<2x128xf32>
    %268 = arith.negf %267 : vector<2x128xf32>
    %269 = math.exp %268 : vector<2x128xf32>
    %cst_63 = arith.constant 1.000000e+00 : f32
    %270 = vector.broadcast %cst_63 : f32 to vector<2x128xf32>
    %271 = arith.addf %270, %269 : vector<2x128xf32>
    %272 = arith.divf %270, %271 : vector<2x128xf32>
    %273 = vector.extract_strided_slice %266 {offsets = [0, 128], sizes = [2, 128], strides = [1, 1]} : vector<2x512xf32> to vector<2x128xf32>
    %274 = arith.negf %273 : vector<2x128xf32>
    %275 = math.exp %274 : vector<2x128xf32>
    %cst_64 = arith.constant 1.000000e+00 : f32
    %276 = vector.broadcast %cst_64 : f32 to vector<2x128xf32>
    %277 = arith.addf %276, %275 : vector<2x128xf32>
    %278 = arith.divf %276, %277 : vector<2x128xf32>
    %279 = vector.extract_strided_slice %266 {offsets = [0, 256], sizes = [2, 128], strides = [1, 1]} : vector<2x512xf32> to vector<2x128xf32>
    %280 = math.tanh %279 : vector<2x128xf32>
    %281 = vector.extract_strided_slice %266 {offsets = [0, 384], sizes = [2, 128], strides = [1, 1]} : vector<2x512xf32> to vector<2x128xf32>
    %282 = arith.negf %281 : vector<2x128xf32>
    %283 = math.exp %282 : vector<2x128xf32>
    %cst_65 = arith.constant 1.000000e+00 : f32
    %284 = vector.broadcast %cst_65 : f32 to vector<2x128xf32>
    %285 = arith.addf %284, %283 : vector<2x128xf32>
    %286 = arith.divf %284, %285 : vector<2x128xf32>
    %287 = arith.mulf %278, %226 : vector<2x128xf32>
    %288 = arith.mulf %272, %280 : vector<2x128xf32>
    %289 = arith.addf %287, %288 : vector<2x128xf32>
    %290 = math.tanh %289 : vector<2x128xf32>
    %291 = arith.mulf %286, %290 : vector<2x128xf32>
    %cst_66 = arith.constant dense<0.000000e+00> : vector<2x512xf32>
    %292 = tpu.matmul %291, %3, %cst_66 {dimension_numbers = #tpu.dot_dimension_numbers<[1], [0], [0], [1], [0, 0, 1, 1], [], []>} : vector<2x128xf32>, vector<128x512xf32>, vector<2x512xf32> -> vector<2x512xf32>
    %cst_67 = arith.constant dense<0.000000e+00> : vector<2x512xf32>
    %293 = tpu.matmul %258, %4, %cst_67 {dimension_numbers = #tpu.dot_dimension_numbers<[1], [0], [0], [1], [0, 0, 1, 1], [], []>} : vector<2x128xf32>, vector<128x512xf32>, vector<2x512xf32> -> vector<2x512xf32>
    %294 = arith.addf %292, %293 : vector<2x512xf32>
    %295 = vector.broadcast %5 : vector<1x512xf32> to vector<2x512xf32>
    %296 = arith.addf %294, %295 : vector<2x512xf32>
    %297 = vector.extract_strided_slice %296 {offsets = [0, 0], sizes = [2, 128], strides = [1, 1]} : vector<2x512xf32> to vector<2x128xf32>
    %298 = arith.negf %297 : vector<2x128xf32>
    %299 = math.exp %298 : vector<2x128xf32>
    %cst_68 = arith.constant 1.000000e+00 : f32
    %300 = vector.broadcast %cst_68 : f32 to vector<2x128xf32>
    %301 = arith.addf %300, %299 : vector<2x128xf32>
    %302 = arith.divf %300, %301 : vector<2x128xf32>
    %303 = vector.extract_strided_slice %296 {offsets = [0, 128], sizes = [2, 128], strides = [1, 1]} : vector<2x512xf32> to vector<2x128xf32>
    %304 = arith.negf %303 : vector<2x128xf32>
    %305 = math.exp %304 : vector<2x128xf32>
    %cst_69 = arith.constant 1.000000e+00 : f32
    %306 = vector.broadcast %cst_69 : f32 to vector<2x128xf32>
    %307 = arith.addf %306, %305 : vector<2x128xf32>
    %308 = arith.divf %306, %307 : vector<2x128xf32>
    %309 = vector.extract_strided_slice %296 {offsets = [0, 256], sizes = [2, 128], strides = [1, 1]} : vector<2x512xf32> to vector<2x128xf32>
    %310 = math.tanh %309 : vector<2x128xf32>
    %311 = vector.extract_strided_slice %296 {offsets = [0, 384], sizes = [2, 128], strides = [1, 1]} : vector<2x512xf32> to vector<2x128xf32>
    %312 = arith.negf %311 : vector<2x128xf32>
    %313 = math.exp %312 : vector<2x128xf32>
    %cst_70 = arith.constant 1.000000e+00 : f32
    %314 = vector.broadcast %cst_70 : f32 to vector<2x128xf32>
    %315 = arith.addf %314, %313 : vector<2x128xf32>
    %316 = arith.divf %314, %315 : vector<2x128xf32>
    %317 = arith.mulf %308, %256 : vector<2x128xf32>
    %318 = arith.mulf %302, %310 : vector<2x128xf32>
    %319 = arith.addf %317, %318 : vector<2x128xf32>
    %320 = math.tanh %319 : vector<2x128xf32>
    %321 = arith.mulf %316, %320 : vector<2x128xf32>
    %c5_i32 = arith.constant 5 : i32
    %322 = arith.index_cast %c5_i32 : i32 to index
    %c0_71 = arith.constant 0 : index
    %c0_72 = arith.constant 0 : index
    %323 = vector.load %arg1[%322, %c0_71, %c0_72] : memref<8x2x16xf32, #tpu.memory_space<vmem>>, vector<1x2x16xf32>
    %324 = vector.shape_cast %323 : vector<1x2x16xf32> to vector<2x16xf32>
    %cst_73 = arith.constant dense<0.000000e+00> : vector<2x512xf32>
    %325 = tpu.matmul %324, %0, %cst_73 {dimension_numbers = #tpu.dot_dimension_numbers<[1], [0], [0], [1], [0, 0, 1, 1], [], []>} : vector<2x16xf32>, vector<16x512xf32>, vector<2x512xf32> -> vector<2x512xf32>
    %cst_74 = arith.constant dense<0.000000e+00> : vector<2x512xf32>
    %326 = tpu.matmul %291, %1, %cst_74 {dimension_numbers = #tpu.dot_dimension_numbers<[1], [0], [0], [1], [0, 0, 1, 1], [], []>} : vector<2x128xf32>, vector<128x512xf32>, vector<2x512xf32> -> vector<2x512xf32>
    %327 = arith.addf %325, %326 : vector<2x512xf32>
    %328 = vector.broadcast %2 : vector<1x512xf32> to vector<2x512xf32>
    %329 = arith.addf %327, %328 : vector<2x512xf32>
    %330 = vector.extract_strided_slice %329 {offsets = [0, 0], sizes = [2, 128], strides = [1, 1]} : vector<2x512xf32> to vector<2x128xf32>
    %331 = arith.negf %330 : vector<2x128xf32>
    %332 = math.exp %331 : vector<2x128xf32>
    %cst_75 = arith.constant 1.000000e+00 : f32
    %333 = vector.broadcast %cst_75 : f32 to vector<2x128xf32>
    %334 = arith.addf %333, %332 : vector<2x128xf32>
    %335 = arith.divf %333, %334 : vector<2x128xf32>
    %336 = vector.extract_strided_slice %329 {offsets = [0, 128], sizes = [2, 128], strides = [1, 1]} : vector<2x512xf32> to vector<2x128xf32>
    %337 = arith.negf %336 : vector<2x128xf32>
    %338 = math.exp %337 : vector<2x128xf32>
    %cst_76 = arith.constant 1.000000e+00 : f32
    %339 = vector.broadcast %cst_76 : f32 to vector<2x128xf32>
    %340 = arith.addf %339, %338 : vector<2x128xf32>
    %341 = arith.divf %339, %340 : vector<2x128xf32>
    %342 = vector.extract_strided_slice %329 {offsets = [0, 256], sizes = [2, 128], strides = [1, 1]} : vector<2x512xf32> to vector<2x128xf32>
    %343 = math.tanh %342 : vector<2x128xf32>
    %344 = vector.extract_strided_slice %329 {offsets = [0, 384], sizes = [2, 128], strides = [1, 1]} : vector<2x512xf32> to vector<2x128xf32>
    %345 = arith.negf %344 : vector<2x128xf32>
    %346 = math.exp %345 : vector<2x128xf32>
    %cst_77 = arith.constant 1.000000e+00 : f32
    %347 = vector.broadcast %cst_77 : f32 to vector<2x128xf32>
    %348 = arith.addf %347, %346 : vector<2x128xf32>
    %349 = arith.divf %347, %348 : vector<2x128xf32>
    %350 = arith.mulf %341, %289 : vector<2x128xf32>
    %351 = arith.mulf %335, %343 : vector<2x128xf32>
    %352 = arith.addf %350, %351 : vector<2x128xf32>
    %353 = math.tanh %352 : vector<2x128xf32>
    %354 = arith.mulf %349, %353 : vector<2x128xf32>
    %cst_78 = arith.constant dense<0.000000e+00> : vector<2x512xf32>
    %355 = tpu.matmul %354, %3, %cst_78 {dimension_numbers = #tpu.dot_dimension_numbers<[1], [0], [0], [1], [0, 0, 1, 1], [], []>} : vector<2x128xf32>, vector<128x512xf32>, vector<2x512xf32> -> vector<2x512xf32>
    %cst_79 = arith.constant dense<0.000000e+00> : vector<2x512xf32>
    %356 = tpu.matmul %321, %4, %cst_79 {dimension_numbers = #tpu.dot_dimension_numbers<[1], [0], [0], [1], [0, 0, 1, 1], [], []>} : vector<2x128xf32>, vector<128x512xf32>, vector<2x512xf32> -> vector<2x512xf32>
    %357 = arith.addf %355, %356 : vector<2x512xf32>
    %358 = vector.broadcast %5 : vector<1x512xf32> to vector<2x512xf32>
    %359 = arith.addf %357, %358 : vector<2x512xf32>
    %360 = vector.extract_strided_slice %359 {offsets = [0, 0], sizes = [2, 128], strides = [1, 1]} : vector<2x512xf32> to vector<2x128xf32>
    %361 = arith.negf %360 : vector<2x128xf32>
    %362 = math.exp %361 : vector<2x128xf32>
    %cst_80 = arith.constant 1.000000e+00 : f32
    %363 = vector.broadcast %cst_80 : f32 to vector<2x128xf32>
    %364 = arith.addf %363, %362 : vector<2x128xf32>
    %365 = arith.divf %363, %364 : vector<2x128xf32>
    %366 = vector.extract_strided_slice %359 {offsets = [0, 128], sizes = [2, 128], strides = [1, 1]} : vector<2x512xf32> to vector<2x128xf32>
    %367 = arith.negf %366 : vector<2x128xf32>
    %368 = math.exp %367 : vector<2x128xf32>
    %cst_81 = arith.constant 1.000000e+00 : f32
    %369 = vector.broadcast %cst_81 : f32 to vector<2x128xf32>
    %370 = arith.addf %369, %368 : vector<2x128xf32>
    %371 = arith.divf %369, %370 : vector<2x128xf32>
    %372 = vector.extract_strided_slice %359 {offsets = [0, 256], sizes = [2, 128], strides = [1, 1]} : vector<2x512xf32> to vector<2x128xf32>
    %373 = math.tanh %372 : vector<2x128xf32>
    %374 = vector.extract_strided_slice %359 {offsets = [0, 384], sizes = [2, 128], strides = [1, 1]} : vector<2x512xf32> to vector<2x128xf32>
    %375 = arith.negf %374 : vector<2x128xf32>
    %376 = math.exp %375 : vector<2x128xf32>
    %cst_82 = arith.constant 1.000000e+00 : f32
    %377 = vector.broadcast %cst_82 : f32 to vector<2x128xf32>
    %378 = arith.addf %377, %376 : vector<2x128xf32>
    %379 = arith.divf %377, %378 : vector<2x128xf32>
    %380 = arith.mulf %371, %319 : vector<2x128xf32>
    %381 = arith.mulf %365, %373 : vector<2x128xf32>
    %382 = arith.addf %380, %381 : vector<2x128xf32>
    %383 = math.tanh %382 : vector<2x128xf32>
    %384 = arith.mulf %379, %383 : vector<2x128xf32>
    %c6_i32 = arith.constant 6 : i32
    %385 = arith.index_cast %c6_i32 : i32 to index
    %c0_83 = arith.constant 0 : index
    %c0_84 = arith.constant 0 : index
    %386 = vector.load %arg1[%385, %c0_83, %c0_84] : memref<8x2x16xf32, #tpu.memory_space<vmem>>, vector<1x2x16xf32>
    %387 = vector.shape_cast %386 : vector<1x2x16xf32> to vector<2x16xf32>
    %cst_85 = arith.constant dense<0.000000e+00> : vector<2x512xf32>
    %388 = tpu.matmul %387, %0, %cst_85 {dimension_numbers = #tpu.dot_dimension_numbers<[1], [0], [0], [1], [0, 0, 1, 1], [], []>} : vector<2x16xf32>, vector<16x512xf32>, vector<2x512xf32> -> vector<2x512xf32>
    %cst_86 = arith.constant dense<0.000000e+00> : vector<2x512xf32>
    %389 = tpu.matmul %354, %1, %cst_86 {dimension_numbers = #tpu.dot_dimension_numbers<[1], [0], [0], [1], [0, 0, 1, 1], [], []>} : vector<2x128xf32>, vector<128x512xf32>, vector<2x512xf32> -> vector<2x512xf32>
    %390 = arith.addf %388, %389 : vector<2x512xf32>
    %391 = vector.broadcast %2 : vector<1x512xf32> to vector<2x512xf32>
    %392 = arith.addf %390, %391 : vector<2x512xf32>
    %393 = vector.extract_strided_slice %392 {offsets = [0, 0], sizes = [2, 128], strides = [1, 1]} : vector<2x512xf32> to vector<2x128xf32>
    %394 = arith.negf %393 : vector<2x128xf32>
    %395 = math.exp %394 : vector<2x128xf32>
    %cst_87 = arith.constant 1.000000e+00 : f32
    %396 = vector.broadcast %cst_87 : f32 to vector<2x128xf32>
    %397 = arith.addf %396, %395 : vector<2x128xf32>
    %398 = arith.divf %396, %397 : vector<2x128xf32>
    %399 = vector.extract_strided_slice %392 {offsets = [0, 128], sizes = [2, 128], strides = [1, 1]} : vector<2x512xf32> to vector<2x128xf32>
    %400 = arith.negf %399 : vector<2x128xf32>
    %401 = math.exp %400 : vector<2x128xf32>
    %cst_88 = arith.constant 1.000000e+00 : f32
    %402 = vector.broadcast %cst_88 : f32 to vector<2x128xf32>
    %403 = arith.addf %402, %401 : vector<2x128xf32>
    %404 = arith.divf %402, %403 : vector<2x128xf32>
    %405 = vector.extract_strided_slice %392 {offsets = [0, 256], sizes = [2, 128], strides = [1, 1]} : vector<2x512xf32> to vector<2x128xf32>
    %406 = math.tanh %405 : vector<2x128xf32>
    %407 = vector.extract_strided_slice %392 {offsets = [0, 384], sizes = [2, 128], strides = [1, 1]} : vector<2x512xf32> to vector<2x128xf32>
    %408 = arith.negf %407 : vector<2x128xf32>
    %409 = math.exp %408 : vector<2x128xf32>
    %cst_89 = arith.constant 1.000000e+00 : f32
    %410 = vector.broadcast %cst_89 : f32 to vector<2x128xf32>
    %411 = arith.addf %410, %409 : vector<2x128xf32>
    %412 = arith.divf %410, %411 : vector<2x128xf32>
    %413 = arith.mulf %404, %352 : vector<2x128xf32>
    %414 = arith.mulf %398, %406 : vector<2x128xf32>
    %415 = arith.addf %413, %414 : vector<2x128xf32>
    %416 = math.tanh %415 : vector<2x128xf32>
    %417 = arith.mulf %412, %416 : vector<2x128xf32>
    %cst_90 = arith.constant dense<0.000000e+00> : vector<2x512xf32>
    %418 = tpu.matmul %417, %3, %cst_90 {dimension_numbers = #tpu.dot_dimension_numbers<[1], [0], [0], [1], [0, 0, 1, 1], [], []>} : vector<2x128xf32>, vector<128x512xf32>, vector<2x512xf32> -> vector<2x512xf32>
    %cst_91 = arith.constant dense<0.000000e+00> : vector<2x512xf32>
    %419 = tpu.matmul %384, %4, %cst_91 {dimension_numbers = #tpu.dot_dimension_numbers<[1], [0], [0], [1], [0, 0, 1, 1], [], []>} : vector<2x128xf32>, vector<128x512xf32>, vector<2x512xf32> -> vector<2x512xf32>
    %420 = arith.addf %418, %419 : vector<2x512xf32>
    %421 = vector.broadcast %5 : vector<1x512xf32> to vector<2x512xf32>
    %422 = arith.addf %420, %421 : vector<2x512xf32>
    %423 = vector.extract_strided_slice %422 {offsets = [0, 0], sizes = [2, 128], strides = [1, 1]} : vector<2x512xf32> to vector<2x128xf32>
    %424 = arith.negf %423 : vector<2x128xf32>
    %425 = math.exp %424 : vector<2x128xf32>
    %cst_92 = arith.constant 1.000000e+00 : f32
    %426 = vector.broadcast %cst_92 : f32 to vector<2x128xf32>
    %427 = arith.addf %426, %425 : vector<2x128xf32>
    %428 = arith.divf %426, %427 : vector<2x128xf32>
    %429 = vector.extract_strided_slice %422 {offsets = [0, 128], sizes = [2, 128], strides = [1, 1]} : vector<2x512xf32> to vector<2x128xf32>
    %430 = arith.negf %429 : vector<2x128xf32>
    %431 = math.exp %430 : vector<2x128xf32>
    %cst_93 = arith.constant 1.000000e+00 : f32
    %432 = vector.broadcast %cst_93 : f32 to vector<2x128xf32>
    %433 = arith.addf %432, %431 : vector<2x128xf32>
    %434 = arith.divf %432, %433 : vector<2x128xf32>
    %435 = vector.extract_strided_slice %422 {offsets = [0, 256], sizes = [2, 128], strides = [1, 1]} : vector<2x512xf32> to vector<2x128xf32>
    %436 = math.tanh %435 : vector<2x128xf32>
    %437 = vector.extract_strided_slice %422 {offsets = [0, 384], sizes = [2, 128], strides = [1, 1]} : vector<2x512xf32> to vector<2x128xf32>
    %438 = arith.negf %437 : vector<2x128xf32>
    %439 = math.exp %438 : vector<2x128xf32>
    %cst_94 = arith.constant 1.000000e+00 : f32
    %440 = vector.broadcast %cst_94 : f32 to vector<2x128xf32>
    %441 = arith.addf %440, %439 : vector<2x128xf32>
    %442 = arith.divf %440, %441 : vector<2x128xf32>
    %443 = arith.mulf %434, %382 : vector<2x128xf32>
    %444 = arith.mulf %428, %436 : vector<2x128xf32>
    %445 = arith.addf %443, %444 : vector<2x128xf32>
    %446 = math.tanh %445 : vector<2x128xf32>
    %447 = arith.mulf %442, %446 : vector<2x128xf32>
    %c7_i32 = arith.constant 7 : i32
    %448 = arith.index_cast %c7_i32 : i32 to index
    %c0_95 = arith.constant 0 : index
    %c0_96 = arith.constant 0 : index
    %449 = vector.load %arg1[%448, %c0_95, %c0_96] : memref<8x2x16xf32, #tpu.memory_space<vmem>>, vector<1x2x16xf32>
    %450 = vector.shape_cast %449 : vector<1x2x16xf32> to vector<2x16xf32>
    %cst_97 = arith.constant dense<0.000000e+00> : vector<2x512xf32>
    %451 = tpu.matmul %450, %0, %cst_97 {dimension_numbers = #tpu.dot_dimension_numbers<[1], [0], [0], [1], [0, 0, 1, 1], [], []>} : vector<2x16xf32>, vector<16x512xf32>, vector<2x512xf32> -> vector<2x512xf32>
    %cst_98 = arith.constant dense<0.000000e+00> : vector<2x512xf32>
    %452 = tpu.matmul %417, %1, %cst_98 {dimension_numbers = #tpu.dot_dimension_numbers<[1], [0], [0], [1], [0, 0, 1, 1], [], []>} : vector<2x128xf32>, vector<128x512xf32>, vector<2x512xf32> -> vector<2x512xf32>
    %453 = arith.addf %451, %452 : vector<2x512xf32>
    %454 = vector.broadcast %2 : vector<1x512xf32> to vector<2x512xf32>
    %455 = arith.addf %453, %454 : vector<2x512xf32>
    %456 = vector.extract_strided_slice %455 {offsets = [0, 0], sizes = [2, 128], strides = [1, 1]} : vector<2x512xf32> to vector<2x128xf32>
    %457 = arith.negf %456 : vector<2x128xf32>
    %458 = math.exp %457 : vector<2x128xf32>
    %cst_99 = arith.constant 1.000000e+00 : f32
    %459 = vector.broadcast %cst_99 : f32 to vector<2x128xf32>
    %460 = arith.addf %459, %458 : vector<2x128xf32>
    %461 = arith.divf %459, %460 : vector<2x128xf32>
    %462 = vector.extract_strided_slice %455 {offsets = [0, 128], sizes = [2, 128], strides = [1, 1]} : vector<2x512xf32> to vector<2x128xf32>
    %463 = arith.negf %462 : vector<2x128xf32>
    %464 = math.exp %463 : vector<2x128xf32>
    %cst_100 = arith.constant 1.000000e+00 : f32
    %465 = vector.broadcast %cst_100 : f32 to vector<2x128xf32>
    %466 = arith.addf %465, %464 : vector<2x128xf32>
    %467 = arith.divf %465, %466 : vector<2x128xf32>
    %468 = vector.extract_strided_slice %455 {offsets = [0, 256], sizes = [2, 128], strides = [1, 1]} : vector<2x512xf32> to vector<2x128xf32>
    %469 = math.tanh %468 : vector<2x128xf32>
    %470 = vector.extract_strided_slice %455 {offsets = [0, 384], sizes = [2, 128], strides = [1, 1]} : vector<2x512xf32> to vector<2x128xf32>
    %471 = arith.negf %470 : vector<2x128xf32>
    %472 = math.exp %471 : vector<2x128xf32>
    %cst_101 = arith.constant 1.000000e+00 : f32
    %473 = vector.broadcast %cst_101 : f32 to vector<2x128xf32>
    %474 = arith.addf %473, %472 : vector<2x128xf32>
    %475 = arith.divf %473, %474 : vector<2x128xf32>
    %476 = arith.mulf %467, %415 : vector<2x128xf32>
    %477 = arith.mulf %461, %469 : vector<2x128xf32>
    %478 = arith.addf %476, %477 : vector<2x128xf32>
    %479 = math.tanh %478 : vector<2x128xf32>
    %480 = arith.mulf %475, %479 : vector<2x128xf32>
    %cst_102 = arith.constant dense<0.000000e+00> : vector<2x512xf32>
    %481 = tpu.matmul %480, %3, %cst_102 {dimension_numbers = #tpu.dot_dimension_numbers<[1], [0], [0], [1], [0, 0, 1, 1], [], []>} : vector<2x128xf32>, vector<128x512xf32>, vector<2x512xf32> -> vector<2x512xf32>
    %cst_103 = arith.constant dense<0.000000e+00> : vector<2x512xf32>
    %482 = tpu.matmul %447, %4, %cst_103 {dimension_numbers = #tpu.dot_dimension_numbers<[1], [0], [0], [1], [0, 0, 1, 1], [], []>} : vector<2x128xf32>, vector<128x512xf32>, vector<2x512xf32> -> vector<2x512xf32>
    %483 = arith.addf %481, %482 : vector<2x512xf32>
    %484 = vector.broadcast %5 : vector<1x512xf32> to vector<2x512xf32>
    %485 = arith.addf %483, %484 : vector<2x512xf32>
    %486 = vector.extract_strided_slice %485 {offsets = [0, 0], sizes = [2, 128], strides = [1, 1]} : vector<2x512xf32> to vector<2x128xf32>
    %487 = arith.negf %486 : vector<2x128xf32>
    %488 = math.exp %487 : vector<2x128xf32>
    %cst_104 = arith.constant 1.000000e+00 : f32
    %489 = vector.broadcast %cst_104 : f32 to vector<2x128xf32>
    %490 = arith.addf %489, %488 : vector<2x128xf32>
    %491 = arith.divf %489, %490 : vector<2x128xf32>
    %492 = vector.extract_strided_slice %485 {offsets = [0, 128], sizes = [2, 128], strides = [1, 1]} : vector<2x512xf32> to vector<2x128xf32>
    %493 = arith.negf %492 : vector<2x128xf32>
    %494 = math.exp %493 : vector<2x128xf32>
    %cst_105 = arith.constant 1.000000e+00 : f32
    %495 = vector.broadcast %cst_105 : f32 to vector<2x128xf32>
    %496 = arith.addf %495, %494 : vector<2x128xf32>
    %497 = arith.divf %495, %496 : vector<2x128xf32>
    %498 = vector.extract_strided_slice %485 {offsets = [0, 256], sizes = [2, 128], strides = [1, 1]} : vector<2x512xf32> to vector<2x128xf32>
    %499 = math.tanh %498 : vector<2x128xf32>
    %500 = vector.extract_strided_slice %485 {offsets = [0, 384], sizes = [2, 128], strides = [1, 1]} : vector<2x512xf32> to vector<2x128xf32>
    %501 = arith.negf %500 : vector<2x128xf32>
    %502 = math.exp %501 : vector<2x128xf32>
    %cst_106 = arith.constant 1.000000e+00 : f32
    %503 = vector.broadcast %cst_106 : f32 to vector<2x128xf32>
    %504 = arith.addf %503, %502 : vector<2x128xf32>
    %505 = arith.divf %503, %504 : vector<2x128xf32>
    %506 = arith.mulf %497, %445 : vector<2x128xf32>
    %507 = arith.mulf %491, %499 : vector<2x128xf32>
    %508 = arith.addf %506, %507 : vector<2x128xf32>
    %509 = math.tanh %508 : vector<2x128xf32>
    %510 = arith.mulf %505, %509 : vector<2x128xf32>
    %c8_i32 = arith.constant 8 : i32
    %c0_107 = arith.constant 0 : index
    %c0_108 = arith.constant 0 : index
    %511 = vector.load %arg8[%c0_107, %c0_108] : memref<128x128xf32, #tpu.memory_space<vmem>>, vector<128x128xf32>
    %cst_109 = arith.constant dense<0.000000e+00> : vector<2x128xf32>
    %512 = tpu.matmul %510, %511, %cst_109 {dimension_numbers = #tpu.dot_dimension_numbers<[1], [0], [0], [1], [0, 0, 1, 1], [], []>} : vector<2x128xf32>, vector<128x128xf32>, vector<2x128xf32> -> vector<2x128xf32>
    %c0_110 = arith.constant 0 : index
    %c0_111 = arith.constant 0 : index
    %513 = vector.load %arg9[%c0_110, %c0_111] : memref<1x128xf32, #tpu.memory_space<vmem>>, vector<1x128xf32>
    %514 = vector.broadcast %513 : vector<1x128xf32> to vector<2x128xf32>
    %515 = arith.addf %512, %514 : vector<2x128xf32>
    %c0_112 = arith.constant 0 : index
    %c0_113 = arith.constant 0 : index
    %516 = vector.load %arg10[%c0_112, %c0_113] : memref<2x128xf32, #tpu.memory_space<vmem>>, vector<2x128xf32>
    tpu.vector_store %arg10[%c0_112, %c0_113], %515 {strides = array<i32>} : memref<2x128xf32, #tpu.memory_space<vmem>>, vector<2x128xf32>,
    return
  }
  func.func @transform_0(%arg0: i32) -> (i32, i32, i32) {
    %c0_i32 = arith.constant 0 : i32
    %c0_i32_0 = arith.constant 0 : i32
    %c0_i32_1 = arith.constant 0 : i32
    %c0_i32_2 = arith.constant 0 : i32
    return %c0_i32, %c0_i32_0, %c0_i32_1 : i32, i32, i32
  }
  func.func @transform_1(%arg0: i32) -> (i32, i32) {
    %c0_i32 = arith.constant 0 : i32
    %c0_i32_0 = arith.constant 0 : i32
    %c0_i32_1 = arith.constant 0 : i32
    return %c0_i32, %c0_i32_0 : i32, i32
  }
  func.func @transform_2(%arg0: i32) -> (i32, i32) {
    %c0_i32 = arith.constant 0 : i32
    %c0_i32_0 = arith.constant 0 : i32
    %c0_i32_1 = arith.constant 0 : i32
    return %c0_i32, %c0_i32_0 : i32, i32
  }
  func.func @transform_3(%arg0: i32) -> (i32, i32) {
    %c0_i32 = arith.constant 0 : i32
    %c0_i32_0 = arith.constant 0 : i32
    %c0_i32_1 = arith.constant 0 : i32
    return %c0_i32, %c0_i32_0 : i32, i32
  }
  func.func @transform_4(%arg0: i32) -> (i32, i32) {
    %c0_i32 = arith.constant 0 : i32
    %c0_i32_0 = arith.constant 0 : i32
    %c0_i32_1 = arith.constant 0 : i32
    return %c0_i32, %c0_i32_0 : i32, i32
  }
  func.func @transform_5(%arg0: i32) -> (i32, i32) {
    %c0_i32 = arith.constant 0 : i32
    %c0_i32_0 = arith.constant 0 : i32
    %c0_i32_1 = arith.constant 0 : i32
    return %c0_i32, %c0_i32_0 : i32, i32
  }
  func.func @transform_6(%arg0: i32) -> (i32, i32) {
    %c0_i32 = arith.constant 0 : i32
    %c0_i32_0 = arith.constant 0 : i32
    %c0_i32_1 = arith.constant 0 : i32
    return %c0_i32, %c0_i32_0 : i32, i32
  }
  func.func @transform_7(%arg0: i32) -> (i32, i32) {
    %c0_i32 = arith.constant 0 : i32
    %c0_i32_0 = arith.constant 0 : i32
    %c0_i32_1 = arith.constant 0 : i32
    return %c0_i32, %c0_i32_0 : i32, i32
  }
  func.func @transform_8(%arg0: i32) -> (i32, i32) {
    %c0_i32 = arith.constant 0 : i32
    %c0_i32_0 = arith.constant 0 : i32
    %c0_i32_1 = arith.constant 0 : i32
    return %c0_i32, %c0_i32_0 : i32, i32
  }
  func.func @transform_9(%arg0: i32) -> (i32, i32) {
    %c0_i32 = arith.constant 0 : i32
    %c0_i32_0 = arith.constant 0 : i32
    %c0_i32_1 = arith.constant 0 : i32
    return %c0_i32, %c0_i32_0 : i32, i32
  }
}

</mosaic_0001>

<llo_original>
// kernel: forward.1
$region0: #{forward.1}
  #allocation0 [shape = 'u32[]', space=smem, size = 0x4, offset = 0x4, fixed_abs, tag = 'smem constant byte address 0x4 - core index']
  #allocation1 [shape = 'u32[144,128]{1,0:T(1,128)}', space=vmem, size = 0x12000, scoped, tag = 'internal scratch']
  %s0 = inlined_call_operand.vmem [shape: f32[8,2,16], index: 0, kind: input, shape index: {}]
  %s1 = inlined_call_operand.hbm [shape: f32[16,512], index: 1, kind: input, shape index: {}]
  %s2 = inlined_call_operand.hbm [shape: f32[128,512], index: 2, kind: input, shape index: {}]
  %s3 = inlined_call_operand.vmem [shape: f32[1,512], index: 3, kind: input, shape index: {}]
  %s4 = inlined_call_operand.hbm [shape: f32[128,512], index: 4, kind: input, shape index: {}]
  %s5 = inlined_call_operand.hbm [shape: f32[128,512], index: 5, kind: input, shape index: {}]
  %s6 = inlined_call_operand.vmem [shape: f32[1,512], index: 6, kind: input, shape index: {}]
  %s7 = inlined_call_operand.hbm [shape: f32[128,128], index: 7, kind: input, shape index: {}]
  %s8 = inlined_call_operand.vmem [shape: f32[1,128], index: 8, kind: input, shape index: {}]
  %s9 = inlined_call_operand.vmem [shape: f32[2,128], index: 9, kind: output, shape index: {}]
  %s10 = sld [smem:[#allocation0]]
  $region66: #{forward.1} parent=0
    _
  %s12 = ssub.s32 1, %s10
  %s13 = scalar_select 0, %s12, %s10
  $region1: #{forward.1} parent=0
    #allocation2 [shape = 'u8[32768]{0}', space=vmem, size = 0x8000, scoped, tag = 'input window, operand 1, single buffered']
    #allocation3 [shape = 's32[1]{0}', space=sflag, size = 0x4, scoped, tag = 'scoped memory for forward.1']
    #allocation4 [shape = 'u8[262144]{0}', space=vmem, size = 0x40000, scoped, tag = 'input window, operand 2, single buffered']
    #allocation5 [shape = 's32[1]{0}', space=sflag, size = 0x4, scoped, tag = 'scoped memory for forward.1']
    #allocation6 [shape = 'u8[262144]{0}', space=vmem, size = 0x40000, scoped, tag = 'input window, operand 4, single buffered']
    #allocation7 [shape = 'u8[262144]{0}', space=vmem, size = 0x40000, scoped, tag = 'input window, operand 5, single buffered']
    #allocation8 [shape = 's32[1]{0}', space=sflag, size = 0x4, scoped, tag = 'scoped memory for forward.1']
    #allocation9 [shape = 'u8[65536]{0}', space=vmem, size = 0x10000, scoped, tag = 'input window, operand 7, single buffered']
    %14 = vsyncpa [#allocation3], 0
    %15 = vsyncpa [#allocation5], 0
    %16 = vsyncpa [#allocation8], 0
    // Predicated region
    $region2: #{forward.1} parent=1 // pred_check
      _
    $region3: #{forward.1} parent=1 // pred_check_branch
      %18 = sbr.rel (0) target = $region5
    $region4: #{forward.1} parent=1 // pred_region
      _
    $region5: #{forward.1} parent=1 // pred_fallthru
      _
    // Predicated region
    $region6: #{forward.1} parent=1 // pred_check
      _
    $region7: #{forward.1} parent=1 // pred_check_branch
      %20 = sbr.rel (0) target = $region9
    $region8: #{forward.1} parent=1 // pred_region
      %s22 = ssub.s32 1024, 1024
      %23 = vsyncadd [#allocation3], %s22
      %s24 = sshll.u32 [#allocation2], 4
      %s25 = int_to_ptr.vmem [resolvable:$true] %s24
      %30 = dma.hbm_to_vmem [thread:$0]  %s1, 1024, %s25, [#allocation3], 512, 512, 32
    $region9: #{forward.1} parent=1 // pred_fallthru
      _
    // Predicated region
    $region10: #{forward.1} parent=1 // pred_check
      _
    $region11: #{forward.1} parent=1 // pred_check_branch
      %32 = sbr.rel (0) target = $region13
    $region12: #{forward.1} parent=1 // pred_region
      %s34 = ssub.s32 8192, 8192
      %35 = vsyncadd [#allocation5], %s34
      %s36 = sshll.u32 [#allocation4], 4
      %s37 = int_to_ptr.vmem [resolvable:$true] %s36
      %42 = dma.hbm_to_vmem [thread:$0]  %s2, 8192, %s37, [#allocation5], 512, 512, 32
    $region13: #{forward.1} parent=1 // pred_fallthru
      _
    // Predicated region
    $region14: #{forward.1} parent=1 // pred_check
      _
    $region15: #{forward.1} parent=1 // pred_check_branch
      %44 = sbr.rel (0) target = $region17
    $region16: #{forward.1} parent=1 // pred_region
      _
    $region17: #{forward.1} parent=1 // pred_fallthru
      _
    // Predicated region
    $region18: #{forward.1} parent=1 // pred_check
      _
    $region19: #{forward.1} parent=1 // pred_check_branch
      %46 = sbr.rel (0) target = $region21
    $region20: #{forward.1} parent=1 // pred_region
      %s48 = ssub.s32 8192, 8192
      %49 = vsyncadd [#allocation5], %s48
      %s50 = sshll.u32 [#allocation6], 4
      %s51 = int_to_ptr.vmem [resolvable:$true] %s50
      %56 = dma.hbm_to_vmem [thread:$0]  %s4, 8192, %s51, [#allocation5], 512, 512, 32
    $region21: #{forward.1} parent=1 // pred_fallthru
      _
    // Predicated region
    $region22: #{forward.1} parent=1 // pred_check
      _
    $region23: #{forward.1} parent=1 // pred_check_branch
      %58 = sbr.rel (0) target = $region25
    $region24: #{forward.1} parent=1 // pred_region
      %s60 = ssub.s32 8192, 8192
      %61 = vsyncadd [#allocation8], %s60
      %s62 = sshll.u32 [#allocation7], 4
      %s63 = int_to_ptr.vmem [resolvable:$true] %s62
      %68 = dma.hbm_to_vmem [thread:$0]  %s5, 8192, %s63, [#allocation8], 512, 512, 32
    $region25: #{forward.1} parent=1 // pred_fallthru
      _
    // Predicated region
    $region26: #{forward.1} parent=1 // pred_check
      _
    $region27: #{forward.1} parent=1 // pred_check_branch
      %70 = sbr.rel (0) target = $region29
    $region28: #{forward.1} parent=1 // pred_region
      _
    $region29: #{forward.1} parent=1 // pred_fallthru
      _
    // Predicated region
    $region30: #{forward.1} parent=1 // pred_check
      _
    $region31: #{forward.1} parent=1 // pred_check_branch
      %72 = sbr.rel (0) target = $region33
    $region32: #{forward.1} parent=1 // pred_region
      %s74 = ssub.s32 2048, 2048
      %75 = vsyncadd [#allocation8], %s74
      %s76 = sshll.u32 [#allocation9], 4
      %s77 = int_to_ptr.vmem [resolvable:$true] %s76
      %82 = dma.hbm_to_vmem [thread:$0]  %s7, 2048, %s77, [#allocation8], 128, 128, 8
    $region33: #{forward.1} parent=1 // pred_fallthru
      _
    // Predicated region
    $region34: #{forward.1} parent=1 // pred_check
      _
    $region35: #{forward.1} parent=1 // pred_check_branch
      %84 = sbr.rel (0) target = $region37
    $region36: #{forward.1} parent=1 // pred_region
      _
    $region37: #{forward.1} parent=1 // pred_fallthru
      _
    // Predicated region
    $region38: #{forward.1} parent=1 // pred_check
      _
    $region39: #{forward.1} parent=1 // pred_check_branch
      %86 = sbr.rel (0) target = $region41
    $region40: #{forward.1} parent=1 // pred_region
      %87 = dma.done [#allocation3], 1024
    $region41: #{forward.1} parent=1 // pred_fallthru
      _
    // Predicated region
    $region42: #{forward.1} parent=1 // pred_check
      _
    $region43: #{forward.1} parent=1 // pred_check_branch
      %89 = sbr.rel (0) target = $region45
    $region44: #{forward.1} parent=1 // pred_region
      %90 = dma.done [#allocation5], 8192
    $region45: #{forward.1} parent=1 // pred_fallthru
      _
    // Predicated region
    $region46: #{forward.1} parent=1 // pred_check
      _
    $region47: #{forward.1} parent=1 // pred_check_branch
      %92 = sbr.rel (0) target = $region49
    $region48: #{forward.1} parent=1 // pred_region
      %93 = dma.done [#allocation5], 8192
    $region49: #{forward.1} parent=1 // pred_fallthru
      _
    // Predicated region
    $region50: #{forward.1} parent=1 // pred_check
      _
    $region51: #{forward.1} parent=1 // pred_check_branch
      %95 = sbr.rel (0) target = $region53
    $region52: #{forward.1} parent=1 // pred_region
      %96 = dma.done [#allocation8], 8192
    $region53: #{forward.1} parent=1 // pred_fallthru
      _
    // Predicated region
    $region54: #{forward.1} parent=1 // pred_check
      _
    $region55: #{forward.1} parent=1 // pred_check_branch
      %98 = sbr.rel (0) target = $region57
    $region56: #{forward.1} parent=1 // pred_region
      %99 = dma.done [#allocation8], 2048
    $region57: #{forward.1} parent=1 // pred_fallthru
      _
    %v100 = vld [vmem:[#allocation2] sm:$0xff]
    %v101 = vld [vmem:[#allocation2 + $0x8] sm:$0xff]
    %v102 = vld [vmem:[#allocation2 + $0x10] sm:$0xff]
    %v103 = vld [vmem:[#allocation2 + $0x18] sm:$0xff]
    %v104 = vld [vmem:[#allocation2 + $0x20] sm:$0xff]
    %v105 = vld [vmem:[#allocation2 + $0x28] sm:$0xff]
    %v106 = vld [vmem:[#allocation2 + $0x30] sm:$0xff]
    %v107 = vld [vmem:[#allocation2 + $0x38] sm:$0xff]
    %v108 = vld [vmem:[#allocation4] sm:$0xff]
    %v109 = vld [vmem:[#allocation4 + $0x8] sm:$0xff]
    %v110 = vld [vmem:[#allocation4 + $0x10] sm:$0xff]
    %v111 = vld [vmem:[#allocation4 + $0x18] sm:$0xff]
    %v112 = vld [vmem:[#allocation4 + $0x20] sm:$0xff]
    %v113 = vld [vmem:[#allocation4 + $0x28] sm:$0xff]
    %v114 = vld [vmem:[#allocation4 + $0x30] sm:$0xff]
    %v115 = vld [vmem:[#allocation4 + $0x38] sm:$0xff]
    %v116 = vld [vmem:[#allocation4 + $0x40] sm:$0xff]
    %v117 = vld [vmem:[#allocation4 + $0x48] sm:$0xff]
    %v118 = vld [vmem:[#allocation4 + $0x50] sm:$0xff]
    %v119 = vld [vmem:[#allocation4 + $0x58] sm:$0xff]
    %v120 = vld [vmem:[#allocation4 + $0x60] sm:$0xff]
    %v121 = vld [vmem:[#allocation4 + $0x68] sm:$0xff]
    %v122 = vld [vmem:[#allocation4 + $0x70] sm:$0xff]
    %v123 = vld [vmem:[#allocation4 + $0x78] sm:$0xff]
    %v124 = vld [vmem:[#allocation4 + $0x80] sm:$0xff]
    %v125 = vld [vmem:[#allocation4 + $0x88] sm:$0xff]
    %v126 = vld [vmem:[#allocation4 + $0x90] sm:$0xff]
    %v127 = vld [vmem:[#allocation4 + $0x98] sm:$0xff]
    %v128 = vld [vmem:[#allocation4 + $0xa0] sm:$0xff]
    %v129 = vld [vmem:[#allocation4 + $0xa8] sm:$0xff]
    %v130 = vld [vmem:[#allocation4 + $0xb0] sm:$0xff]
    %v131 = vld [vmem:[#allocation4 + $0xb8] sm:$0xff]
    %v132 = vld [vmem:[#allocation4 + $0xc0] sm:$0xff]
    %v133 = vld [vmem:[#allocation4 + $0xc8] sm:$0xff]
    %v134 = vld [vmem:[#allocation4 + $0xd0] sm:$0xff]
    %v135 = vld [vmem:[#allocation4 + $0xd8] sm:$0xff]
    %v136 = vld [vmem:[#allocation4 + $0xe0] sm:$0xff]
    %v137 = vld [vmem:[#allocation4 + $0xe8] sm:$0xff]
    %v138 = vld [vmem:[#allocation4 + $0xf0] sm:$0xff]
    %v139 = vld [vmem:[#allocation4 + $0xf8] sm:$0xff]
    %v140 = vld [vmem:[#allocation4 + $0x100] sm:$0xff]
    %v141 = vld [vmem:[#allocation4 + $0x108] sm:$0xff]
    %v142 = vld [vmem:[#allocation4 + $0x110] sm:$0xff]
    %v143 = vld [vmem:[#allocation4 + $0x118] sm:$0xff]
    %v144 = vld [vmem:[#allocation4 + $0x120] sm:$0xff]
    %v145 = vld [vmem:[#allocation4 + $0x128] sm:$0xff]
    %v146 = vld [vmem:[#allocation4 + $0x130] sm:$0xff]
    %v147 = vld [vmem:[#allocation4 + $0x138] sm:$0xff]
    %v148 = vld [vmem:[#allocation4 + $0x140] sm:$0xff]
    %v149 = vld [vmem:[#allocation4 + $0x148] sm:$0xff]
    %v150 = vld [vmem:[#allocation4 + $0x150] sm:$0xff]
    %v151 = vld [vmem:[#allocation4 + $0x158] sm:$0xff]
    %v152 = vld [vmem:[#allocation4 + $0x160] sm:$0xff]
    %v153 = vld [vmem:[#allocation4 + $0x168] sm:$0xff]
    %v154 = vld [vmem:[#allocation4 + $0x170] sm:$0xff]
    %v155 = vld [vmem:[#allocation4 + $0x178] sm:$0xff]
    %v156 = vld [vmem:[#allocation4 + $0x180] sm:$0xff]
    %v157 = vld [vmem:[#allocation4 + $0x188] sm:$0xff]
    %v158 = vld [vmem:[#allocation4 + $0x190] sm:$0xff]
    %v159 = vld [vmem:[#allocation4 + $0x198] sm:$0xff]
    %v160 = vld [vmem:[#allocation4 + $0x1a0] sm:$0xff]
    %v161 = vld [vmem:[#allocation4 + $0x1a8] sm:$0xff]
    %v162 = vld [vmem:[#allocation4 + $0x1b0] sm:$0xff]
    %v163 = vld [vmem:[#allocation4 + $0x1b8] sm:$0xff]
    %v164 = vld [vmem:[#allocation4 + $0x1c0] sm:$0xff]
    %v165 = vld [vmem:[#allocation4 + $0x1c8] sm:$0xff]
    %v166 = vld [vmem:[#allocation4 + $0x1d0] sm:$0xff]
    %v167 = vld [vmem:[#allocation4 + $0x1d8] sm:$0xff]
    %v168 = vld [vmem:[#allocation4 + $0x1e0] sm:$0xff]
    %v169 = vld [vmem:[#allocation4 + $0x1e8] sm:$0xff]
    %v170 = vld [vmem:[#allocation4 + $0x1f0] sm:$0xff]
    %v171 = vld [vmem:[#allocation4 + $0x1f8] sm:$0xff]
    %v172 = vld [vmem:[%s3] sm:$0xf]
    %v173 = vld [vmem:[#allocation6] sm:$0xff]
    %v174 = vld [vmem:[#allocation6 + $0x8] sm:$0xff]
    %v175 = vld [vmem:[#allocation6 + $0x10] sm:$0xff]
    %v176 = vld [vmem:[#allocation6 + $0x18] sm:$0xff]
    %v177 = vld [vmem:[#allocation6 + $0x20] sm:$0xff]
    %v178 = vld [vmem:[#allocation6 + $0x28] sm:$0xff]
    %v179 = vld [vmem:[#allocation6 + $0x30] sm:$0xff]
    %v180 = vld [vmem:[#allocation6 + $0x38] sm:$0xff]
    %v181 = vld [vmem:[#allocation6 + $0x40] sm:$0xff]
    %v182 = vld [vmem:[#allocation6 + $0x48] sm:$0xff]
    %v183 = vld [vmem:[#allocation6 + $0x50] sm:$0xff]
    %v184 = vld [vmem:[#allocation6 + $0x58] sm:$0xff]
    %v185 = vld [vmem:[#allocation6 + $0x60] sm:$0xff]
    %v186 = vld [vmem:[#allocation6 + $0x68] sm:$0xff]
    %v187 = vld [vmem:[#allocation6 + $0x70] sm:$0xff]
    %v188 = vld [vmem:[#allocation6 + $0x78] sm:$0xff]
    %v189 = vld [vmem:[#allocation6 + $0x80] sm:$0xff]
    %v190 = vld [vmem:[#allocation6 + $0x88] sm:$0xff]
    %v191 = vld [vmem:[#allocation6 + $0x90] sm:$0xff]
    %v192 = vld [vmem:[#allocation6 + $0x98] sm:$0xff]
    %v193 = vld [vmem:[#allocation6 + $0xa0] sm:$0xff]
    %v194 = vld [vmem:[#allocation6 + $0xa8] sm:$0xff]
    %v195 = vld [vmem:[#allocation6 + $0xb0] sm:$0xff]
    %v196 = vld [vmem:[#allocation6 + $0xb8] sm:$0xff]
    %v197 = vld [vmem:[#allocation6 + $0xc0] sm:$0xff]
    %v198 = vld [vmem:[#allocation6 + $0xc8] sm:$0xff]
    %v199 = vld [vmem:[#allocation6 + $0xd0] sm:$0xff]
    %v200 = vld [vmem:[#allocation6 + $0xd8] sm:$0xff]
    %v201 = vld [vmem:[#allocation6 + $0xe0] sm:$0xff]
    %v202 = vld [vmem:[#allocation6 + $0xe8] sm:$0xff]
    %v203 = vld [vmem:[#allocation6 + $0xf0] sm:$0xff]
    %v204 = vld [vmem:[#allocation6 + $0xf8] sm:$0xff]
    %v205 = vld [vmem:[#allocation6 + $0x100] sm:$0xff]
    %v206 = vld [vmem:[#allocation6 + $0x108] sm:$0xff]
    %v207 = vld [vmem:[#allocation6 + $0x110] sm:$0xff]
    %v208 = vld [vmem:[#allocation6 + $0x118] sm:$0xff]
    %v209 = vld [vmem:[#allocation6 + $0x120] sm:$0xff]
    %v210 = vld [vmem:[#allocation6 + $0x128] sm:$0xff]
    %v211 = vld [vmem:[#allocation6 + $0x130] sm:$0xff]
    %v212 = vld [vmem:[#allocation6 + $0x138] sm:$0xff]
    %v213 = vld [vmem:[#allocation6 + $0x140] sm:$0xff]
    %v214 = vld [vmem:[#allocation6 + $0x148] sm:$0xff]
    %v215 = vld [vmem:[#allocation6 + $0x150] sm:$0xff]
    %v216 = vld [vmem:[#allocation6 + $0x158] sm:$0xff]
    %v217 = vld [vmem:[#allocation6 + $0x160] sm:$0xff]
    %v218 = vld [vmem:[#allocation6 + $0x168] sm:$0xff]
    %v219 = vld [vmem:[#allocation6 + $0x170] sm:$0xff]
    %v220 = vld [vmem:[#allocation6 + $0x178] sm:$0xff]
    %v221 = vld [vmem:[#allocation6 + $0x180] sm:$0xff]
    %v222 = vld [vmem:[#allocation6 + $0x188] sm:$0xff]
    %v223 = vld [vmem:[#allocation6 + $0x190] sm:$0xff]
    %v224 = vld [vmem:[#allocation6 + $0x198] sm:$0xff]
    %v225 = vld [vmem:[#allocation6 + $0x1a0] sm:$0xff]
    %v226 = vld [vmem:[#allocation6 + $0x1a8] sm:$0xff]
    %v227 = vld [vmem:[#allocation6 + $0x1b0] sm:$0xff]
    %v228 = vld [vmem:[#allocation6 + $0x1b8] sm:$0xff]
    %v229 = vld [vmem:[#allocation6 + $0x1c0] sm:$0xff]
    %v230 = vld [vmem:[#allocation6 + $0x1c8] sm:$0xff]
    %v231 = vld [vmem:[#allocation6 + $0x1d0] sm:$0xff]
    %v232 = vld [vmem:[#allocation6 + $0x1d8] sm:$0xff]
    %v233 = vld [vmem:[#allocation6 + $0x1e0] sm:$0xff]
    %v234 = vld [vmem:[#allocation6 + $0x1e8] sm:$0xff]
    %v235 = vld [vmem:[#allocation6 + $0x1f0] sm:$0xff]
    %v236 = vld [vmem:[#allocation6 + $0x1f8] sm:$0xff]
    %v237 = vld [vmem:[#allocation7] sm:$0xff]
    %v238 = vld [vmem:[#allocation7 + $0x8] sm:$0xff]
    %v239 = vld [vmem:[#allocation7 + $0x10] sm:$0xff]
    %v240 = vld [vmem:[#allocation7 + $0x18] sm:$0xff]
    %v241 = vld [vmem:[#allocation7 + $0x20] sm:$0xff]
    %v242 = vld [vmem:[#allocation7 + $0x28] sm:$0xff]
    %v243 = vld [vmem:[#allocation7 + $0x30] sm:$0xff]
    %v244 = vld [vmem:[#allocation7 + $0x38] sm:$0xff]
    %v245 = vld [vmem:[#allocation7 + $0x40] sm:$0xff]
    %v246 = vld [vmem:[#allocation7 + $0x48] sm:$0xff]
    %v247 = vld [vmem:[#allocation7 + $0x50] sm:$0xff]
    %v248 = vld [vmem:[#allocation7 + $0x58] sm:$0xff]
    %v249 = vld [vmem:[#allocation7 + $0x60] sm:$0xff]
    %v250 = vld [vmem:[#allocation7 + $0x68] sm:$0xff]
    %v251 = vld [vmem:[#allocation7 + $0x70] sm:$0xff]
    %v252 = vld [vmem:[#allocation7 + $0x78] sm:$0xff]
    %v253 = vld [vmem:[#allocation7 + $0x80] sm:$0xff]
    %v254 = vld [vmem:[#allocation7 + $0x88] sm:$0xff]
    %v255 = vld [vmem:[#allocation7 + $0x90] sm:$0xff]
    %v256 = vld [vmem:[#allocation7 + $0x98] sm:$0xff]
    %v257 = vld [vmem:[#allocation7 + $0xa0] sm:$0xff]
    %v258 = vld [vmem:[#allocation7 + $0xa8] sm:$0xff]
    %v259 = vld [vmem:[#allocation7 + $0xb0] sm:$0xff]
    %v260 = vld [vmem:[#allocation7 + $0xb8] sm:$0xff]
    %v261 = vld [vmem:[#allocation7 + $0xc0] sm:$0xff]
    %v262 = vld [vmem:[#allocation7 + $0xc8] sm:$0xff]
    %v263 = vld [vmem:[#allocation7 + $0xd0] sm:$0xff]
    %v264 = vld [vmem:[#allocation7 + $0xd8] sm:$0xff]
    %v265 = vld [vmem:[#allocation7 + $0xe0] sm:$0xff]
    %v266 = vld [vmem:[#allocation7 + $0xe8] sm:$0xff]
    %v267 = vld [vmem:[#allocation7 + $0xf0] sm:$0xff]
    %v268 = vld [vmem:[#allocation7 + $0xf8] sm:$0xff]
    %v269 = vld [vmem:[#allocation7 + $0x100] sm:$0xff]
    %v270 = vld [vmem:[#allocation7 + $0x108] sm:$0xff]
    %v271 = vld [vmem:[#allocation7 + $0x110] sm:$0xff]
    %v272 = vld [vmem:[#allocation7 + $0x118] sm:$0xff]
    %v273 = vld [vmem:[#allocation7 + $0x120] sm:$0xff]
    %v274 = vld [vmem:[#allocation7 + $0x128] sm:$0xff]
    %v275 = vld [vmem:[#allocation7 + $0x130] sm:$0xff]
    %v276 = vld [vmem:[#allocation7 + $0x138] sm:$0xff]
    %v277 = vld [vmem:[#allocation7 + $0x140] sm:$0xff]
    %v278 = vld [vmem:[#allocation7 + $0x148] sm:$0xff]
    %v279 = vld [vmem:[#allocation7 + $0x150] sm:$0xff]
    %v280 = vld [vmem:[#allocation7 + $0x158] sm:$0xff]
    %v281 = vld [vmem:[#allocation7 + $0x160] sm:$0xff]
    %v282 = vld [vmem:[#allocation7 + $0x168] sm:$0xff]
    %v283 = vld [vmem:[#allocation7 + $0x170] sm:$0xff]
    %v284 = vld [vmem:[#allocation7 + $0x178] sm:$0xff]
    %v285 = vld [vmem:[#allocation7 + $0x180] sm:$0xff]
    %v286 = vld [vmem:[#allocation7 + $0x188] sm:$0xff]
    %v287 = vld [vmem:[#allocation7 + $0x190] sm:$0xff]
    %v288 = vld [vmem:[#allocation7 + $0x198] sm:$0xff]
    %v289 = vld [vmem:[#allocation7 + $0x1a0] sm:$0xff]
    %v290 = vld [vmem:[#allocation7 + $0x1a8] sm:$0xff]
    %v291 = vld [vmem:[#allocation7 + $0x1b0] sm:$0xff]
    %v292 = vld [vmem:[#allocation7 + $0x1b8] sm:$0xff]
    %v293 = vld [vmem:[#allocation7 + $0x1c0] sm:$0xff]
    %v294 = vld [vmem:[#allocation7 + $0x1c8] sm:$0xff]
    %v295 = vld [vmem:[#allocation7 + $0x1d0] sm:$0xff]
    %v296 = vld [vmem:[#allocation7 + $0x1d8] sm:$0xff]
    %v297 = vld [vmem:[#allocation7 + $0x1e0] sm:$0xff]
    %v298 = vld [vmem:[#allocation7 + $0x1e8] sm:$0xff]
    %v299 = vld [vmem:[#allocation7 + $0x1f0] sm:$0xff]
    %v300 = vld [vmem:[#allocation7 + $0x1f8] sm:$0xff]
    %v301 = vld [vmem:[%s6] sm:$0xf]
    %v302 = vld [vmem:[%s0] sm:$0x3]
    %303 = vmatprep.subr.mxu0 %v109
    %304 = vmatpush1.msra.mxu0 %v108
    %305 = vmatprep.subr.mxu0 %v113
    %306 = vmatpush1.msra.mxu0 %v112
    %307 = vmatprep.subr.mxu0 %v117
    %308 = vmatpush1.msra.mxu0 %v116
    %309 = vmatprep.subr.mxu0 %v121
    %310 = vmatpush1.msra.mxu0 %v120
    %311 = vmatprep.subr.mxu0 %v125
    %312 = vmatpush1.msra.mxu0 %v124
    %313 = vmatprep.subr.mxu0 %v129
    %314 = vmatpush1.msra.mxu0 %v128
    %315 = vmatprep.subr.mxu0 %v133
    %316 = vmatpush1.msra.mxu0 %v132
    %317 = vmatprep.subr.mxu0 %v137
    %318 = vmatpush1.msra.mxu0 %v136
    %319 = vmatprep.subr.mxu0 %v141
    %320 = vmatpush1.msra.mxu0 %v140
    %321 = vmatprep.subr.mxu0 %v145
    %322 = vmatpush1.msra.mxu0 %v144
    %323 = vmatprep.subr.mxu0 %v149
    %324 = vmatpush1.msra.mxu0 %v148
    %325 = vmatprep.subr.mxu0 %v153
    %326 = vmatpush1.msra.mxu0 %v152
    %327 = vmatprep.subr.mxu0 %v157
    %328 = vmatpush1.msra.mxu0 %v156
    %329 = vmatprep.subr.mxu0 %v161
    %330 = vmatpush1.msra.mxu0 %v160
    %331 = vmatprep.subr.mxu0 %v165
    %332 = vmatpush1.msra.mxu0 %v164
    %333 = vmatprep.subr.mxu0 %v169
    %334 = vmatpush1.msra.mxu0 %v168
    %335 = vmatprep.subr.mxu0 0.0
    %336 = vmatpush1.msra.mxu0 0.0
    %337 = vmatprep.subr.mxu0 0.0
    %338 = vmatpush1.msra.mxu0 0.0
    %339 = vmatprep.subr.mxu0 0.0
    %340 = vmatpush1.msra.mxu0 0.0
    %341 = vmatprep.subr.mxu0 0.0
    %342 = vmatpush1.msra.mxu0 0.0
    %343 = vmatprep.subr.mxu0 0.0
    %344 = vmatpush1.msra.mxu0 0.0
    %345 = vmatprep.subr.mxu0 0.0
    %346 = vmatpush1.msra.mxu0 0.0
    %347 = vmatprep.subr.mxu0 0.0
    %348 = vmatpush1.msra.mxu0 0.0
    %349 = vmatprep.subr.mxu0 0.0
    %350 = vmatpush1.msra.mxu0 0.0
    %351 = vmatprep.subr.mxu0 0.0
    %352 = vmatpush1.msra.mxu0 0.0
    %353 = vmatprep.subr.mxu0 0.0
    %354 = vmatpush1.msra.mxu0 0.0
    %355 = vmatprep.subr.mxu0 0.0
    %356 = vmatpush1.msra.mxu0 0.0
    %357 = vmatprep.subr.mxu0 0.0
    %358 = vmatpush1.msra.mxu0 0.0
    %359 = vmatprep.subr.mxu0 0.0
    %360 = vmatpush1.msra.mxu0 0.0
    %361 = vmatprep.subr.mxu0 0.0
    %362 = vmatpush1.msra.mxu0 0.0
    %363 = vmatprep.subr.mxu0 0.0
    %364 = vmatpush1.msra.mxu0 0.0
    %365 = vmatprep.subr.mxu0 0.0
    %366 = vmatpush1.msra.mxu0 0.0
    %367 = vmatprep.mubr.f32.mxu0 0.0
    %368 = vmatmul.mubr.f32.gmra.mrb[0].mxu0 0.0
    %v369 = vpop.f32.mrb[0].mxu0
    %v370 = vadd.f32 0.0, %v369
    %v371 = vpop.f32.mrb[0].mxu0
    %v372 = vadd.f32 0.0, %v371
    %373 = vdwg.mxu0
    %374 = vmatprep.subr.mxu0 %v111
    %375 = vmatpush1.msra.mxu0 %v110
    %376 = vmatprep.subr.mxu0 %v115
    %377 = vmatpush1.msra.mxu0 %v114
    %378 = vmatprep.subr.mxu0 %v119
    %379 = vmatpush1.msra.mxu0 %v118
    %380 = vmatprep.subr.mxu0 %v123
    %381 = vmatpush1.msra.mxu0 %v122
    %382 = vmatprep.subr.mxu0 %v127
    %383 = vmatpush1.msra.mxu0 %v126
    %384 = vmatprep.subr.mxu0 %v131
    %385 = vmatpush1.msra.mxu0 %v130
    %386 = vmatprep.subr.mxu0 %v135
    %387 = vmatpush1.msra.mxu0 %v134
    %388 = vmatprep.subr.mxu0 %v139
    %389 = vmatpush1.msra.mxu0 %v138
    %390 = vmatprep.subr.mxu0 %v143
    %391 = vmatpush1.msra.mxu0 %v142
    %392 = vmatprep.subr.mxu0 %v147
    %393 = vmatpush1.msra.mxu0 %v146
    %394 = vmatprep.subr.mxu0 %v151
    %395 = vmatpush1.msra.mxu0 %v150
    %396 = vmatprep.subr.mxu0 %v155
    %397 = vmatpush1.msra.mxu0 %v154
    %398 = vmatprep.subr.mxu0 %v159
    %399 = vmatpush1.msra.mxu0 %v158
    %400 = vmatprep.subr.mxu0 %v163
    %401 = vmatpush1.msra.mxu0 %v162
    %402 = vmatprep.subr.mxu0 %v167
    %403 = vmatpush1.msra.mxu0 %v166
    %404 = vmatprep.subr.mxu0 %v171
    %405 = vmatpush1.msra.mxu0 %v170
    %406 = vmatprep.subr.mxu0 0.0
    %407 = vmatpush1.msra.mxu0 0.0
    %408 = vmatprep.subr.mxu0 0.0
    %409 = vmatpush1.msra.mxu0 0.0
    %410 = vmatprep.subr.mxu0 0.0
    %411 = vmatpush1.msra.mxu0 0.0
    %412 = vmatprep.subr.mxu0 0.0
    %413 = vmatpush1.msra.mxu0 0.0
    %414 = vmatprep.subr.mxu0 0.0
    %415 = vmatpush1.msra.mxu0 0.0
    %416 = vmatprep.subr.mxu0 0.0
    %417 = vmatpush1.msra.mxu0 0.0
    %418 = vmatprep.subr.mxu0 0.0
    %419 = vmatpush1.msra.mxu0 0.0
    %420 = vmatprep.subr.mxu0 0.0
    %421 = vmatpush1.msra.mxu0 0.0
    %422 = vmatprep.subr.mxu0 0.0
    %423 = vmatpush1.msra.mxu0 0.0
    %424 = vmatprep.subr.mxu0 0.0
    %425 = vmatpush1.msra.mxu0 0.0
    %426 = vmatprep.subr.mxu0 0.0
    %427 = vmatpush1.msra.mxu0 0.0
    %428 = vmatprep.subr.mxu0 0.0
    %429 = vmatpush1.msra.mxu0 0.0
    %430 = vmatprep.subr.mxu0 0.0
    %431 = vmatpush1.msra.mxu0 0.0
    %432 = vmatprep.subr.mxu0 0.0
    %433 = vmatpush1.msra.mxu0 0.0
    %434 = vmatprep.subr.mxu0 0.0
    %435 = vmatpush1.msra.mxu0 0.0
    %436 = vmatprep.subr.mxu0 0.0
    %437 = vmatpush1.msra.mxu0 0.0
    %438 = vmatprep.mubr.f32.mxu0 0.0
    %439 = vmatmul.mubr.f32.gmra.mrb[0].mxu0 0.0
    %v440 = vpop.f32.mrb[0].mxu0
    %v441 = vadd.f32 0.0, %v440
    %v442 = vpop.f32.mrb[0].mxu0
    %v443 = vadd.f32 0.0, %v442
    %444 = vdwg.mxu0
    %vm445 = vcmask 130048
    %v447 = vsel %vm445, %v302, 0
    %449 = vmatprep.subr.mxu0 %v101
    %450 = vmatpush1.msra.mxu0 %v100
    %451 = vmatprep.subr.mxu0 %v105
    %452 = vmatpush1.msra.mxu0 %v104
    %453 = vmatprep.subr.mxu0 0.0
    %454 = vmatpush1.msra.mxu0 0.0
    %455 = vmatprep.subr.mxu0 0.0
    %456 = vmatpush1.msra.mxu0 0.0
    %457 = vmatprep.subr.mxu0 0.0
    %458 = vmatpush1.msra.mxu0 0.0
    %459 = vmatprep.subr.mxu0 0.0
    %460 = vmatpush1.msra.mxu0 0.0
    %461 = vmatprep.subr.mxu0 0.0
    %462 = vmatpush1.msra.mxu0 0.0
    %463 = vmatprep.subr.mxu0 0.0
    %464 = vmatpush1.msra.mxu0 0.0
    %465 = vmatprep.subr.mxu0 0.0
    %466 = vmatpush1.msra.mxu0 0.0
    %467 = vmatprep.subr.mxu0 0.0
    %468 = vmatpush1.msra.mxu0 0.0
    %469 = vmatprep.subr.mxu0 0.0
    %470 = vmatpush1.msra.mxu0 0.0
    %471 = vmatprep.subr.mxu0 0.0
    %472 = vmatpush1.msra.mxu0 0.0
    %473 = vmatprep.subr.mxu0 0.0
    %474 = vmatpush1.msra.mxu0 0.0
    %475 = vmatprep.subr.mxu0 0.0
    %476 = vmatpush1.msra.mxu0 0.0
    %477 = vmatprep.subr.mxu0 0.0
    %478 = vmatpush1.msra.mxu0 0.0
    %479 = vmatprep.subr.mxu0 0.0
    %480 = vmatpush1.msra.mxu0 0.0
    %481 = vmatprep.subr.mxu0 0.0
    %482 = vmatpush1.msra.mxu0 0.0
    %483 = vmatprep.subr.mxu0 0.0
    %484 = vmatpush1.msra.mxu0 0.0
    %485 = vmatprep.subr.mxu0 0.0
    %486 = vmatpush1.msra.mxu0 0.0
    %487 = vmatprep.subr.mxu0 0.0
    %488 = vmatpush1.msra.mxu0 0.0
    %489 = vmatprep.subr.mxu0 0.0
    %490 = vmatpush1.msra.mxu0 0.0
    %491 = vmatprep.subr.mxu0 0.0
    %492 = vmatpush1.msra.mxu0 0.0
    %493 = vmatprep.subr.mxu0 0.0
    %494 = vmatpush1.msra.mxu0 0.0
    %495 = vmatprep.subr.mxu0 0.0
    %496 = vmatpush1.msra.mxu0 0.0
    %497 = vmatprep.subr.mxu0 0.0
    %498 = vmatpush1.msra.mxu0 0.0
    %499 = vmatprep.subr.mxu0 0.0
    %500 = vmatpush1.msra.mxu0 0.0
    %501 = vmatprep.subr.mxu0 0.0
    %502 = vmatpush1.msra.mxu0 0.0
    %503 = vmatprep.subr.mxu0 0.0
    %504 = vmatpush1.msra.mxu0 0.0
    %505 = vmatprep.subr.mxu0 0.0
    %506 = vmatpush1.msra.mxu0 0.0
    %507 = vmatprep.subr.mxu0 0.0
    %508 = vmatpush1.msra.mxu0 0.0
    %509 = vmatprep.subr.mxu0 0.0
    %510 = vmatpush1.msra.mxu0 0.0
    %511 = vmatprep.subr.mxu0 0.0
    %512 = vmatpush1.msra.mxu0 0.0
    %513 = vmatprep.mubr.f32.mxu0 0.0
    %514 = vmatmul.mubr.f32.gmra.mrb[0].mxu0 %v447
    %v515 = vpop.f32.mrb[0].mxu0
    %v516 = vadd.f32 %v370, %v515
    %v517 = vpop.f32.mrb[0].mxu0
    %v518 = vadd.f32 %v372, %v517
    %519 = vdwg.mxu0
    %520 = vmatprep.subr.mxu0 %v103
    %521 = vmatpush1.msra.mxu0 %v102
    %522 = vmatprep.subr.mxu0 %v107
    %523 = vmatpush1.msra.mxu0 %v106
    %524 = vmatprep.subr.mxu0 0.0
    %525 = vmatpush1.msra.mxu0 0.0
    %526 = vmatprep.subr.mxu0 0.0
    %527 = vmatpush1.msra.mxu0 0.0
    %528 = vmatprep.subr.mxu0 0.0
    %529 = vmatpush1.msra.mxu0 0.0
    %530 = vmatprep.subr.mxu0 0.0
    %531 = vmatpush1.msra.mxu0 0.0
    %532 = vmatprep.subr.mxu0 0.0
    %533 = vmatpush1.msra.mxu0 0.0
    %534 = vmatprep.subr.mxu0 0.0
    %535 = vmatpush1.msra.mxu0 0.0
    %536 = vmatprep.subr.mxu0 0.0
    %537 = vmatpush1.msra.mxu0 0.0
    %538 = vmatprep.subr.mxu0 0.0
    %539 = vmatpush1.msra.mxu0 0.0
    %540 = vmatprep.subr.mxu0 0.0
    %541 = vmatpush1.msra.mxu0 0.0
    %542 = vmatprep.subr.mxu0 0.0
    %543 = vmatpush1.msra.mxu0 0.0
    %544 = vmatprep.subr.mxu0 0.0
    %545 = vmatpush1.msra.mxu0 0.0
    %546 = vmatprep.subr.mxu0 0.0
    %547 = vmatpush1.msra.mxu0 0.0
    %548 = vmatprep.subr.mxu0 0.0
    %549 = vmatpush1.msra.mxu0 0.0
    %550 = vmatprep.subr.mxu0 0.0
    %551 = vmatpush1.msra.mxu0 0.0
    %552 = vmatprep.subr.mxu0 0.0
    %553 = vmatpush1.msra.mxu0 0.0
    %554 = vmatprep.subr.mxu0 0.0
    %555 = vmatpush1.msra.mxu0 0.0
    %556 = vmatprep.subr.mxu0 0.0
    %557 = vmatpush1.msra.mxu0 0.0
    %558 = vmatprep.subr.mxu0 0.0
    %559 = vmatpush1.msra.mxu0 0.0
    %560 = vmatprep.subr.mxu0 0.0
    %561 = vmatpush1.msra.mxu0 0.0
    %562 = vmatprep.subr.mxu0 0.0
    %563 = vmatpush1.msra.mxu0 0.0
    %564 = vmatprep.subr.mxu0 0.0
    %565 = vmatpush1.msra.mxu0 0.0
    %566 = vmatprep.subr.mxu0 0.0
    %567 = vmatpush1.msra.mxu0 0.0
    %568 = vmatprep.subr.mxu0 0.0
    %569 = vmatpush1.msra.mxu0 0.0
    %570 = vmatprep.subr.mxu0 0.0
    %571 = vmatpush1.msra.mxu0 0.0
    %572 = vmatprep.subr.mxu0 0.0
    %573 = vmatpush1.msra.mxu0 0.0
    %574 = vmatprep.subr.mxu0 0.0
    %575 = vmatpush1.msra.mxu0 0.0
    %576 = vmatprep.subr.mxu0 0.0
    %577 = vmatpush1.msra.mxu0 0.0
    %578 = vmatprep.subr.mxu0 0.0
    %579 = vmatpush1.msra.mxu0 0.0
    %580 = vmatprep.subr.mxu0 0.0
    %581 = vmatpush1.msra.mxu0 0.0
    %582 = vmatprep.subr.mxu0 0.0
    %583 = vmatpush1.msra.mxu0 0.0
    %584 = vmatprep.mubr.f32.mxu0 0.0
    %585 = vmatmul.mubr.f32.gmra.mrb[0].mxu0 %v447
    %v586 = vpop.f32.mrb[0].mxu0
    %v587 = vadd.f32 %v441, %v586
    %v588 = vpop.f32.mrb[0].mxu0
    %v589 = vadd.f32 %v443, %v588
    %590 = vdwg.mxu0
    %v592 = vlaneseq
    %v593 = vshrl.u32 %v592, 7
    %v594 = vsub.s32 0, %v593
    %v595 = vrot.slane %v172, %v594
    %v596 = vlaneseq
    %v597 = vshrl.u32 %v596, 7
    %v598 = vsub.s32 1, %v597
    %v599 = vrot.slane %v172, %v598
    %v600 = vlaneseq
    %v601 = vshrl.u32 %v600, 7
    %v602 = vsub.s32 2, %v601
    %v603 = vrot.slane %v172, %v602
    %v604 = vlaneseq
    %v605 = vshrl.u32 %v604, 7
    %v606 = vsub.s32 3, %v605
    %v607 = vrot.slane %v172, %v606
    %v612 = vadd.f32 %v516, %v595
    %v613 = vadd.f32 %v518, %v599
    %v614 = vadd.f32 %v587, %v603
    %v615 = vadd.f32 %v589, %v607
    %v616 = vxor.u32 %v612, 2147483648
    %v617 = vmul.f32 %v616, 1.442695
    %v618 = vpow.pop %v617
    %v619 = vadd.f32 %v618, 1.0
    %v620 = vrcp.pop %v619
    %v621 = vmul.f32 1.0, %v620
    %v622 = vxor.u32 %v613, 2147483648
    %v623 = vmul.f32 %v622, 1.442695
    %v624 = vpow.pop %v623
    %v625 = vadd.f32 %v624, 1.0
    %v626 = vrcp.pop %v625
    %v627 = vmul.f32 1.0, %v626
    %v628 = vtanh.pop %v614
    %v629 = vxor.u32 %v615, 2147483648
    %v630 = vmul.f32 %v629, 1.442695
    %v631 = vpow.pop %v630
    %v632 = vadd.f32 %v631, 1.0
    %v633 = vrcp.pop %v632
    %v634 = vmul.f32 1.0, %v633
    %v635 = vmul.f32 %v627, 0.0
    %v636 = vmul.f32 %v621, %v628
    %v637 = vadd.f32 %v635, %v636
    %v638 = vtanh.pop %v637
    %v639 = vmul.f32 %v634, %v638
    %640 = vmatprep.subr.mxu0 %v238
    %641 = vmatpush1.msra.mxu0 %v237
    %642 = vmatprep.subr.mxu0 %v242
    %643 = vmatpush1.msra.mxu0 %v241
    %644 = vmatprep.subr.mxu0 %v246
    %645 = vmatpush1.msra.mxu0 %v245
    %646 = vmatprep.subr.mxu0 %v250
    %647 = vmatpush1.msra.mxu0 %v249
    %648 = vmatprep.subr.mxu0 %v254
    %649 = vmatpush1.msra.mxu0 %v253
    %650 = vmatprep.subr.mxu0 %v258
    %651 = vmatpush1.msra.mxu0 %v257
    %652 = vmatprep.subr.mxu0 %v262
    %653 = vmatpush1.msra.mxu0 %v261
    %654 = vmatprep.subr.mxu0 %v266
    %655 = vmatpush1.msra.mxu0 %v265
    %656 = vmatprep.subr.mxu0 %v270
    %657 = vmatpush1.msra.mxu0 %v269
    %658 = vmatprep.subr.mxu0 %v274
    %659 = vmatpush1.msra.mxu0 %v273
    %660 = vmatprep.subr.mxu0 %v278
    %661 = vmatpush1.msra.mxu0 %v277
    %662 = vmatprep.subr.mxu0 %v282
    %663 = vmatpush1.msra.mxu0 %v281
    %664 = vmatprep.subr.mxu0 %v286
    %665 = vmatpush1.msra.mxu0 %v285
    %666 = vmatprep.subr.mxu0 %v290
    %667 = vmatpush1.msra.mxu0 %v289
    %668 = vmatprep.subr.mxu0 %v294
    %669 = vmatpush1.msra.mxu0 %v293
    %670 = vmatprep.subr.mxu0 %v298
    %671 = vmatpush1.msra.mxu0 %v297
    %672 = vmatprep.subr.mxu0 0.0
    %673 = vmatpush1.msra.mxu0 0.0
    %674 = vmatprep.subr.mxu0 0.0
    %675 = vmatpush1.msra.mxu0 0.0
    %676 = vmatprep.subr.mxu0 0.0
    %677 = vmatpush1.msra.mxu0 0.0
    %678 = vmatprep.subr.mxu0 0.0
    %679 = vmatpush1.msra.mxu0 0.0
    %680 = vmatprep.subr.mxu0 0.0
    %681 = vmatpush1.msra.mxu0 0.0
    %682 = vmatprep.subr.mxu0 0.0
    %683 = vmatpush1.msra.mxu0 0.0
    %684 = vmatprep.subr.mxu0 0.0
    %685 = vmatpush1.msra.mxu0 0.0
    %686 = vmatprep.subr.mxu0 0.0
    %687 = vmatpush1.msra.mxu0 0.0
    %688 = vmatprep.subr.mxu0 0.0
    %689 = vmatpush1.msra.mxu0 0.0
    %690 = vmatprep.subr.mxu0 0.0
    %691 = vmatpush1.msra.mxu0 0.0
    %692 = vmatprep.subr.mxu0 0.0
    %693 = vmatpush1.msra.mxu0 0.0
    %694 = vmatprep.subr.mxu0 0.0
    %695 = vmatpush1.msra.mxu0 0.0
    %696 = vmatprep.subr.mxu0 0.0
    %697 = vmatpush1.msra.mxu0 0.0
    %698 = vmatprep.subr.mxu0 0.0
    %699 = vmatpush1.msra.mxu0 0.0
    %700 = vmatprep.subr.mxu0 0.0
    %701 = vmatpush1.msra.mxu0 0.0
    %702 = vmatprep.subr.mxu0 0.0
    %703 = vmatpush1.msra.mxu0 0.0
    %704 = vmatprep.mubr.f32.mxu0 0.0
    %705 = vmatmul.mubr.f32.gmra.mrb[0].mxu0 0.0
    %v706 = vpop.f32.mrb[0].mxu0
    %v707 = vadd.f32 0.0, %v706
    %v708 = vpop.f32.mrb[0].mxu0
    %v709 = vadd.f32 0.0, %v708
    %710 = vdwg.mxu0
    %711 = vmatprep.subr.mxu0 %v240
    %712 = vmatpush1.msra.mxu0 %v239
    %713 = vmatprep.subr.mxu0 %v244
    %714 = vmatpush1.msra.mxu0 %v243
    %715 = vmatprep.subr.mxu0 %v248
    %716 = vmatpush1.msra.mxu0 %v247
    %717 = vmatprep.subr.mxu0 %v252
    %718 = vmatpush1.msra.mxu0 %v251
    %719 = vmatprep.subr.mxu0 %v256
    %720 = vmatpush1.msra.mxu0 %v255
    %721 = vmatprep.subr.mxu0 %v260
    %722 = vmatpush1.msra.mxu0 %v259
    %723 = vmatprep.subr.mxu0 %v264
    %724 = vmatpush1.msra.mxu0 %v263
    %725 = vmatprep.subr.mxu0 %v268
    %726 = vmatpush1.msra.mxu0 %v267
    %727 = vmatprep.subr.mxu0 %v272
    %728 = vmatpush1.msra.mxu0 %v271
    %729 = vmatprep.subr.mxu0 %v276
    %730 = vmatpush1.msra.mxu0 %v275
    %731 = vmatprep.subr.mxu0 %v280
    %732 = vmatpush1.msra.mxu0 %v279
    %733 = vmatprep.subr.mxu0 %v284
    %734 = vmatpush1.msra.mxu0 %v283
    %735 = vmatprep.subr.mxu0 %v288
    %736 = vmatpush1.msra.mxu0 %v287
    %737 = vmatprep.subr.mxu0 %v292
    %738 = vmatpush1.msra.mxu0 %v291
    %739 = vmatprep.subr.mxu0 %v296
    %740 = vmatpush1.msra.mxu0 %v295
    %741 = vmatprep.subr.mxu0 %v300
    %742 = vmatpush1.msra.mxu0 %v299
    %743 = vmatprep.subr.mxu0 0.0
    %744 = vmatpush1.msra.mxu0 0.0
    %745 = vmatprep.subr.mxu0 0.0
    %746 = vmatpush1.msra.mxu0 0.0
    %747 = vmatprep.subr.mxu0 0.0
    %748 = vmatpush1.msra.mxu0 0.0
    %749 = vmatprep.subr.mxu0 0.0
    %750 = vmatpush1.msra.mxu0 0.0
    %751 = vmatprep.subr.mxu0 0.0
    %752 = vmatpush1.msra.mxu0 0.0
    %753 = vmatprep.subr.mxu0 0.0
    %754 = vmatpush1.msra.mxu0 0.0
    %755 = vmatprep.subr.mxu0 0.0
    %756 = vmatpush1.msra.mxu0 0.0
    %757 = vmatprep.subr.mxu0 0.0
    %758 = vmatpush1.msra.mxu0 0.0
    %759 = vmatprep.subr.mxu0 0.0
    %760 = vmatpush1.msra.mxu0 0.0
    %761 = vmatprep.subr.mxu0 0.0
    %762 = vmatpush1.msra.mxu0 0.0
    %763 = vmatprep.subr.mxu0 0.0
    %764 = vmatpush1.msra.mxu0 0.0
    %765 = vmatprep.subr.mxu0 0.0
    %766 = vmatpush1.msra.mxu0 0.0
    %767 = vmatprep.subr.mxu0 0.0
    %768 = vmatpush1.msra.mxu0 0.0
    %769 = vmatprep.subr.mxu0 0.0
    %770 = vmatpush1.msra.mxu0 0.0
    %771 = vmatprep.subr.mxu0 0.0
    %772 = vmatpush1.msra.mxu0 0.0
    %773 = vmatprep.subr.mxu0 0.0
    %774 = vmatpush1.msra.mxu0 0.0
    %775 = vmatprep.mubr.f32.mxu0 0.0
    %776 = vmatmul.mubr.f32.gmra.mrb[0].mxu0 0.0
    %v777 = vpop.f32.mrb[0].mxu0
    %v778 = vadd.f32 0.0, %v777
    %v779 = vpop.f32.mrb[0].mxu0
    %v780 = vadd.f32 0.0, %v779
    %781 = vdwg.mxu0
    %782 = vmatprep.subr.mxu0 %v174
    %783 = vmatpush1.msra.mxu0 %v173
    %784 = vmatprep.subr.mxu0 %v178
    %785 = vmatpush1.msra.mxu0 %v177
    %786 = vmatprep.subr.mxu0 %v182
    %787 = vmatpush1.msra.mxu0 %v181
    %788 = vmatprep.subr.mxu0 %v186
    %789 = vmatpush1.msra.mxu0 %v185
    %790 = vmatprep.subr.mxu0 %v190
    %791 = vmatpush1.msra.mxu0 %v189
    %792 = vmatprep.subr.mxu0 %v194
    %793 = vmatpush1.msra.mxu0 %v193
    %794 = vmatprep.subr.mxu0 %v198
    %795 = vmatpush1.msra.mxu0 %v197
    %796 = vmatprep.subr.mxu0 %v202
    %797 = vmatpush1.msra.mxu0 %v201
    %798 = vmatprep.subr.mxu0 %v206
    %799 = vmatpush1.msra.mxu0 %v205
    %800 = vmatprep.subr.mxu0 %v210
    %801 = vmatpush1.msra.mxu0 %v209
    %802 = vmatprep.subr.mxu0 %v214
    %803 = vmatpush1.msra.mxu0 %v213
    %804 = vmatprep.subr.mxu0 %v218
    %805 = vmatpush1.msra.mxu0 %v217
    %806 = vmatprep.subr.mxu0 %v222
    %807 = vmatpush1.msra.mxu0 %v221
    %808 = vmatprep.subr.mxu0 %v226
    %809 = vmatpush1.msra.mxu0 %v225
    %810 = vmatprep.subr.mxu0 %v230
    %811 = vmatpush1.msra.mxu0 %v229
    %812 = vmatprep.subr.mxu0 %v234
    %813 = vmatpush1.msra.mxu0 %v233
    %814 = vmatprep.subr.mxu0 0.0
    %815 = vmatpush1.msra.mxu0 0.0
    %816 = vmatprep.subr.mxu0 0.0
    %817 = vmatpush1.msra.mxu0 0.0
    %818 = vmatprep.subr.mxu0 0.0
    %819 = vmatpush1.msra.mxu0 0.0
    %820 = vmatprep.subr.mxu0 0.0
    %821 = vmatpush1.msra.mxu0 0.0
    %822 = vmatprep.subr.mxu0 0.0
    %823 = vmatpush1.msra.mxu0 0.0
    %824 = vmatprep.subr.mxu0 0.0
    %825 = vmatpush1.msra.mxu0 0.0
    %826 = vmatprep.subr.mxu0 0.0
    %827 = vmatpush1.msra.mxu0 0.0
    %828 = vmatprep.subr.mxu0 0.0
    %829 = vmatpush1.msra.mxu0 0.0
    %830 = vmatprep.subr.mxu0 0.0
    %831 = vmatpush1.msra.mxu0 0.0
    %832 = vmatprep.subr.mxu0 0.0
    %833 = vmatpush1.msra.mxu0 0.0
    %834 = vmatprep.subr.mxu0 0.0
    %835 = vmatpush1.msra.mxu0 0.0
    %836 = vmatprep.subr.mxu0 0.0
    %837 = vmatpush1.msra.mxu0 0.0
    %838 = vmatprep.subr.mxu0 0.0
    %839 = vmatpush1.msra.mxu0 0.0
    %840 = vmatprep.subr.mxu0 0.0
    %841 = vmatpush1.msra.mxu0 0.0
    %842 = vmatprep.subr.mxu0 0.0
    %843 = vmatpush1.msra.mxu0 0.0
    %844 = vmatprep.subr.mxu0 0.0
    %845 = vmatpush1.msra.mxu0 0.0
    %846 = vmatprep.mubr.f32.mxu0 0.0
    %847 = vmatmul.mubr.f32.gmra.mrb[0].mxu0 %v639
    %v848 = vpop.f32.mrb[0].mxu0
    %v849 = vadd.f32 %v707, %v848
    %v850 = vpop.f32.mrb[0].mxu0
    %v851 = vadd.f32 %v709, %v850
    %852 = vdwg.mxu0
    %853 = vmatprep.subr.mxu0 %v176
    %854 = vmatpush1.msra.mxu0 %v175
    %855 = vmatprep.subr.mxu0 %v180
    %856 = vmatpush1.msra.mxu0 %v179
    %857 = vmatprep.subr.mxu0 %v184
    %858 = vmatpush1.msra.mxu0 %v183
    %859 = vmatprep.subr.mxu0 %v188
    %860 = vmatpush1.msra.mxu0 %v187
    %861 = vmatprep.subr.mxu0 %v192
    %862 = vmatpush1.msra.mxu0 %v191
    %863 = vmatprep.subr.mxu0 %v196
    %864 = vmatpush1.msra.mxu0 %v195
    %865 = vmatprep.subr.mxu0 %v200
    %866 = vmatpush1.msra.mxu0 %v199
    %867 = vmatprep.subr.mxu0 %v204
    %868 = vmatpush1.msra.mxu0 %v203
    %869 = vmatprep.subr.mxu0 %v208
    %870 = vmatpush1.msra.mxu0 %v207
    %871 = vmatprep.subr.mxu0 %v212
    %872 = vmatpush1.msra.mxu0 %v211
    %873 = vmatprep.subr.mxu0 %v216
    %874 = vmatpush1.msra.mxu0 %v215
    %875 = vmatprep.subr.mxu0 %v220
    %876 = vmatpush1.msra.mxu0 %v219
    %877 = vmatprep.subr.mxu0 %v224
    %878 = vmatpush1.msra.mxu0 %v223
    %879 = vmatprep.subr.mxu0 %v228
    %880 = vmatpush1.msra.mxu0 %v227
    %881 = vmatprep.subr.mxu0 %v232
    %882 = vmatpush1.msra.mxu0 %v231
    %883 = vmatprep.subr.mxu0 %v236
    %884 = vmatpush1.msra.mxu0 %v235
    %885 = vmatprep.subr.mxu0 0.0
    %886 = vmatpush1.msra.mxu0 0.0
    %887 = vmatprep.subr.mxu0 0.0
    %888 = vmatpush1.msra.mxu0 0.0
    %889 = vmatprep.subr.mxu0 0.0
    %890 = vmatpush1.msra.mxu0 0.0
    %891 = vmatprep.subr.mxu0 0.0
    %892 = vmatpush1.msra.mxu0 0.0
    %893 = vmatprep.subr.mxu0 0.0
    %894 = vmatpush1.msra.mxu0 0.0
    %895 = vmatprep.subr.mxu0 0.0
    %896 = vmatpush1.msra.mxu0 0.0
    %897 = vmatprep.subr.mxu0 0.0
    %898 = vmatpush1.msra.mxu0 0.0
    %899 = vmatprep.subr.mxu0 0.0
    %900 = vmatpush1.msra.mxu0 0.0
    %901 = vmatprep.subr.mxu0 0.0
    %902 = vmatpush1.msra.mxu0 0.0
    %903 = vmatprep.subr.mxu0 0.0
    %904 = vmatpush1.msra.mxu0 0.0
    %905 = vmatprep.subr.mxu0 0.0
    %906 = vmatpush1.msra.mxu0 0.0
    %907 = vmatprep.subr.mxu0 0.0
    %908 = vmatpush1.msra.mxu0 0.0
    %909 = vmatprep.subr.mxu0 0.0
    %910 = vmatpush1.msra.mxu0 0.0
    %911 = vmatprep.subr.mxu0 0.0
    %912 = vmatpush1.msra.mxu0 0.0
    %913 = vmatprep.subr.mxu0 0.0
    %914 = vmatpush1.msra.mxu0 0.0
    %915 = vmatprep.subr.mxu0 0.0
    %916 = vmatpush1.msra.mxu0 0.0
    %917 = vmatprep.mubr.f32.mxu0 0.0
    %918 = vmatmul.mubr.f32.gmra.mrb[0].mxu0 %v639
    %v919 = vpop.f32.mrb[0].mxu0
    %v920 = vadd.f32 %v778, %v919
    %v921 = vpop.f32.mrb[0].mxu0
    %v922 = vadd.f32 %v780, %v921
    %923 = vdwg.mxu0
    %v925 = vlaneseq
    %v926 = vshrl.u32 %v925, 7
    %v927 = vsub.s32 0, %v926
    %v928 = vrot.slane %v301, %v927
    %v929 = vlaneseq
    %v930 = vshrl.u32 %v929, 7
    %v931 = vsub.s32 1, %v930
    %v932 = vrot.slane %v301, %v931
    %v933 = vlaneseq
    %v934 = vshrl.u32 %v933, 7
    %v935 = vsub.s32 2, %v934
    %v936 = vrot.slane %v301, %v935
    %v937 = vlaneseq
    %v938 = vshrl.u32 %v937, 7
    %v939 = vsub.s32 3, %v938
    %v940 = vrot.slane %v301, %v939
    %v945 = vadd.f32 %v849, %v928
    %v946 = vadd.f32 %v851, %v932
    %v947 = vadd.f32 %v920, %v936
    %v948 = vadd.f32 %v922, %v940
    %v949 = vxor.u32 %v945, 2147483648
    %v950 = vmul.f32 %v949, 1.442695
    %v951 = vpow.pop %v950
    %v952 = vadd.f32 %v951, 1.0
    %v953 = vrcp.pop %v952
    %v954 = vmul.f32 1.0, %v953
    %v955 = vxor.u32 %v946, 2147483648
    %v956 = vmul.f32 %v955, 1.442695
    %v957 = vpow.pop %v956
    %v958 = vadd.f32 %v957, 1.0
    %v959 = vrcp.pop %v958
    %v960 = vmul.f32 1.0, %v959
    %v961 = vtanh.pop %v947
    %v962 = vxor.u32 %v948, 2147483648
    %v963 = vmul.f32 %v962, 1.442695
    %v964 = vpow.pop %v963
    %v965 = vadd.f32 %v964, 1.0
    %v966 = vrcp.pop %v965
    %v967 = vmul.f32 1.0, %v966
    %v968 = vmul.f32 %v960, 0.0
    %v969 = vmul.f32 %v954, %v961
    %v970 = vadd.f32 %v968, %v969
    %v971 = vtanh.pop %v970
    %v972 = vmul.f32 %v967, %v971
    %s973 = scalar_lea.vmem %s0, 2
    %v974 = vld [vmem:[%s973] sm:$0x3]
    %975 = vmatprep.subr.mxu0 %v109
    %976 = vmatpush1.msra.mxu0 %v108
    %977 = vmatprep.subr.mxu0 %v113
    %978 = vmatpush1.msra.mxu0 %v112
    %979 = vmatprep.subr.mxu0 %v117
    %980 = vmatpush1.msra.mxu0 %v116
    %981 = vmatprep.subr.mxu0 %v121
    %982 = vmatpush1.msra.mxu0 %v120
    %983 = vmatprep.subr.mxu0 %v125
    %984 = vmatpush1.msra.mxu0 %v124
    %985 = vmatprep.subr.mxu0 %v129
    %986 = vmatpush1.msra.mxu0 %v128
    %987 = vmatprep.subr.mxu0 %v133
    %988 = vmatpush1.msra.mxu0 %v132
    %989 = vmatprep.subr.mxu0 %v137
    %990 = vmatpush1.msra.mxu0 %v136
    %991 = vmatprep.subr.mxu0 %v141
    %992 = vmatpush1.msra.mxu0 %v140
    %993 = vmatprep.subr.mxu0 %v145
    %994 = vmatpush1.msra.mxu0 %v144
    %995 = vmatprep.subr.mxu0 %v149
    %996 = vmatpush1.msra.mxu0 %v148
    %997 = vmatprep.subr.mxu0 %v153
    %998 = vmatpush1.msra.mxu0 %v152
    %999 = vmatprep.subr.mxu0 %v157
    %1000 = vmatpush1.msra.mxu0 %v156
    %1001 = vmatprep.subr.mxu0 %v161
    %1002 = vmatpush1.msra.mxu0 %v160
    %1003 = vmatprep.subr.mxu0 %v165
    %1004 = vmatpush1.msra.mxu0 %v164
    %1005 = vmatprep.subr.mxu0 %v169
    %1006 = vmatpush1.msra.mxu0 %v168
    %1007 = vmatprep.subr.mxu0 0.0
    %1008 = vmatpush1.msra.mxu0 0.0
    %1009 = vmatprep.subr.mxu0 0.0
    %1010 = vmatpush1.msra.mxu0 0.0
    %1011 = vmatprep.subr.mxu0 0.0
    %1012 = vmatpush1.msra.mxu0 0.0
    %1013 = vmatprep.subr.mxu0 0.0
    %1014 = vmatpush1.msra.mxu0 0.0
    %1015 = vmatprep.subr.mxu0 0.0
    %1016 = vmatpush1.msra.mxu0 0.0
    %1017 = vmatprep.subr.mxu0 0.0
    %1018 = vmatpush1.msra.mxu0 0.0
    %1019 = vmatprep.subr.mxu0 0.0
    %1020 = vmatpush1.msra.mxu0 0.0
    %1021 = vmatprep.subr.mxu0 0.0
    %1022 = vmatpush1.msra.mxu0 0.0
    %1023 = vmatprep.subr.mxu0 0.0
    %1024 = vmatpush1.msra.mxu0 0.0
    %1025 = vmatprep.subr.mxu0 0.0
    %1026 = vmatpush1.msra.mxu0 0.0
    %1027 = vmatprep.subr.mxu0 0.0
    %1028 = vmatpush1.msra.mxu0 0.0
    %1029 = vmatprep.subr.mxu0 0.0
    %1030 = vmatpush1.msra.mxu0 0.0
    %1031 = vmatprep.subr.mxu0 0.0
    %1032 = vmatpush1.msra.mxu0 0.0
    %1033 = vmatprep.subr.mxu0 0.0
    %1034 = vmatpush1.msra.mxu0 0.0
    %1035 = vmatprep.subr.mxu0 0.0
    %1036 = vmatpush1.msra.mxu0 0.0
    %1037 = vmatprep.subr.mxu0 0.0
    %1038 = vmatpush1.msra.mxu0 0.0
    %1039 = vmatprep.mubr.f32.mxu0 0.0
    %1040 = vmatmul.mubr.f32.gmra.mrb[0].mxu0 %v639
    %v1041 = vpop.f32.mrb[0].mxu0
    %v1042 = vadd.f32 0.0, %v1041
    %v1043 = vpop.f32.mrb[0].mxu0
    %v1044 = vadd.f32 0.0, %v1043
    %1045 = vdwg.mxu0
    %1046 = vmatprep.subr.mxu0 %v111
    %1047 = vmatpush1.msra.mxu0 %v110
    %1048 = vmatprep.subr.mxu0 %v115
    %1049 = vmatpush1.msra.mxu0 %v114
    %1050 = vmatprep.subr.mxu0 %v119
    %1051 = vmatpush1.msra.mxu0 %v118
    %1052 = vmatprep.subr.mxu0 %v123
    %1053 = vmatpush1.msra.mxu0 %v122
    %1054 = vmatprep.subr.mxu0 %v127
    %1055 = vmatpush1.msra.mxu0 %v126
    %1056 = vmatprep.subr.mxu0 %v131
    %1057 = vmatpush1.msra.mxu0 %v130
    %1058 = vmatprep.subr.mxu0 %v135
    %1059 = vmatpush1.msra.mxu0 %v134
    %1060 = vmatprep.subr.mxu0 %v139
    %1061 = vmatpush1.msra.mxu0 %v138
    %1062 = vmatprep.subr.mxu0 %v143
    %1063 = vmatpush1.msra.mxu0 %v142
    %1064 = vmatprep.subr.mxu0 %v147
    %1065 = vmatpush1.msra.mxu0 %v146
    %1066 = vmatprep.subr.mxu0 %v151
    %1067 = vmatpush1.msra.mxu0 %v150
    %1068 = vmatprep.subr.mxu0 %v155
    %1069 = vmatpush1.msra.mxu0 %v154
    %1070 = vmatprep.subr.mxu0 %v159
    %1071 = vmatpush1.msra.mxu0 %v158
    %1072 = vmatprep.subr.mxu0 %v163
    %1073 = vmatpush1.msra.mxu0 %v162
    %1074 = vmatprep.subr.mxu0 %v167
    %1075 = vmatpush1.msra.mxu0 %v166
    %1076 = vmatprep.subr.mxu0 %v171
    %1077 = vmatpush1.msra.mxu0 %v170
    %1078 = vmatprep.subr.mxu0 0.0
    %1079 = vmatpush1.msra.mxu0 0.0
    %1080 = vmatprep.subr.mxu0 0.0
    %1081 = vmatpush1.msra.mxu0 0.0
    %1082 = vmatprep.subr.mxu0 0.0
    %1083 = vmatpush1.msra.mxu0 0.0
    %1084 = vmatprep.subr.mxu0 0.0
    %1085 = vmatpush1.msra.mxu0 0.0
    %1086 = vmatprep.subr.mxu0 0.0
    %1087 = vmatpush1.msra.mxu0 0.0
    %1088 = vmatprep.subr.mxu0 0.0
    %1089 = vmatpush1.msra.mxu0 0.0
    %1090 = vmatprep.subr.mxu0 0.0
    %1091 = vmatpush1.msra.mxu0 0.0
    %1092 = vmatprep.subr.mxu0 0.0
    %1093 = vmatpush1.msra.mxu0 0.0
    %1094 = vmatprep.subr.mxu0 0.0
    %1095 = vmatpush1.msra.mxu0 0.0
    %1096 = vmatprep.subr.mxu0 0.0
    %1097 = vmatpush1.msra.mxu0 0.0
    %1098 = vmatprep.subr.mxu0 0.0
    %1099 = vmatpush1.msra.mxu0 0.0
    %1100 = vmatprep.subr.mxu0 0.0
    %1101 = vmatpush1.msra.mxu0 0.0
    %1102 = vmatprep.subr.mxu0 0.0
    %1103 = vmatpush1.msra.mxu0 0.0
    %1104 = vmatprep.subr.mxu0 0.0
    %1105 = vmatpush1.msra.mxu0 0.0
    %1106 = vmatprep.subr.mxu0 0.0
    %1107 = vmatpush1.msra.mxu0 0.0
    %1108 = vmatprep.subr.mxu0 0.0
    %1109 = vmatpush1.msra.mxu0 0.0
    %1110 = vmatprep.mubr.f32.mxu0 0.0
    %1111 = vmatmul.mubr.f32.gmra.mrb[0].mxu0 %v639
    %v1112 = vpop.f32.mrb[0].mxu0
    %v1113 = vadd.f32 0.0, %v1112
    %v1114 = vpop.f32.mrb[0].mxu0
    %v1115 = vadd.f32 0.0, %v1114
    %1116 = vdwg.mxu0
    %v1118 = vsel %vm445, %v974, 0
    %1120 = vmatprep.subr.mxu0 %v101
    %1121 = vmatpush1.msra.mxu0 %v100
    %1122 = vmatprep.subr.mxu0 %v105
    %1123 = vmatpush1.msra.mxu0 %v104
    %1124 = vmatprep.subr.mxu0 0.0
    %1125 = vmatpush1.msra.mxu0 0.0
    %1126 = vmatprep.subr.mxu0 0.0
    %1127 = vmatpush1.msra.mxu0 0.0
    %1128 = vmatprep.subr.mxu0 0.0
    %1129 = vmatpush1.msra.mxu0 0.0
    %1130 = vmatprep.subr.mxu0 0.0
    %1131 = vmatpush1.msra.mxu0 0.0
    %1132 = vmatprep.subr.mxu0 0.0
    %1133 = vmatpush1.msra.mxu0 0.0
    %1134 = vmatprep.subr.mxu0 0.0
    %1135 = vmatpush1.msra.mxu0 0.0
    %1136 = vmatprep.subr.mxu0 0.0
    %1137 = vmatpush1.msra.mxu0 0.0
    %1138 = vmatprep.subr.mxu0 0.0
    %1139 = vmatpush1.msra.mxu0 0.0
    %1140 = vmatprep.subr.mxu0 0.0
    %1141 = vmatpush1.msra.mxu0 0.0
    %1142 = vmatprep.subr.mxu0 0.0
    %1143 = vmatpush1.msra.mxu0 0.0
    %1144 = vmatprep.subr.mxu0 0.0
    %1145 = vmatpush1.msra.mxu0 0.0
    %1146 = vmatprep.subr.mxu0 0.0
    %1147 = vmatpush1.msra.mxu0 0.0
    %1148 = vmatprep.subr.mxu0 0.0
    %1149 = vmatpush1.msra.mxu0 0.0
    %1150 = vmatprep.subr.mxu0 0.0
    %1151 = vmatpush1.msra.mxu0 0.0
    %1152 = vmatprep.subr.mxu0 0.0
    %1153 = vmatpush1.msra.mxu0 0.0
    %1154 = vmatprep.subr.mxu0 0.0
    %1155 = vmatpush1.msra.mxu0 0.0
    %1156 = vmatprep.subr.mxu0 0.0
    %1157 = vmatpush1.msra.mxu0 0.0
    %1158 = vmatprep.subr.mxu0 0.0
    %1159 = vmatpush1.msra.mxu0 0.0
    %1160 = vmatprep.subr.mxu0 0.0
    %1161 = vmatpush1.msra.mxu0 0.0
    %1162 = vmatprep.subr.mxu0 0.0
    %1163 = vmatpush1.msra.mxu0 0.0
    %1164 = vmatprep.subr.mxu0 0.0
    %1165 = vmatpush1.msra.mxu0 0.0
    %1166 = vmatprep.subr.mxu0 0.0
    %1167 = vmatpush1.msra.mxu0 0.0
    %1168 = vmatprep.subr.mxu0 0.0
    %1169 = vmatpush1.msra.mxu0 0.0
    %1170 = vmatprep.subr.mxu0 0.0
    %1171 = vmatpush1.msra.mxu0 0.0
    %1172 = vmatprep.subr.mxu0 0.0
    %1173 = vmatpush1.msra.mxu0 0.0
    %1174 = vmatprep.subr.mxu0 0.0
    %1175 = vmatpush1.msra.mxu0 0.0
    %1176 = vmatprep.subr.mxu0 0.0
    %1177 = vmatpush1.msra.mxu0 0.0
    %1178 = vmatprep.subr.mxu0 0.0
    %1179 = vmatpush1.msra.mxu0 0.0
    %1180 = vmatprep.subr.mxu0 0.0
    %1181 = vmatpush1.msra.mxu0 0.0
    %1182 = vmatprep.subr.mxu0 0.0
    %1183 = vmatpush1.msra.mxu0 0.0
    %1184 = vmatprep.mubr.f32.mxu0 0.0
    %1185 = vmatmul.mubr.f32.gmra.mrb[0].mxu0 %v1118
    %v1186 = vpop.f32.mrb[0].mxu0
    %v1187 = vadd.f32 %v1042, %v1186
    %v1188 = vpop.f32.mrb[0].mxu0
    %v1189 = vadd.f32 %v1044, %v1188
    %1190 = vdwg.mxu0
    %1191 = vmatprep.subr.mxu0 %v103
    %1192 = vmatpush1.msra.mxu0 %v102
    %1193 = vmatprep.subr.mxu0 %v107
    %1194 = vmatpush1.msra.mxu0 %v106
    %1195 = vmatprep.subr.mxu0 0.0
    %1196 = vmatpush1.msra.mxu0 0.0
    %1197 = vmatprep.subr.mxu0 0.0
    %1198 = vmatpush1.msra.mxu0 0.0
    %1199 = vmatprep.subr.mxu0 0.0
    %1200 = vmatpush1.msra.mxu0 0.0
    %1201 = vmatprep.subr.mxu0 0.0
    %1202 = vmatpush1.msra.mxu0 0.0
    %1203 = vmatprep.subr.mxu0 0.0
    %1204 = vmatpush1.msra.mxu0 0.0
    %1205 = vmatprep.subr.mxu0 0.0
    %1206 = vmatpush1.msra.mxu0 0.0
    %1207 = vmatprep.subr.mxu0 0.0
    %1208 = vmatpush1.msra.mxu0 0.0
    %1209 = vmatprep.subr.mxu0 0.0
    %1210 = vmatpush1.msra.mxu0 0.0
    %1211 = vmatprep.subr.mxu0 0.0
    %1212 = vmatpush1.msra.mxu0 0.0
    %1213 = vmatprep.subr.mxu0 0.0
    %1214 = vmatpush1.msra.mxu0 0.0
    %1215 = vmatprep.subr.mxu0 0.0
    %1216 = vmatpush1.msra.mxu0 0.0
    %1217 = vmatprep.subr.mxu0 0.0
    %1218 = vmatpush1.msra.mxu0 0.0
    %1219 = vmatprep.subr.mxu0 0.0
    %1220 = vmatpush1.msra.mxu0 0.0
    %1221 = vmatprep.subr.mxu0 0.0
    %1222 = vmatpush1.msra.mxu0 0.0
    %1223 = vmatprep.subr.mxu0 0.0
    %1224 = vmatpush1.msra.mxu0 0.0
    %1225 = vmatprep.subr.mxu0 0.0
    %1226 = vmatpush1.msra.mxu0 0.0
    %1227 = vmatprep.subr.mxu0 0.0
    %1228 = vmatpush1.msra.mxu0 0.0
    %1229 = vmatprep.subr.mxu0 0.0
    %1230 = vmatpush1.msra.mxu0 0.0
    %1231 = vmatprep.subr.mxu0 0.0
    %1232 = vmatpush1.msra.mxu0 0.0
    %1233 = vmatprep.subr.mxu0 0.0
    %1234 = vmatpush1.msra.mxu0 0.0
    %1235 = vmatprep.subr.mxu0 0.0
    %1236 = vmatpush1.msra.mxu0 0.0
    %1237 = vmatprep.subr.mxu0 0.0
    %1238 = vmatpush1.msra.mxu0 0.0
    %1239 = vmatprep.subr.mxu0 0.0
    %1240 = vmatpush1.msra.mxu0 0.0
    %1241 = vmatprep.subr.mxu0 0.0
    %1242 = vmatpush1.msra.mxu0 0.0
    %1243 = vmatprep.subr.mxu0 0.0
    %1244 = vmatpush1.msra.mxu0 0.0
    %1245 = vmatprep.subr.mxu0 0.0
    %1246 = vmatpush1.msra.mxu0 0.0
    %1247 = vmatprep.subr.mxu0 0.0
    %1248 = vmatpush1.msra.mxu0 0.0
    %1249 = vmatprep.subr.mxu0 0.0
    %1250 = vmatpush1.msra.mxu0 0.0
    %1251 = vmatprep.subr.mxu0 0.0
    %1252 = vmatpush1.msra.mxu0 0.0
    %1253 = vmatprep.subr.mxu0 0.0
    %1254 = vmatpush1.msra.mxu0 0.0
    %1255 = vmatprep.mubr.f32.mxu0 0.0
    %1256 = vmatmul.mubr.f32.gmra.mrb[0].mxu0 %v1118
    %v1257 = vpop.f32.mrb[0].mxu0
    %v1258 = vadd.f32 %v1113, %v1257
    %v1259 = vpop.f32.mrb[0].mxu0
    %v1260 = vadd.f32 %v1115, %v1259
    %1261 = vdwg.mxu0
    %v1262 = vadd.f32 %v1187, %v595
    %v1263 = vadd.f32 %v1189, %v599
    %v1264 = vadd.f32 %v1258, %v603
    %v1265 = vadd.f32 %v1260, %v607
    %v1266 = vxor.u32 %v1262, 2147483648
    %v1267 = vmul.f32 %v1266, 1.442695
    %v1268 = vpow.pop %v1267
    %v1269 = vadd.f32 %v1268, 1.0
    %v1270 = vrcp.pop %v1269
    %v1271 = vmul.f32 1.0, %v1270
    %v1272 = vxor.u32 %v1263, 2147483648
    %v1273 = vmul.f32 %v1272, 1.442695
    %v1274 = vpow.pop %v1273
    %v1275 = vadd.f32 %v1274, 1.0
    %v1276 = vrcp.pop %v1275
    %v1277 = vmul.f32 1.0, %v1276
    %v1278 = vtanh.pop %v1264
    %v1279 = vxor.u32 %v1265, 2147483648
    %v1280 = vmul.f32 %v1279, 1.442695
    %v1281 = vpow.pop %v1280
    %v1282 = vadd.f32 %v1281, 1.0
    %v1283 = vrcp.pop %v1282
    %v1284 = vmul.f32 1.0, %v1283
    %v1285 = vmul.f32 %v1277, %v637
    %v1286 = vmul.f32 %v1271, %v1278
    %v1287 = vadd.f32 %v1285, %v1286
    %v1288 = vtanh.pop %v1287
    %v1289 = vmul.f32 %v1284, %v1288
    %1290 = vmatprep.subr.mxu0 %v238
    %1291 = vmatpush1.msra.mxu0 %v237
    %1292 = vmatprep.subr.mxu0 %v242
    %1293 = vmatpush1.msra.mxu0 %v241
    %1294 = vmatprep.subr.mxu0 %v246
    %1295 = vmatpush1.msra.mxu0 %v245
    %1296 = vmatprep.subr.mxu0 %v250
    %1297 = vmatpush1.msra.mxu0 %v249
    %1298 = vmatprep.subr.mxu0 %v254
    %1299 = vmatpush1.msra.mxu0 %v253
    %1300 = vmatprep.subr.mxu0 %v258
    %1301 = vmatpush1.msra.mxu0 %v257
    %1302 = vmatprep.subr.mxu0 %v262
    %1303 = vmatpush1.msra.mxu0 %v261
    %1304 = vmatprep.subr.mxu0 %v266
    %1305 = vmatpush1.msra.mxu0 %v265
    %1306 = vmatprep.subr.mxu0 %v270
    %1307 = vmatpush1.msra.mxu0 %v269
    %1308 = vmatprep.subr.mxu0 %v274
    %1309 = vmatpush1.msra.mxu0 %v273
    %1310 = vmatprep.subr.mxu0 %v278
    %1311 = vmatpush1.msra.mxu0 %v277
    %1312 = vmatprep.subr.mxu0 %v282
    %1313 = vmatpush1.msra.mxu0 %v281
    %1314 = vmatprep.subr.mxu0 %v286
    %1315 = vmatpush1.msra.mxu0 %v285
    %1316 = vmatprep.subr.mxu0 %v290
    %1317 = vmatpush1.msra.mxu0 %v289
    %1318 = vmatprep.subr.mxu0 %v294
    %1319 = vmatpush1.msra.mxu0 %v293
    %1320 = vmatprep.subr.mxu0 %v298
    %1321 = vmatpush1.msra.mxu0 %v297
    %1322 = vmatprep.subr.mxu0 0.0
    %1323 = vmatpush1.msra.mxu0 0.0
    %1324 = vmatprep.subr.mxu0 0.0
    %1325 = vmatpush1.msra.mxu0 0.0
    %1326 = vmatprep.subr.mxu0 0.0
    %1327 = vmatpush1.msra.mxu0 0.0
    %1328 = vmatprep.subr.mxu0 0.0
    %1329 = vmatpush1.msra.mxu0 0.0
    %1330 = vmatprep.subr.mxu0 0.0
    %1331 = vmatpush1.msra.mxu0 0.0
    %1332 = vmatprep.subr.mxu0 0.0
    %1333 = vmatpush1.msra.mxu0 0.0
    %1334 = vmatprep.subr.mxu0 0.0
    %1335 = vmatpush1.msra.mxu0 0.0
    %1336 = vmatprep.subr.mxu0 0.0
    %1337 = vmatpush1.msra.mxu0 0.0
    %1338 = vmatprep.subr.mxu0 0.0
    %1339 = vmatpush1.msra.mxu0 0.0
    %1340 = vmatprep.subr.mxu0 0.0
    %1341 = vmatpush1.msra.mxu0 0.0
    %1342 = vmatprep.subr.mxu0 0.0
    %1343 = vmatpush1.msra.mxu0 0.0
    %1344 = vmatprep.subr.mxu0 0.0
    %1345 = vmatpush1.msra.mxu0 0.0
    %1346 = vmatprep.subr.mxu0 0.0
    %1347 = vmatpush1.msra.mxu0 0.0
    %1348 = vmatprep.subr.mxu0 0.0
    %1349 = vmatpush1.msra.mxu0 0.0
    %1350 = vmatprep.subr.mxu0 0.0
    %1351 = vmatpush1.msra.mxu0 0.0
    %1352 = vmatprep.subr.mxu0 0.0
    %1353 = vmatpush1.msra.mxu0 0.0
    %1354 = vmatprep.mubr.f32.mxu0 0.0
    %1355 = vmatmul.mubr.f32.gmra.mrb[0].mxu0 %v972
    %v1356 = vpop.f32.mrb[0].mxu0
    %v1357 = vadd.f32 0.0, %v1356
    %v1358 = vpop.f32.mrb[0].mxu0
    %v1359 = vadd.f32 0.0, %v1358
    %1360 = vdwg.mxu0
    %1361 = vmatprep.subr.mxu0 %v240
    %1362 = vmatpush1.msra.mxu0 %v239
    %1363 = vmatprep.subr.mxu0 %v244
    %1364 = vmatpush1.msra.mxu0 %v243
    %1365 = vmatprep.subr.mxu0 %v248
    %1366 = vmatpush1.msra.mxu0 %v247
    %1367 = vmatprep.subr.mxu0 %v252
    %1368 = vmatpush1.msra.mxu0 %v251
    %1369 = vmatprep.subr.mxu0 %v256
    %1370 = vmatpush1.msra.mxu0 %v255
    %1371 = vmatprep.subr.mxu0 %v260
    %1372 = vmatpush1.msra.mxu0 %v259
    %1373 = vmatprep.subr.mxu0 %v264
    %1374 = vmatpush1.msra.mxu0 %v263
    %1375 = vmatprep.subr.mxu0 %v268
    %1376 = vmatpush1.msra.mxu0 %v267
    %1377 = vmatprep.subr.mxu0 %v272
    %1378 = vmatpush1.msra.mxu0 %v271
    %1379 = vmatprep.subr.mxu0 %v276
    %1380 = vmatpush1.msra.mxu0 %v275
    %1381 = vmatprep.subr.mxu0 %v280
    %1382 = vmatpush1.msra.mxu0 %v279
    %1383 = vmatprep.subr.mxu0 %v284
    %1384 = vmatpush1.msra.mxu0 %v283
    %1385 = vmatprep.subr.mxu0 %v288
    %1386 = vmatpush1.msra.mxu0 %v287
    %1387 = vmatprep.subr.mxu0 %v292
    %1388 = vmatpush1.msra.mxu0 %v291
    %1389 = vmatprep.subr.mxu0 %v296
    %1390 = vmatpush1.msra.mxu0 %v295
    %1391 = vmatprep.subr.mxu0 %v300
    %1392 = vmatpush1.msra.mxu0 %v299
    %1393 = vmatprep.subr.mxu0 0.0
    %1394 = vmatpush1.msra.mxu0 0.0
    %1395 = vmatprep.subr.mxu0 0.0
    %1396 = vmatpush1.msra.mxu0 0.0
    %1397 = vmatprep.subr.mxu0 0.0
    %1398 = vmatpush1.msra.mxu0 0.0
    %1399 = vmatprep.subr.mxu0 0.0
    %1400 = vmatpush1.msra.mxu0 0.0
    %1401 = vmatprep.subr.mxu0 0.0
    %1402 = vmatpush1.msra.mxu0 0.0
    %1403 = vmatprep.subr.mxu0 0.0
    %1404 = vmatpush1.msra.mxu0 0.0
    %1405 = vmatprep.subr.mxu0 0.0
    %1406 = vmatpush1.msra.mxu0 0.0
    %1407 = vmatprep.subr.mxu0 0.0
    %1408 = vmatpush1.msra.mxu0 0.0
    %1409 = vmatprep.subr.mxu0 0.0
    %1410 = vmatpush1.msra.mxu0 0.0
    %1411 = vmatprep.subr.mxu0 0.0
    %1412 = vmatpush1.msra.mxu0 0.0
    %1413 = vmatprep.subr.mxu0 0.0
    %1414 = vmatpush1.msra.mxu0 0.0
    %1415 = vmatprep.subr.mxu0 0.0
    %1416 = vmatpush1.msra.mxu0 0.0
    %1417 = vmatprep.subr.mxu0 0.0
    %1418 = vmatpush1.msra.mxu0 0.0
    %1419 = vmatprep.subr.mxu0 0.0
    %1420 = vmatpush1.msra.mxu0 0.0
    %1421 = vmatprep.subr.mxu0 0.0
    %1422 = vmatpush1.msra.mxu0 0.0
    %1423 = vmatprep.subr.mxu0 0.0
    %1424 = vmatpush1.msra.mxu0 0.0
    %1425 = vmatprep.mubr.f32.mxu0 0.0
    %1426 = vmatmul.mubr.f32.gmra.mrb[0].mxu0 %v972
    %v1427 = vpop.f32.mrb[0].mxu0
    %v1428 = vadd.f32 0.0, %v1427
    %v1429 = vpop.f32.mrb[0].mxu0
    %v1430 = vadd.f32 0.0, %v1429
    %1431 = vdwg.mxu0
    %1432 = vmatprep.subr.mxu0 %v174
    %1433 = vmatpush1.msra.mxu0 %v173
    %1434 = vmatprep.subr.mxu0 %v178
    %1435 = vmatpush1.msra.mxu0 %v177
    %1436 = vmatprep.subr.mxu0 %v182
    %1437 = vmatpush1.msra.mxu0 %v181
    %1438 = vmatprep.subr.mxu0 %v186
    %1439 = vmatpush1.msra.mxu0 %v185
    %1440 = vmatprep.subr.mxu0 %v190
    %1441 = vmatpush1.msra.mxu0 %v189
    %1442 = vmatprep.subr.mxu0 %v194
    %1443 = vmatpush1.msra.mxu0 %v193
    %1444 = vmatprep.subr.mxu0 %v198
    %1445 = vmatpush1.msra.mxu0 %v197
    %1446 = vmatprep.subr.mxu0 %v202
    %1447 = vmatpush1.msra.mxu0 %v201
    %1448 = vmatprep.subr.mxu0 %v206
    %1449 = vmatpush1.msra.mxu0 %v205
    %1450 = vmatprep.subr.mxu0 %v210
    %1451 = vmatpush1.msra.mxu0 %v209
    %1452 = vmatprep.subr.mxu0 %v214
    %1453 = vmatpush1.msra.mxu0 %v213
    %1454 = vmatprep.subr.mxu0 %v218
    %1455 = vmatpush1.msra.mxu0 %v217
    %1456 = vmatprep.subr.mxu0 %v222
    %1457 = vmatpush1.msra.mxu0 %v221
    %1458 = vmatprep.subr.mxu0 %v226
    %1459 = vmatpush1.msra.mxu0 %v225
    %1460 = vmatprep.subr.mxu0 %v230
    %1461 = vmatpush1.msra.mxu0 %v229
    %1462 = vmatprep.subr.mxu0 %v234
    %1463 = vmatpush1.msra.mxu0 %v233
    %1464 = vmatprep.subr.mxu0 0.0
    %1465 = vmatpush1.msra.mxu0 0.0
    %1466 = vmatprep.subr.mxu0 0.0
    %1467 = vmatpush1.msra.mxu0 0.0
    %1468 = vmatprep.subr.mxu0 0.0
    %1469 = vmatpush1.msra.mxu0 0.0
    %1470 = vmatprep.subr.mxu0 0.0
    %1471 = vmatpush1.msra.mxu0 0.0
    %1472 = vmatprep.subr.mxu0 0.0
    %1473 = vmatpush1.msra.mxu0 0.0
    %1474 = vmatprep.subr.mxu0 0.0
    %1475 = vmatpush1.msra.mxu0 0.0
    %1476 = vmatprep.subr.mxu0 0.0
    %1477 = vmatpush1.msra.mxu0 0.0
    %1478 = vmatprep.subr.mxu0 0.0
    %1479 = vmatpush1.msra.mxu0 0.0
    %1480 = vmatprep.subr.mxu0 0.0
    %1481 = vmatpush1.msra.mxu0 0.0
    %1482 = vmatprep.subr.mxu0 0.0
    %1483 = vmatpush1.msra.mxu0 0.0
    %1484 = vmatprep.subr.mxu0 0.0
    %1485 = vmatpush1.msra.mxu0 0.0
    %1486 = vmatprep.subr.mxu0 0.0
    %1487 = vmatpush1.msra.mxu0 0.0
    %1488 = vmatprep.subr.mxu0 0.0
    %1489 = vmatpush1.msra.mxu0 0.0
    %1490 = vmatprep.subr.mxu0 0.0
    %1491 = vmatpush1.msra.mxu0 0.0
    %1492 = vmatprep.subr.mxu0 0.0
    %1493 = vmatpush1.msra.mxu0 0.0
    %1494 = vmatprep.subr.mxu0 0.0
    %1495 = vmatpush1.msra.mxu0 0.0
    %1496 = vmatprep.mubr.f32.mxu0 0.0
    %1497 = vmatmul.mubr.f32.gmra.mrb[0].mxu0 %v1289
    %v1498 = vpop.f32.mrb[0].mxu0
    %v1499 = vadd.f32 %v1357, %v1498
    %v1500 = vpop.f32.mrb[0].mxu0
    %v1501 = vadd.f32 %v1359, %v1500
    %1502 = vdwg.mxu0
    %1503 = vmatprep.subr.mxu0 %v176
    %1504 = vmatpush1.msra.mxu0 %v175
    %1505 = vmatprep.subr.mxu0 %v180
    %1506 = vmatpush1.msra.mxu0 %v179
    %1507 = vmatprep.subr.mxu0 %v184
    %1508 = vmatpush1.msra.mxu0 %v183
    %1509 = vmatprep.subr.mxu0 %v188
    %1510 = vmatpush1.msra.mxu0 %v187
    %1511 = vmatprep.subr.mxu0 %v192
    %1512 = vmatpush1.msra.mxu0 %v191
    %1513 = vmatprep.subr.mxu0 %v196
    %1514 = vmatpush1.msra.mxu0 %v195
    %1515 = vmatprep.subr.mxu0 %v200
    %1516 = vmatpush1.msra.mxu0 %v199
    %1517 = vmatprep.subr.mxu0 %v204
    %1518 = vmatpush1.msra.mxu0 %v203
    %1519 = vmatprep.subr.mxu0 %v208
    %1520 = vmatpush1.msra.mxu0 %v207
    %1521 = vmatprep.subr.mxu0 %v212
    %1522 = vmatpush1.msra.mxu0 %v211
    %1523 = vmatprep.subr.mxu0 %v216
    %1524 = vmatpush1.msra.mxu0 %v215
    %1525 = vmatprep.subr.mxu0 %v220
    %1526 = vmatpush1.msra.mxu0 %v219
    %1527 = vmatprep.subr.mxu0 %v224
    %1528 = vmatpush1.msra.mxu0 %v223
    %1529 = vmatprep.subr.mxu0 %v228
    %1530 = vmatpush1.msra.mxu0 %v227
    %1531 = vmatprep.subr.mxu0 %v232
    %1532 = vmatpush1.msra.mxu0 %v231
    %1533 = vmatprep.subr.mxu0 %v236
    %1534 = vmatpush1.msra.mxu0 %v235
    %1535 = vmatprep.subr.mxu0 0.0
    %1536 = vmatpush1.msra.mxu0 0.0
    %1537 = vmatprep.subr.mxu0 0.0
    %1538 = vmatpush1.msra.mxu0 0.0
    %1539 = vmatprep.subr.mxu0 0.0
    %1540 = vmatpush1.msra.mxu0 0.0
    %1541 = vmatprep.subr.mxu0 0.0
    %1542 = vmatpush1.msra.mxu0 0.0
    %1543 = vmatprep.subr.mxu0 0.0
    %1544 = vmatpush1.msra.mxu0 0.0
    %1545 = vmatprep.subr.mxu0 0.0
    %1546 = vmatpush1.msra.mxu0 0.0
    %1547 = vmatprep.subr.mxu0 0.0
    %1548 = vmatpush1.msra.mxu0 0.0
    %1549 = vmatprep.subr.mxu0 0.0
    %1550 = vmatpush1.msra.mxu0 0.0
    %1551 = vmatprep.subr.mxu0 0.0
    %1552 = vmatpush1.msra.mxu0 0.0
    %1553 = vmatprep.subr.mxu0 0.0
    %1554 = vmatpush1.msra.mxu0 0.0
    %1555 = vmatprep.subr.mxu0 0.0
    %1556 = vmatpush1.msra.mxu0 0.0
    %1557 = vmatprep.subr.mxu0 0.0
    %1558 = vmatpush1.msra.mxu0 0.0
    %1559 = vmatprep.subr.mxu0 0.0
    %1560 = vmatpush1.msra.mxu0 0.0
    %1561 = vmatprep.subr.mxu0 0.0
    %1562 = vmatpush1.msra.mxu0 0.0
    %1563 = vmatprep.subr.mxu0 0.0
    %1564 = vmatpush1.msra.mxu0 0.0
    %1565 = vmatprep.subr.mxu0 0.0
    %1566 = vmatpush1.msra.mxu0 0.0
    %1567 = vmatprep.mubr.f32.mxu0 0.0
    %1568 = vmatmul.mubr.f32.gmra.mrb[0].mxu0 %v1289
    %v1569 = vpop.f32.mrb[0].mxu0
    %v1570 = vadd.f32 %v1428, %v1569
    %v1571 = vpop.f32.mrb[0].mxu0
    %v1572 = vadd.f32 %v1430, %v1571
    %1573 = vdwg.mxu0
    %v1574 = vadd.f32 %v1499, %v928
    %v1575 = vadd.f32 %v1501, %v932
    %v1576 = vadd.f32 %v1570, %v936
    %v1577 = vadd.f32 %v1572, %v940
    %v1578 = vxor.u32 %v1574, 2147483648
    %v1579 = vmul.f32 %v1578, 1.442695
    %v1580 = vpow.pop %v1579
    %v1581 = vadd.f32 %v1580, 1.0
    %v1582 = vrcp.pop %v1581
    %v1583 = vmul.f32 1.0, %v1582
    %v1584 = vxor.u32 %v1575, 2147483648
    %v1585 = vmul.f32 %v1584, 1.442695
    %v1586 = vpow.pop %v1585
    %v1587 = vadd.f32 %v1586, 1.0
    %v1588 = vrcp.pop %v1587
    %v1589 = vmul.f32 1.0, %v1588
    %v1590 = vtanh.pop %v1576
    %v1591 = vxor.u32 %v1577, 2147483648
    %v1592 = vmul.f32 %v1591, 1.442695
    %v1593 = vpow.pop %v1592
    %v1594 = vadd.f32 %v1593, 1.0
    %v1595 = vrcp.pop %v1594
    %v1596 = vmul.f32 1.0, %v1595
    %v1597 = vmul.f32 %v1589, %v970
    %v1598 = vmul.f32 %v1583, %v1590
    %v1599 = vadd.f32 %v1597, %v1598
    %v1600 = vtanh.pop %v1599
    %v1601 = vmul.f32 %v1596, %v1600
    %s1602 = scalar_lea.vmem %s0, 4
    %v1603 = vld [vmem:[%s1602] sm:$0x3]
    %1604 = vmatprep.subr.mxu0 %v109
    %1605 = vmatpush1.msra.mxu0 %v108
    %1606 = vmatprep.subr.mxu0 %v113
    %1607 = vmatpush1.msra.mxu0 %v112
    %1608 = vmatprep.subr.mxu0 %v117
    %1609 = vmatpush1.msra.mxu0 %v116
    %1610 = vmatprep.subr.mxu0 %v121
    %1611 = vmatpush1.msra.mxu0 %v120
    %1612 = vmatprep.subr.mxu0 %v125
    %1613 = vmatpush1.msra.mxu0 %v124
    %1614 = vmatprep.subr.mxu0 %v129
    %1615 = vmatpush1.msra.mxu0 %v128
    %1616 = vmatprep.subr.mxu0 %v133
    %1617 = vmatpush1.msra.mxu0 %v132
    %1618 = vmatprep.subr.mxu0 %v137
    %1619 = vmatpush1.msra.mxu0 %v136
    %1620 = vmatprep.subr.mxu0 %v141
    %1621 = vmatpush1.msra.mxu0 %v140
    %1622 = vmatprep.subr.mxu0 %v145
    %1623 = vmatpush1.msra.mxu0 %v144
    %1624 = vmatprep.subr.mxu0 %v149
    %1625 = vmatpush1.msra.mxu0 %v148
    %1626 = vmatprep.subr.mxu0 %v153
    %1627 = vmatpush1.msra.mxu0 %v152
    %1628 = vmatprep.subr.mxu0 %v157
    %1629 = vmatpush1.msra.mxu0 %v156
    %1630 = vmatprep.subr.mxu0 %v161
    %1631 = vmatpush1.msra.mxu0 %v160
    %1632 = vmatprep.subr.mxu0 %v165
    %1633 = vmatpush1.msra.mxu0 %v164
    %1634 = vmatprep.subr.mxu0 %v169
    %1635 = vmatpush1.msra.mxu0 %v168
    %1636 = vmatprep.subr.mxu0 0.0
    %1637 = vmatpush1.msra.mxu0 0.0
    %1638 = vmatprep.subr.mxu0 0.0
    %1639 = vmatpush1.msra.mxu0 0.0
    %1640 = vmatprep.subr.mxu0 0.0
    %1641 = vmatpush1.msra.mxu0 0.0
    %1642 = vmatprep.subr.mxu0 0.0
    %1643 = vmatpush1.msra.mxu0 0.0
    %1644 = vmatprep.subr.mxu0 0.0
    %1645 = vmatpush1.msra.mxu0 0.0
    %1646 = vmatprep.subr.mxu0 0.0
    %1647 = vmatpush1.msra.mxu0 0.0
    %1648 = vmatprep.subr.mxu0 0.0
    %1649 = vmatpush1.msra.mxu0 0.0
    %1650 = vmatprep.subr.mxu0 0.0
    %1651 = vmatpush1.msra.mxu0 0.0
    %1652 = vmatprep.subr.mxu0 0.0
    %1653 = vmatpush1.msra.mxu0 0.0
    %1654 = vmatprep.subr.mxu0 0.0
    %1655 = vmatpush1.msra.mxu0 0.0
    %1656 = vmatprep.subr.mxu0 0.0
    %1657 = vmatpush1.msra.mxu0 0.0
    %1658 = vmatprep.subr.mxu0 0.0
    %1659 = vmatpush1.msra.mxu0 0.0
    %1660 = vmatprep.subr.mxu0 0.0
    %1661 = vmatpush1.msra.mxu0 0.0
    %1662 = vmatprep.subr.mxu0 0.0
    %1663 = vmatpush1.msra.mxu0 0.0
    %1664 = vmatprep.subr.mxu0 0.0
    %1665 = vmatpush1.msra.mxu0 0.0
    %1666 = vmatprep.subr.mxu0 0.0
    %1667 = vmatpush1.msra.mxu0 0.0
    %1668 = vmatprep.mubr.f32.mxu0 0.0
    %1669 = vmatmul.mubr.f32.gmra.mrb[0].mxu0 %v1289
    %v1670 = vpop.f32.mrb[0].mxu0
    %v1671 = vadd.f32 0.0, %v1670
    %v1672 = vpop.f32.mrb[0].mxu0
    %v1673 = vadd.f32 0.0, %v1672
    %1674 = vdwg.mxu0
    %1675 = vmatprep.subr.mxu0 %v111
    %1676 = vmatpush1.msra.mxu0 %v110
    %1677 = vmatprep.subr.mxu0 %v115
    %1678 = vmatpush1.msra.mxu0 %v114
    %1679 = vmatprep.subr.mxu0 %v119
    %1680 = vmatpush1.msra.mxu0 %v118
    %1681 = vmatprep.subr.mxu0 %v123
    %1682 = vmatpush1.msra.mxu0 %v122
    %1683 = vmatprep.subr.mxu0 %v127
    %1684 = vmatpush1.msra.mxu0 %v126
    %1685 = vmatprep.subr.mxu0 %v131
    %1686 = vmatpush1.msra.mxu0 %v130
    %1687 = vmatprep.subr.mxu0 %v135
    %1688 = vmatpush1.msra.mxu0 %v134
    %1689 = vmatprep.subr.mxu0 %v139
    %1690 = vmatpush1.msra.mxu0 %v138
    %1691 = vmatprep.subr.mxu0 %v143
    %1692 = vmatpush1.msra.mxu0 %v142
    %1693 = vmatprep.subr.mxu0 %v147
    %1694 = vmatpush1.msra.mxu0 %v146
    %1695 = vmatprep.subr.mxu0 %v151
    %1696 = vmatpush1.msra.mxu0 %v150
    %1697 = vmatprep.subr.mxu0 %v155
    %1698 = vmatpush1.msra.mxu0 %v154
    %1699 = vmatprep.subr.mxu0 %v159
    %1700 = vmatpush1.msra.mxu0 %v158
    %1701 = vmatprep.subr.mxu0 %v163
    %1702 = vmatpush1.msra.mxu0 %v162
    %1703 = vmatprep.subr.mxu0 %v167
    %1704 = vmatpush1.msra.mxu0 %v166
    %1705 = vmatprep.subr.mxu0 %v171
    %1706 = vmatpush1.msra.mxu0 %v170
    %1707 = vmatprep.subr.mxu0 0.0
    %1708 = vmatpush1.msra.mxu0 0.0
    %1709 = vmatprep.subr.mxu0 0.0
    %1710 = vmatpush1.msra.mxu0 0.0
    %1711 = vmatprep.subr.mxu0 0.0
    %1712 = vmatpush1.msra.mxu0 0.0
    %1713 = vmatprep.subr.mxu0 0.0
    %1714 = vmatpush1.msra.mxu0 0.0
    %1715 = vmatprep.subr.mxu0 0.0
    %1716 = vmatpush1.msra.mxu0 0.0
    %1717 = vmatprep.subr.mxu0 0.0
    %1718 = vmatpush1.msra.mxu0 0.0
    %1719 = vmatprep.subr.mxu0 0.0
    %1720 = vmatpush1.msra.mxu0 0.0
    %1721 = vmatprep.subr.mxu0 0.0
    %1722 = vmatpush1.msra.mxu0 0.0
    %1723 = vmatprep.subr.mxu0 0.0
    %1724 = vmatpush1.msra.mxu0 0.0
    %1725 = vmatprep.subr.mxu0 0.0
    %1726 = vmatpush1.msra.mxu0 0.0
    %1727 = vmatprep.subr.mxu0 0.0
    %1728 = vmatpush1.msra.mxu0 0.0
    %1729 = vmatprep.subr.mxu0 0.0
    %1730 = vmatpush1.msra.mxu0 0.0
    %1731 = vmatprep.subr.mxu0 0.0
    %1732 = vmatpush1.msra.mxu0 0.0
    %1733 = vmatprep.subr.mxu0 0.0
    %1734 = vmatpush1.msra.mxu0 0.0
    %1735 = vmatprep.subr.mxu0 0.0
    %1736 = vmatpush1.msra.mxu0 0.0
    %1737 = vmatprep.subr.mxu0 0.0
    %1738 = vmatpush1.msra.mxu0 0.0
    %1739 = vmatprep.mubr.f32.mxu0 0.0
    %1740 = vmatmul.mubr.f32.gmra.mrb[0].mxu0 %v1289
    %v1741 = vpop.f32.mrb[0].mxu0
    %v1742 = vadd.f32 0.0, %v1741
    %v1743 = vpop.f32.mrb[0].mxu0
    %v1744 = vadd.f32 0.0, %v1743
    %1745 = vdwg.mxu0
    %v1747 = vsel %vm445, %v1603, 0
    %1749 = vmatprep.subr.mxu0 %v101
    %1750 = vmatpush1.msra.mxu0 %v100
    %1751 = vmatprep.subr.mxu0 %v105
    %1752 = vmatpush1.msra.mxu0 %v104
    %1753 = vmatprep.subr.mxu0 0.0
    %1754 = vmatpush1.msra.mxu0 0.0
    %1755 = vmatprep.subr.mxu0 0.0
    %1756 = vmatpush1.msra.mxu0 0.0
    %1757 = vmatprep.subr.mxu0 0.0
    %1758 = vmatpush1.msra.mxu0 0.0
    %1759 = vmatprep.subr.mxu0 0.0
    %1760 = vmatpush1.msra.mxu0 0.0
    %1761 = vmatprep.subr.mxu0 0.0
    %1762 = vmatpush1.msra.mxu0 0.0
    %1763 = vmatprep.subr.mxu0 0.0
    %1764 = vmatpush1.msra.mxu0 0.0
    %1765 = vmatprep.subr.mxu0 0.0
    %1766 = vmatpush1.msra.mxu0 0.0
    %1767 = vmatprep.subr.mxu0 0.0
    %1768 = vmatpush1.msra.mxu0 0.0
    %1769 = vmatprep.subr.mxu0 0.0
    %1770 = vmatpush1.msra.mxu0 0.0
    %1771 = vmatprep.subr.mxu0 0.0
    %1772 = vmatpush1.msra.mxu0 0.0
    %1773 = vmatprep.subr.mxu0 0.0
    %1774 = vmatpush1.msra.mxu0 0.0
    %1775 = vmatprep.subr.mxu0 0.0
    %1776 = vmatpush1.msra.mxu0 0.0
    %1777 = vmatprep.subr.mxu0 0.0
    %1778 = vmatpush1.msra.mxu0 0.0
    %1779 = vmatprep.subr.mxu0 0.0
    %1780 = vmatpush1.msra.mxu0 0.0
    %1781 = vmatprep.subr.mxu0 0.0
    %1782 = vmatpush1.msra.mxu0 0.0
    %1783 = vmatprep.subr.mxu0 0.0
    %1784 = vmatpush1.msra.mxu0 0.0
    %1785 = vmatprep.subr.mxu0 0.0
    %1786 = vmatpush1.msra.mxu0 0.0
    %1787 = vmatprep.subr.mxu0 0.0
    %1788 = vmatpush1.msra.mxu0 0.0
    %1789 = vmatprep.subr.mxu0 0.0
    %1790 = vmatpush1.msra.mxu0 0.0
    %1791 = vmatprep.subr.mxu0 0.0
    %1792 = vmatpush1.msra.mxu0 0.0
    %1793 = vmatprep.subr.mxu0 0.0
    %1794 = vmatpush1.msra.mxu0 0.0
    %1795 = vmatprep.subr.mxu0 0.0
    %1796 = vmatpush1.msra.mxu0 0.0
    %1797 = vmatprep.subr.mxu0 0.0
    %1798 = vmatpush1.msra.mxu0 0.0
    %1799 = vmatprep.subr.mxu0 0.0
    %1800 = vmatpush1.msra.mxu0 0.0
    %1801 = vmatprep.subr.mxu0 0.0
    %1802 = vmatpush1.msra.mxu0 0.0
    %1803 = vmatprep.subr.mxu0 0.0
    %1804 = vmatpush1.msra.mxu0 0.0
    %1805 = vmatprep.subr.mxu0 0.0
    %1806 = vmatpush1.msra.mxu0 0.0
    %1807 = vmatprep.subr.mxu0 0.0
    %1808 = vmatpush1.msra.mxu0 0.0
    %1809 = vmatprep.subr.mxu0 0.0
    %1810 = vmatpush1.msra.mxu0 0.0
    %1811 = vmatprep.subr.mxu0 0.0
    %1812 = vmatpush1.msra.mxu0 0.0
    %1813 = vmatprep.mubr.f32.mxu0 0.0
    %1814 = vmatmul.mubr.f32.gmra.mrb[0].mxu0 %v1747
    %v1815 = vpop.f32.mrb[0].mxu0
    %v1816 = vadd.f32 %v1671, %v1815
    %v1817 = vpop.f32.mrb[0].mxu0
    %v1818 = vadd.f32 %v1673, %v1817
    %1819 = vdwg.mxu0
    %1820 = vmatprep.subr.mxu0 %v103
    %1821 = vmatpush1.msra.mxu0 %v102
    %1822 = vmatprep.subr.mxu0 %v107
    %1823 = vmatpush1.msra.mxu0 %v106
    %1824 = vmatprep.subr.mxu0 0.0
    %1825 = vmatpush1.msra.mxu0 0.0
    %1826 = vmatprep.subr.mxu0 0.0
    %1827 = vmatpush1.msra.mxu0 0.0
    %1828 = vmatprep.subr.mxu0 0.0
    %1829 = vmatpush1.msra.mxu0 0.0
    %1830 = vmatprep.subr.mxu0 0.0
    %1831 = vmatpush1.msra.mxu0 0.0
    %1832 = vmatprep.subr.mxu0 0.0
    %1833 = vmatpush1.msra.mxu0 0.0
    %1834 = vmatprep.subr.mxu0 0.0
    %1835 = vmatpush1.msra.mxu0 0.0
    %1836 = vmatprep.subr.mxu0 0.0
    %1837 = vmatpush1.msra.mxu0 0.0
    %1838 = vmatprep.subr.mxu0 0.0
    %1839 = vmatpush1.msra.mxu0 0.0
    %1840 = vmatprep.subr.mxu0 0.0
    %1841 = vmatpush1.msra.mxu0 0.0
    %1842 = vmatprep.subr.mxu0 0.0
    %1843 = vmatpush1.msra.mxu0 0.0
    %1844 = vmatprep.subr.mxu0 0.0
    %1845 = vmatpush1.msra.mxu0 0.0
    %1846 = vmatprep.subr.mxu0 0.0
    %1847 = vmatpush1.msra.mxu0 0.0
    %1848 = vmatprep.subr.mxu0 0.0
    %1849 = vmatpush1.msra.mxu0 0.0
    %1850 = vmatprep.subr.mxu0 0.0
    %1851 = vmatpush1.msra.mxu0 0.0
    %1852 = vmatprep.subr.mxu0 0.0
    %1853 = vmatpush1.msra.mxu0 0.0
    %1854 = vmatprep.subr.mxu0 0.0
    %1855 = vmatpush1.msra.mxu0 0.0
    %1856 = vmatprep.subr.mxu0 0.0
    %1857 = vmatpush1.msra.mxu0 0.0
    %1858 = vmatprep.subr.mxu0 0.0
    %1859 = vmatpush1.msra.mxu0 0.0
    %1860 = vmatprep.subr.mxu0 0.0
    %1861 = vmatpush1.msra.mxu0 0.0
    %1862 = vmatprep.subr.mxu0 0.0
    %1863 = vmatpush1.msra.mxu0 0.0
    %1864 = vmatprep.subr.mxu0 0.0
    %1865 = vmatpush1.msra.mxu0 0.0
    %1866 = vmatprep.subr.mxu0 0.0
    %1867 = vmatpush1.msra.mxu0 0.0
    %1868 = vmatprep.subr.mxu0 0.0
    %1869 = vmatpush1.msra.mxu0 0.0
    %1870 = vmatprep.subr.mxu0 0.0
    %1871 = vmatpush1.msra.mxu0 0.0
    %1872 = vmatprep.subr.mxu0 0.0
    %1873 = vmatpush1.msra.mxu0 0.0
    %1874 = vmatprep.subr.mxu0 0.0
    %1875 = vmatpush1.msra.mxu0 0.0
    %1876 = vmatprep.subr.mxu0 0.0
    %1877 = vmatpush1.msra.mxu0 0.0
    %1878 = vmatprep.subr.mxu0 0.0
    %1879 = vmatpush1.msra.mxu0 0.0
    %1880 = vmatprep.subr.mxu0 0.0
    %1881 = vmatpush1.msra.mxu0 0.0
    %1882 = vmatprep.subr.mxu0 0.0
    %1883 = vmatpush1.msra.mxu0 0.0
    %1884 = vmatprep.mubr.f32.mxu0 0.0
    %1885 = vmatmul.mubr.f32.gmra.mrb[0].mxu0 %v1747
    %v1886 = vpop.f32.mrb[0].mxu0
    %v1887 = vadd.f32 %v1742, %v1886
    %v1888 = vpop.f32.mrb[0].mxu0
    %v1889 = vadd.f32 %v1744, %v1888
    %1890 = vdwg.mxu0
    %v1891 = vadd.f32 %v1816, %v595
    %v1892 = vadd.f32 %v1818, %v599
    %v1893 = vadd.f32 %v1887, %v603
    %v1894 = vadd.f32 %v1889, %v607
    %v1895 = vxor.u32 %v1891, 2147483648
    %v1896 = vmul.f32 %v1895, 1.442695
    %v1897 = vpow.pop %v1896
    %v1898 = vadd.f32 %v1897, 1.0
    %v1899 = vrcp.pop %v1898
    %v1900 = vmul.f32 1.0, %v1899
    %v1901 = vxor.u32 %v1892, 2147483648
    %v1902 = vmul.f32 %v1901, 1.442695
    %v1903 = vpow.pop %v1902
    %v1904 = vadd.f32 %v1903, 1.0
    %v1905 = vrcp.pop %v1904
    %v1906 = vmul.f32 1.0, %v1905
    %v1907 = vtanh.pop %v1893
    %v1908 = vxor.u32 %v1894, 2147483648
    %v1909 = vmul.f32 %v1908, 1.442695
    %v1910 = vpow.pop %v1909
    %v1911 = vadd.f32 %v1910, 1.0
    %v1912 = vrcp.pop %v1911
    %v1913 = vmul.f32 1.0, %v1912
    %v1914 = vmul.f32 %v1906, %v1287
    %v1915 = vmul.f32 %v1900, %v1907
    %v1916 = vadd.f32 %v1914, %v1915
    %v1917 = vtanh.pop %v1916
    %v1918 = vmul.f32 %v1913, %v1917
    %1919 = vmatprep.subr.mxu0 %v238
    %1920 = vmatpush1.msra.mxu0 %v237
    %1921 = vmatprep.subr.mxu0 %v242
    %1922 = vmatpush1.msra.mxu0 %v241
    %1923 = vmatprep.subr.mxu0 %v246
    %1924 = vmatpush1.msra.mxu0 %v245
    %1925 = vmatprep.subr.mxu0 %v250
    %1926 = vmatpush1.msra.mxu0 %v249
    %1927 = vmatprep.subr.mxu0 %v254
    %1928 = vmatpush1.msra.mxu0 %v253
    %1929 = vmatprep.subr.mxu0 %v258
    %1930 = vmatpush1.msra.mxu0 %v257
    %1931 = vmatprep.subr.mxu0 %v262
    %1932 = vmatpush1.msra.mxu0 %v261
    %1933 = vmatprep.subr.mxu0 %v266
    %1934 = vmatpush1.msra.mxu0 %v265
    %1935 = vmatprep.subr.mxu0 %v270
    %1936 = vmatpush1.msra.mxu0 %v269
    %1937 = vmatprep.subr.mxu0 %v274
    %1938 = vmatpush1.msra.mxu0 %v273
    %1939 = vmatprep.subr.mxu0 %v278
    %1940 = vmatpush1.msra.mxu0 %v277
    %1941 = vmatprep.subr.mxu0 %v282
    %1942 = vmatpush1.msra.mxu0 %v281
    %1943 = vmatprep.subr.mxu0 %v286
    %1944 = vmatpush1.msra.mxu0 %v285
    %1945 = vmatprep.subr.mxu0 %v290
    %1946 = vmatpush1.msra.mxu0 %v289
    %1947 = vmatprep.subr.mxu0 %v294
    %1948 = vmatpush1.msra.mxu0 %v293
    %1949 = vmatprep.subr.mxu0 %v298
    %1950 = vmatpush1.msra.mxu0 %v297
    %1951 = vmatprep.subr.mxu0 0.0
    %1952 = vmatpush1.msra.mxu0 0.0
    %1953 = vmatprep.subr.mxu0 0.0
    %1954 = vmatpush1.msra.mxu0 0.0
    %1955 = vmatprep.subr.mxu0 0.0
    %1956 = vmatpush1.msra.mxu0 0.0
    %1957 = vmatprep.subr.mxu0 0.0
    %1958 = vmatpush1.msra.mxu0 0.0
    %1959 = vmatprep.subr.mxu0 0.0
    %1960 = vmatpush1.msra.mxu0 0.0
    %1961 = vmatprep.subr.mxu0 0.0
    %1962 = vmatpush1.msra.mxu0 0.0
    %1963 = vmatprep.subr.mxu0 0.0
    %1964 = vmatpush1.msra.mxu0 0.0
    %1965 = vmatprep.subr.mxu0 0.0
    %1966 = vmatpush1.msra.mxu0 0.0
    %1967 = vmatprep.subr.mxu0 0.0
    %1968 = vmatpush1.msra.mxu0 0.0
    %1969 = vmatprep.subr.mxu0 0.0
    %1970 = vmatpush1.msra.mxu0 0.0
    %1971 = vmatprep.subr.mxu0 0.0
    %1972 = vmatpush1.msra.mxu0 0.0
    %1973 = vmatprep.subr.mxu0 0.0
    %1974 = vmatpush1.msra.mxu0 0.0
    %1975 = vmatprep.subr.mxu0 0.0
    %1976 = vmatpush1.msra.mxu0 0.0
    %1977 = vmatprep.subr.mxu0 0.0
    %1978 = vmatpush1.msra.mxu0 0.0
    %1979 = vmatprep.subr.mxu0 0.0
    %1980 = vmatpush1.msra.mxu0 0.0
    %1981 = vmatprep.subr.mxu0 0.0
    %1982 = vmatpush1.msra.mxu0 0.0
    %1983 = vmatprep.mubr.f32.mxu0 0.0
    %1984 = vmatmul.mubr.f32.gmra.mrb[0].mxu0 %v1601
    %v1985 = vpop.f32.mrb[0].mxu0
    %v1986 = vadd.f32 0.0, %v1985
    %v1987 = vpop.f32.mrb[0].mxu0
    %v1988 = vadd.f32 0.0, %v1987
    %1989 = vdwg.mxu0
    %1990 = vmatprep.subr.mxu0 %v240
    %1991 = vmatpush1.msra.mxu0 %v239
    %1992 = vmatprep.subr.mxu0 %v244
    %1993 = vmatpush1.msra.mxu0 %v243
    %1994 = vmatprep.subr.mxu0 %v248
    %1995 = vmatpush1.msra.mxu0 %v247
    %1996 = vmatprep.subr.mxu0 %v252
    %1997 = vmatpush1.msra.mxu0 %v251
    %1998 = vmatprep.subr.mxu0 %v256
    %1999 = vmatpush1.msra.mxu0 %v255
    %2000 = vmatprep.subr.mxu0 %v260
    %2001 = vmatpush1.msra.mxu0 %v259
    %2002 = vmatprep.subr.mxu0 %v264
    %2003 = vmatpush1.msra.mxu0 %v263
    %2004 = vmatprep.subr.mxu0 %v268
    %2005 = vmatpush1.msra.mxu0 %v267
    %2006 = vmatprep.subr.mxu0 %v272
    %2007 = vmatpush1.msra.mxu0 %v271
    %2008 = vmatprep.subr.mxu0 %v276
    %2009 = vmatpush1.msra.mxu0 %v275
    %2010 = vmatprep.subr.mxu0 %v280
    %2011 = vmatpush1.msra.mxu0 %v279
    %2012 = vmatprep.subr.mxu0 %v284
    %2013 = vmatpush1.msra.mxu0 %v283
    %2014 = vmatprep.subr.mxu0 %v288
    %2015 = vmatpush1.msra.mxu0 %v287
    %2016 = vmatprep.subr.mxu0 %v292
    %2017 = vmatpush1.msra.mxu0 %v291
    %2018 = vmatprep.subr.mxu0 %v296
    %2019 = vmatpush1.msra.mxu0 %v295
    %2020 = vmatprep.subr.mxu0 %v300
    %2021 = vmatpush1.msra.mxu0 %v299
    %2022 = vmatprep.subr.mxu0 0.0
    %2023 = vmatpush1.msra.mxu0 0.0
    %2024 = vmatprep.subr.mxu0 0.0
    %2025 = vmatpush1.msra.mxu0 0.0
    %2026 = vmatprep.subr.mxu0 0.0
    %2027 = vmatpush1.msra.mxu0 0.0
    %2028 = vmatprep.subr.mxu0 0.0
    %2029 = vmatpush1.msra.mxu0 0.0
    %2030 = vmatprep.subr.mxu0 0.0
    %2031 = vmatpush1.msra.mxu0 0.0
    %2032 = vmatprep.subr.mxu0 0.0
    %2033 = vmatpush1.msra.mxu0 0.0
    %2034 = vmatprep.subr.mxu0 0.0
    %2035 = vmatpush1.msra.mxu0 0.0
    %2036 = vmatprep.subr.mxu0 0.0
    %2037 = vmatpush1.msra.mxu0 0.0
    %2038 = vmatprep.subr.mxu0 0.0
    %2039 = vmatpush1.msra.mxu0 0.0
    %2040 = vmatprep.subr.mxu0 0.0
    %2041 = vmatpush1.msra.mxu0 0.0
    %2042 = vmatprep.subr.mxu0 0.0
    %2043 = vmatpush1.msra.mxu0 0.0
    %2044 = vmatprep.subr.mxu0 0.0
    %2045 = vmatpush1.msra.mxu0 0.0
    %2046 = vmatprep.subr.mxu0 0.0
    %2047 = vmatpush1.msra.mxu0 0.0
    %2048 = vmatprep.subr.mxu0 0.0
    %2049 = vmatpush1.msra.mxu0 0.0
    %2050 = vmatprep.subr.mxu0 0.0
    %2051 = vmatpush1.msra.mxu0 0.0
    %2052 = vmatprep.subr.mxu0 0.0
    %2053 = vmatpush1.msra.mxu0 0.0
    %2054 = vmatprep.mubr.f32.mxu0 0.0
    %2055 = vmatmul.mubr.f32.gmra.mrb[0].mxu0 %v1601
    %v2056 = vpop.f32.mrb[0].mxu0
    %v2057 = vadd.f32 0.0, %v2056
    %v2058 = vpop.f32.mrb[0].mxu0
    %v2059 = vadd.f32 0.0, %v2058
    %2060 = vdwg.mxu0
    %2061 = vmatprep.subr.mxu0 %v174
    %2062 = vmatpush1.msra.mxu0 %v173
    %2063 = vmatprep.subr.mxu0 %v178
    %2064 = vmatpush1.msra.mxu0 %v177
    %2065 = vmatprep.subr.mxu0 %v182
    %2066 = vmatpush1.msra.mxu0 %v181
    %2067 = vmatprep.subr.mxu0 %v186
    %2068 = vmatpush1.msra.mxu0 %v185
    %2069 = vmatprep.subr.mxu0 %v190
    %2070 = vmatpush1.msra.mxu0 %v189
    %2071 = vmatprep.subr.mxu0 %v194
    %2072 = vmatpush1.msra.mxu0 %v193
    %2073 = vmatprep.subr.mxu0 %v198
    %2074 = vmatpush1.msra.mxu0 %v197
    %2075 = vmatprep.subr.mxu0 %v202
    %2076 = vmatpush1.msra.mxu0 %v201
    %2077 = vmatprep.subr.mxu0 %v206
    %2078 = vmatpush1.msra.mxu0 %v205
    %2079 = vmatprep.subr.mxu0 %v210
    %2080 = vmatpush1.msra.mxu0 %v209
    %2081 = vmatprep.subr.mxu0 %v214
    %2082 = vmatpush1.msra.mxu0 %v213
    %2083 = vmatprep.subr.mxu0 %v218
    %2084 = vmatpush1.msra.mxu0 %v217
    %2085 = vmatprep.subr.mxu0 %v222
    %2086 = vmatpush1.msra.mxu0 %v221
    %2087 = vmatprep.subr.mxu0 %v226
    %2088 = vmatpush1.msra.mxu0 %v225
    %2089 = vmatprep.subr.mxu0 %v230
    %2090 = vmatpush1.msra.mxu0 %v229
    %2091 = vmatprep.subr.mxu0 %v234
    %2092 = vmatpush1.msra.mxu0 %v233
    %2093 = vmatprep.subr.mxu0 0.0
    %2094 = vmatpush1.msra.mxu0 0.0
    %2095 = vmatprep.subr.mxu0 0.0
    %2096 = vmatpush1.msra.mxu0 0.0
    %2097 = vmatprep.subr.mxu0 0.0
    %2098 = vmatpush1.msra.mxu0 0.0
    %2099 = vmatprep.subr.mxu0 0.0
    %2100 = vmatpush1.msra.mxu0 0.0
    %2101 = vmatprep.subr.mxu0 0.0
    %2102 = vmatpush1.msra.mxu0 0.0
    %2103 = vmatprep.subr.mxu0 0.0
    %2104 = vmatpush1.msra.mxu0 0.0
    %2105 = vmatprep.subr.mxu0 0.0
    %2106 = vmatpush1.msra.mxu0 0.0
    %2107 = vmatprep.subr.mxu0 0.0
    %2108 = vmatpush1.msra.mxu0 0.0
    %2109 = vmatprep.subr.mxu0 0.0
    %2110 = vmatpush1.msra.mxu0 0.0
    %2111 = vmatprep.subr.mxu0 0.0
    %2112 = vmatpush1.msra.mxu0 0.0
    %2113 = vmatprep.subr.mxu0 0.0
    %2114 = vmatpush1.msra.mxu0 0.0
    %2115 = vmatprep.subr.mxu0 0.0
    %2116 = vmatpush1.msra.mxu0 0.0
    %2117 = vmatprep.subr.mxu0 0.0
    %2118 = vmatpush1.msra.mxu0 0.0
    %2119 = vmatprep.subr.mxu0 0.0
    %2120 = vmatpush1.msra.mxu0 0.0
    %2121 = vmatprep.subr.mxu0 0.0
    %2122 = vmatpush1.msra.mxu0 0.0
    %2123 = vmatprep.subr.mxu0 0.0
    %2124 = vmatpush1.msra.mxu0 0.0
    %2125 = vmatprep.mubr.f32.mxu0 0.0
    %2126 = vmatmul.mubr.f32.gmra.mrb[0].mxu0 %v1918
    %v2127 = vpop.f32.mrb[0].mxu0
    %v2128 = vadd.f32 %v1986, %v2127
    %v2129 = vpop.f32.mrb[0].mxu0
    %v2130 = vadd.f32 %v1988, %v2129
    %2131 = vdwg.mxu0
    %2132 = vmatprep.subr.mxu0 %v176
    %2133 = vmatpush1.msra.mxu0 %v175
    %2134 = vmatprep.subr.mxu0 %v180
    %2135 = vmatpush1.msra.mxu0 %v179
    %2136 = vmatprep.subr.mxu0 %v184
    %2137 = vmatpush1.msra.mxu0 %v183
    %2138 = vmatprep.subr.mxu0 %v188
    %2139 = vmatpush1.msra.mxu0 %v187
    %2140 = vmatprep.subr.mxu0 %v192
    %2141 = vmatpush1.msra.mxu0 %v191
    %2142 = vmatprep.subr.mxu0 %v196
    %2143 = vmatpush1.msra.mxu0 %v195
    %2144 = vmatprep.subr.mxu0 %v200
    %2145 = vmatpush1.msra.mxu0 %v199
    %2146 = vmatprep.subr.mxu0 %v204
    %2147 = vmatpush1.msra.mxu0 %v203
    %2148 = vmatprep.subr.mxu0 %v208
    %2149 = vmatpush1.msra.mxu0 %v207
    %2150 = vmatprep.subr.mxu0 %v212
    %2151 = vmatpush1.msra.mxu0 %v211
    %2152 = vmatprep.subr.mxu0 %v216
    %2153 = vmatpush1.msra.mxu0 %v215
    %2154 = vmatprep.subr.mxu0 %v220
    %2155 = vmatpush1.msra.mxu0 %v219
    %2156 = vmatprep.subr.mxu0 %v224
    %2157 = vmatpush1.msra.mxu0 %v223
    %2158 = vmatprep.subr.mxu0 %v228
    %2159 = vmatpush1.msra.mxu0 %v227
    %2160 = vmatprep.subr.mxu0 %v232
    %2161 = vmatpush1.msra.mxu0 %v231
    %2162 = vmatprep.subr.mxu0 %v236
    %2163 = vmatpush1.msra.mxu0 %v235
    %2164 = vmatprep.subr.mxu0 0.0
    %2165 = vmatpush1.msra.mxu0 0.0
    %2166 = vmatprep.subr.mxu0 0.0
    %2167 = vmatpush1.msra.mxu0 0.0
    %2168 = vmatprep.subr.mxu0 0.0
    %2169 = vmatpush1.msra.mxu0 0.0
    %2170 = vmatprep.subr.mxu0 0.0
    %2171 = vmatpush1.msra.mxu0 0.0
    %2172 = vmatprep.subr.mxu0 0.0
    %2173 = vmatpush1.msra.mxu0 0.0
    %2174 = vmatprep.subr.mxu0 0.0
    %2175 = vmatpush1.msra.mxu0 0.0
    %2176 = vmatprep.subr.mxu0 0.0
    %2177 = vmatpush1.msra.mxu0 0.0
    %2178 = vmatprep.subr.mxu0 0.0
    %2179 = vmatpush1.msra.mxu0 0.0
    %2180 = vmatprep.subr.mxu0 0.0
    %2181 = vmatpush1.msra.mxu0 0.0
    %2182 = vmatprep.subr.mxu0 0.0
    %2183 = vmatpush1.msra.mxu0 0.0
    %2184 = vmatprep.subr.mxu0 0.0
    %2185 = vmatpush1.msra.mxu0 0.0
    %2186 = vmatprep.subr.mxu0 0.0
    %2187 = vmatpush1.msra.mxu0 0.0
    %2188 = vmatprep.subr.mxu0 0.0
    %2189 = vmatpush1.msra.mxu0 0.0
    %2190 = vmatprep.subr.mxu0 0.0
    %2191 = vmatpush1.msra.mxu0 0.0
    %2192 = vmatprep.subr.mxu0 0.0
    %2193 = vmatpush1.msra.mxu0 0.0
    %2194 = vmatprep.subr.mxu0 0.0
    %2195 = vmatpush1.msra.mxu0 0.0
    %2196 = vmatprep.mubr.f32.mxu0 0.0
    %2197 = vmatmul.mubr.f32.gmra.mrb[0].mxu0 %v1918
    %v2198 = vpop.f32.mrb[0].mxu0
    %v2199 = vadd.f32 %v2057, %v2198
    %v2200 = vpop.f32.mrb[0].mxu0
    %v2201 = vadd.f32 %v2059, %v2200
    %2202 = vdwg.mxu0
    %v2203 = vadd.f32 %v2128, %v928
    %v2204 = vadd.f32 %v2130, %v932
    %v2205 = vadd.f32 %v2199, %v936
    %v2206 = vadd.f32 %v2201, %v940
    %v2207 = vxor.u32 %v2203, 2147483648
    %v2208 = vmul.f32 %v2207, 1.442695
    %v2209 = vpow.pop %v2208
    %v2210 = vadd.f32 %v2209, 1.0
    %v2211 = vrcp.pop %v2210
    %v2212 = vmul.f32 1.0, %v2211
    %v2213 = vxor.u32 %v2204, 2147483648
    %v2214 = vmul.f32 %v2213, 1.442695
    %v2215 = vpow.pop %v2214
    %v2216 = vadd.f32 %v2215, 1.0
    %v2217 = vrcp.pop %v2216
    %v2218 = vmul.f32 1.0, %v2217
    %v2219 = vtanh.pop %v2205
    %v2220 = vxor.u32 %v2206, 2147483648
    %v2221 = vmul.f32 %v2220, 1.442695
    %v2222 = vpow.pop %v2221
    %v2223 = vadd.f32 %v2222, 1.0
    %v2224 = vrcp.pop %v2223
    %v2225 = vmul.f32 1.0, %v2224
    %v2226 = vmul.f32 %v2218, %v1599
    %v2227 = vmul.f32 %v2212, %v2219
    %v2228 = vadd.f32 %v2226, %v2227
    %v2229 = vtanh.pop %v2228
    %v2230 = vmul.f32 %v2225, %v2229
    %s2231 = scalar_lea.vmem %s0, 6
    %v2232 = vld [vmem:[%s2231] sm:$0x3]
    %2233 = vmatprep.subr.mxu0 %v109
    %2234 = vmatpush1.msra.mxu0 %v108
    %2235 = vmatprep.subr.mxu0 %v113
    %2236 = vmatpush1.msra.mxu0 %v112
    %2237 = vmatprep.subr.mxu0 %v117
    %2238 = vmatpush1.msra.mxu0 %v116
    %2239 = vmatprep.subr.mxu0 %v121
    %2240 = vmatpush1.msra.mxu0 %v120
    %2241 = vmatprep.subr.mxu0 %v125
    %2242 = vmatpush1.msra.mxu0 %v124
    %2243 = vmatprep.subr.mxu0 %v129
    %2244 = vmatpush1.msra.mxu0 %v128
    %2245 = vmatprep.subr.mxu0 %v133
    %2246 = vmatpush1.msra.mxu0 %v132
    %2247 = vmatprep.subr.mxu0 %v137
    %2248 = vmatpush1.msra.mxu0 %v136
    %2249 = vmatprep.subr.mxu0 %v141
    %2250 = vmatpush1.msra.mxu0 %v140
    %2251 = vmatprep.subr.mxu0 %v145
    %2252 = vmatpush1.msra.mxu0 %v144
    %2253 = vmatprep.subr.mxu0 %v149
    %2254 = vmatpush1.msra.mxu0 %v148
    %2255 = vmatprep.subr.mxu0 %v153
    %2256 = vmatpush1.msra.mxu0 %v152
    %2257 = vmatprep.subr.mxu0 %v157
    %2258 = vmatpush1.msra.mxu0 %v156
    %2259 = vmatprep.subr.mxu0 %v161
    %2260 = vmatpush1.msra.mxu0 %v160
    %2261 = vmatprep.subr.mxu0 %v165
    %2262 = vmatpush1.msra.mxu0 %v164
    %2263 = vmatprep.subr.mxu0 %v169
    %2264 = vmatpush1.msra.mxu0 %v168
    %2265 = vmatprep.subr.mxu0 0.0
    %2266 = vmatpush1.msra.mxu0 0.0
    %2267 = vmatprep.subr.mxu0 0.0
    %2268 = vmatpush1.msra.mxu0 0.0
    %2269 = vmatprep.subr.mxu0 0.0
    %2270 = vmatpush1.msra.mxu0 0.0
    %2271 = vmatprep.subr.mxu0 0.0
    %2272 = vmatpush1.msra.mxu0 0.0
    %2273 = vmatprep.subr.mxu0 0.0
    %2274 = vmatpush1.msra.mxu0 0.0
    %2275 = vmatprep.subr.mxu0 0.0
    %2276 = vmatpush1.msra.mxu0 0.0
    %2277 = vmatprep.subr.mxu0 0.0
    %2278 = vmatpush1.msra.mxu0 0.0
    %2279 = vmatprep.subr.mxu0 0.0
    %2280 = vmatpush1.msra.mxu0 0.0
    %2281 = vmatprep.subr.mxu0 0.0
    %2282 = vmatpush1.msra.mxu0 0.0
    %2283 = vmatprep.subr.mxu0 0.0
    %2284 = vmatpush1.msra.mxu0 0.0
    %2285 = vmatprep.subr.mxu0 0.0
    %2286 = vmatpush1.msra.mxu0 0.0
    %2287 = vmatprep.subr.mxu0 0.0
    %2288 = vmatpush1.msra.mxu0 0.0
    %2289 = vmatprep.subr.mxu0 0.0
    %2290 = vmatpush1.msra.mxu0 0.0
    %2291 = vmatprep.subr.mxu0 0.0
    %2292 = vmatpush1.msra.mxu0 0.0
    %2293 = vmatprep.subr.mxu0 0.0
    %2294 = vmatpush1.msra.mxu0 0.0
    %2295 = vmatprep.subr.mxu0 0.0
    %2296 = vmatpush1.msra.mxu0 0.0
    %2297 = vmatprep.mubr.f32.mxu0 0.0
    %2298 = vmatmul.mubr.f32.gmra.mrb[0].mxu0 %v1918
    %v2299 = vpop.f32.mrb[0].mxu0
    %v2300 = vadd.f32 0.0, %v2299
    %v2301 = vpop.f32.mrb[0].mxu0
    %v2302 = vadd.f32 0.0, %v2301
    %2303 = vdwg.mxu0
    %2304 = vmatprep.subr.mxu0 %v111
    %2305 = vmatpush1.msra.mxu0 %v110
    %2306 = vmatprep.subr.mxu0 %v115
    %2307 = vmatpush1.msra.mxu0 %v114
    %2308 = vmatprep.subr.mxu0 %v119
    %2309 = vmatpush1.msra.mxu0 %v118
    %2310 = vmatprep.subr.mxu0 %v123
    %2311 = vmatpush1.msra.mxu0 %v122
    %2312 = vmatprep.subr.mxu0 %v127
    %2313 = vmatpush1.msra.mxu0 %v126
    %2314 = vmatprep.subr.mxu0 %v131
    %2315 = vmatpush1.msra.mxu0 %v130
    %2316 = vmatprep.subr.mxu0 %v135
    %2317 = vmatpush1.msra.mxu0 %v134
    %2318 = vmatprep.subr.mxu0 %v139
    %2319 = vmatpush1.msra.mxu0 %v138
    %2320 = vmatprep.subr.mxu0 %v143
    %2321 = vmatpush1.msra.mxu0 %v142
    %2322 = vmatprep.subr.mxu0 %v147
    %2323 = vmatpush1.msra.mxu0 %v146
    %2324 = vmatprep.subr.mxu0 %v151
    %2325 = vmatpush1.msra.mxu0 %v150
    %2326 = vmatprep.subr.mxu0 %v155
    %2327 = vmatpush1.msra.mxu0 %v154
    %2328 = vmatprep.subr.mxu0 %v159
    %2329 = vmatpush1.msra.mxu0 %v158
    %2330 = vmatprep.subr.mxu0 %v163
    %2331 = vmatpush1.msra.mxu0 %v162
    %2332 = vmatprep.subr.mxu0 %v167
    %2333 = vmatpush1.msra.mxu0 %v166
    %2334 = vmatprep.subr.mxu0 %v171
    %2335 = vmatpush1.msra.mxu0 %v170
    %2336 = vmatprep.subr.mxu0 0.0
    %2337 = vmatpush1.msra.mxu0 0.0
    %2338 = vmatprep.subr.mxu0 0.0
    %2339 = vmatpush1.msra.mxu0 0.0
    %2340 = vmatprep.subr.mxu0 0.0
    %2341 = vmatpush1.msra.mxu0 0.0
    %2342 = vmatprep.subr.mxu0 0.0
    %2343 = vmatpush1.msra.mxu0 0.0
    %2344 = vmatprep.subr.mxu0 0.0
    %2345 = vmatpush1.msra.mxu0 0.0
    %2346 = vmatprep.subr.mxu0 0.0
    %2347 = vmatpush1.msra.mxu0 0.0
    %2348 = vmatprep.subr.mxu0 0.0
    %2349 = vmatpush1.msra.mxu0 0.0
    %2350 = vmatprep.subr.mxu0 0.0
    %2351 = vmatpush1.msra.mxu0 0.0
    %2352 = vmatprep.subr.mxu0 0.0
    %2353 = vmatpush1.msra.mxu0 0.0
    %2354 = vmatprep.subr.mxu0 0.0
    %2355 = vmatpush1.msra.mxu0 0.0
    %2356 = vmatprep.subr.mxu0 0.0
    %2357 = vmatpush1.msra.mxu0 0.0
    %2358 = vmatprep.subr.mxu0 0.0
    %2359 = vmatpush1.msra.mxu0 0.0
    %2360 = vmatprep.subr.mxu0 0.0
    %2361 = vmatpush1.msra.mxu0 0.0
    %2362 = vmatprep.subr.mxu0 0.0
    %2363 = vmatpush1.msra.mxu0 0.0
    %2364 = vmatprep.subr.mxu0 0.0
    %2365 = vmatpush1.msra.mxu0 0.0
    %2366 = vmatprep.subr.mxu0 0.0
    %2367 = vmatpush1.msra.mxu0 0.0
    %2368 = vmatprep.mubr.f32.mxu0 0.0
    %2369 = vmatmul.mubr.f32.gmra.mrb[0].mxu0 %v1918
    %v2370 = vpop.f32.mrb[0].mxu0
    %v2371 = vadd.f32 0.0, %v2370
    %v2372 = vpop.f32.mrb[0].mxu0
    %v2373 = vadd.f32 0.0, %v2372
    %2374 = vdwg.mxu0
    %v2376 = vsel %vm445, %v2232, 0
    %2378 = vmatprep.subr.mxu0 %v101
    %2379 = vmatpush1.msra.mxu0 %v100
    %2380 = vmatprep.subr.mxu0 %v105
    %2381 = vmatpush1.msra.mxu0 %v104
    %2382 = vmatprep.subr.mxu0 0.0
    %2383 = vmatpush1.msra.mxu0 0.0
    %2384 = vmatprep.subr.mxu0 0.0
    %2385 = vmatpush1.msra.mxu0 0.0
    %2386 = vmatprep.subr.mxu0 0.0
    %2387 = vmatpush1.msra.mxu0 0.0
    %2388 = vmatprep.subr.mxu0 0.0
    %2389 = vmatpush1.msra.mxu0 0.0
    %2390 = vmatprep.subr.mxu0 0.0
    %2391 = vmatpush1.msra.mxu0 0.0
    %2392 = vmatprep.subr.mxu0 0.0
    %2393 = vmatpush1.msra.mxu0 0.0
    %2394 = vmatprep.subr.mxu0 0.0
    %2395 = vmatpush1.msra.mxu0 0.0
    %2396 = vmatprep.subr.mxu0 0.0
    %2397 = vmatpush1.msra.mxu0 0.0
    %2398 = vmatprep.subr.mxu0 0.0
    %2399 = vmatpush1.msra.mxu0 0.0
    %2400 = vmatprep.subr.mxu0 0.0
    %2401 = vmatpush1.msra.mxu0 0.0
    %2402 = vmatprep.subr.mxu0 0.0
    %2403 = vmatpush1.msra.mxu0 0.0
    %2404 = vmatprep.subr.mxu0 0.0
    %2405 = vmatpush1.msra.mxu0 0.0
    %2406 = vmatprep.subr.mxu0 0.0
    %2407 = vmatpush1.msra.mxu0 0.0
    %2408 = vmatprep.subr.mxu0 0.0
    %2409 = vmatpush1.msra.mxu0 0.0
    %2410 = vmatprep.subr.mxu0 0.0
    %2411 = vmatpush1.msra.mxu0 0.0
    %2412 = vmatprep.subr.mxu0 0.0
    %2413 = vmatpush1.msra.mxu0 0.0
    %2414 = vmatprep.subr.mxu0 0.0
    %2415 = vmatpush1.msra.mxu0 0.0
    %2416 = vmatprep.subr.mxu0 0.0
    %2417 = vmatpush1.msra.mxu0 0.0
    %2418 = vmatprep.subr.mxu0 0.0
    %2419 = vmatpush1.msra.mxu0 0.0
    %2420 = vmatprep.subr.mxu0 0.0
    %2421 = vmatpush1.msra.mxu0 0.0
    %2422 = vmatprep.subr.mxu0 0.0
    %2423 = vmatpush1.msra.mxu0 0.0
    %2424 = vmatprep.subr.mxu0 0.0
    %2425 = vmatpush1.msra.mxu0 0.0
    %2426 = vmatprep.subr.mxu0 0.0
    %2427 = vmatpush1.msra.mxu0 0.0
    %2428 = vmatprep.subr.mxu0 0.0
    %2429 = vmatpush1.msra.mxu0 0.0
    %2430 = vmatprep.subr.mxu0 0.0
    %2431 = vmatpush1.msra.mxu0 0.0
    %2432 = vmatprep.subr.mxu0 0.0
    %2433 = vmatpush1.msra.mxu0 0.0
    %2434 = vmatprep.subr.mxu0 0.0
    %2435 = vmatpush1.msra.mxu0 0.0
    %2436 = vmatprep.subr.mxu0 0.0
    %2437 = vmatpush1.msra.mxu0 0.0
    %2438 = vmatprep.subr.mxu0 0.0
    %2439 = vmatpush1.msra.mxu0 0.0
    %2440 = vmatprep.subr.mxu0 0.0
    %2441 = vmatpush1.msra.mxu0 0.0
    %2442 = vmatprep.mubr.f32.mxu0 0.0
    %2443 = vmatmul.mubr.f32.gmra.mrb[0].mxu0 %v2376
    %v2444 = vpop.f32.mrb[0].mxu0
    %v2445 = vadd.f32 %v2300, %v2444
    %v2446 = vpop.f32.mrb[0].mxu0
    %v2447 = vadd.f32 %v2302, %v2446
    %2448 = vdwg.mxu0
    %2449 = vmatprep.subr.mxu0 %v103
    %2450 = vmatpush1.msra.mxu0 %v102
    %2451 = vmatprep.subr.mxu0 %v107
    %2452 = vmatpush1.msra.mxu0 %v106
    %2453 = vmatprep.subr.mxu0 0.0
    %2454 = vmatpush1.msra.mxu0 0.0
    %2455 = vmatprep.subr.mxu0 0.0
    %2456 = vmatpush1.msra.mxu0 0.0
    %2457 = vmatprep.subr.mxu0 0.0
    %2458 = vmatpush1.msra.mxu0 0.0
    %2459 = vmatprep.subr.mxu0 0.0
    %2460 = vmatpush1.msra.mxu0 0.0
    %2461 = vmatprep.subr.mxu0 0.0
    %2462 = vmatpush1.msra.mxu0 0.0
    %2463 = vmatprep.subr.mxu0 0.0
    %2464 = vmatpush1.msra.mxu0 0.0
    %2465 = vmatprep.subr.mxu0 0.0
    %2466 = vmatpush1.msra.mxu0 0.0
    %2467 = vmatprep.subr.mxu0 0.0
    %2468 = vmatpush1.msra.mxu0 0.0
    %2469 = vmatprep.subr.mxu0 0.0
    %2470 = vmatpush1.msra.mxu0 0.0
    %2471 = vmatprep.subr.mxu0 0.0
    %2472 = vmatpush1.msra.mxu0 0.0
    %2473 = vmatprep.subr.mxu0 0.0
    %2474 = vmatpush1.msra.mxu0 0.0
    %2475 = vmatprep.subr.mxu0 0.0
    %2476 = vmatpush1.msra.mxu0 0.0
    %2477 = vmatprep.subr.mxu0 0.0
    %2478 = vmatpush1.msra.mxu0 0.0
    %2479 = vmatprep.subr.mxu0 0.0
    %2480 = vmatpush1.msra.mxu0 0.0
    %2481 = vmatprep.subr.mxu0 0.0
    %2482 = vmatpush1.msra.mxu0 0.0
    %2483 = vmatprep.subr.mxu0 0.0
    %2484 = vmatpush1.msra.mxu0 0.0
    %2485 = vmatprep.subr.mxu0 0.0
    %2486 = vmatpush1.msra.mxu0 0.0
    %2487 = vmatprep.subr.mxu0 0.0
    %2488 = vmatpush1.msra.mxu0 0.0
    %2489 = vmatprep.subr.mxu0 0.0
    %2490 = vmatpush1.msra.mxu0 0.0
    %2491 = vmatprep.subr.mxu0 0.0
    %2492 = vmatpush1.msra.mxu0 0.0
    %2493 = vmatprep.subr.mxu0 0.0
    %2494 = vmatpush1.msra.mxu0 0.0
    %2495 = vmatprep.subr.mxu0 0.0
    %2496 = vmatpush1.msra.mxu0 0.0
    %2497 = vmatprep.subr.mxu0 0.0
    %2498 = vmatpush1.msra.mxu0 0.0
    %2499 = vmatprep.subr.mxu0 0.0
    %2500 = vmatpush1.msra.mxu0 0.0
    %2501 = vmatprep.subr.mxu0 0.0
    %2502 = vmatpush1.msra.mxu0 0.0
    %2503 = vmatprep.subr.mxu0 0.0
    %2504 = vmatpush1.msra.mxu0 0.0
    %2505 = vmatprep.subr.mxu0 0.0
    %2506 = vmatpush1.msra.mxu0 0.0
    %2507 = vmatprep.subr.mxu0 0.0
    %2508 = vmatpush1.msra.mxu0 0.0
    %2509 = vmatprep.subr.mxu0 0.0
    %2510 = vmatpush1.msra.mxu0 0.0
    %2511 = vmatprep.subr.mxu0 0.0
    %2512 = vmatpush1.msra.mxu0 0.0
    %2513 = vmatprep.mubr.f32.mxu0 0.0
    %2514 = vmatmul.mubr.f32.gmra.mrb[0].mxu0 %v2376
    %v2515 = vpop.f32.mrb[0].mxu0
    %v2516 = vadd.f32 %v2371, %v2515
    %v2517 = vpop.f32.mrb[0].mxu0
    %v2518 = vadd.f32 %v2373, %v2517
    %2519 = vdwg.mxu0
    %v2520 = vadd.f32 %v2445, %v595
    %v2521 = vadd.f32 %v2447, %v599
    %v2522 = vadd.f32 %v2516, %v603
    %v2523 = vadd.f32 %v2518, %v607
    %v2524 = vxor.u32 %v2520, 2147483648
    %v2525 = vmul.f32 %v2524, 1.442695
    %v2526 = vpow.pop %v2525
    %v2527 = vadd.f32 %v2526, 1.0
    %v2528 = vrcp.pop %v2527
    %v2529 = vmul.f32 1.0, %v2528
    %v2530 = vxor.u32 %v2521, 2147483648
    %v2531 = vmul.f32 %v2530, 1.442695
    %v2532 = vpow.pop %v2531
    %v2533 = vadd.f32 %v2532, 1.0
    %v2534 = vrcp.pop %v2533
    %v2535 = vmul.f32 1.0, %v2534
    %v2536 = vtanh.pop %v2522
    %v2537 = vxor.u32 %v2523, 2147483648
    %v2538 = vmul.f32 %v2537, 1.442695
    %v2539 = vpow.pop %v2538
    %v2540 = vadd.f32 %v2539, 1.0
    %v2541 = vrcp.pop %v2540
    %v2542 = vmul.f32 1.0, %v2541
    %v2543 = vmul.f32 %v2535, %v1916
    %v2544 = vmul.f32 %v2529, %v2536
    %v2545 = vadd.f32 %v2543, %v2544
    %v2546 = vtanh.pop %v2545
    %v2547 = vmul.f32 %v2542, %v2546
    %2548 = vmatprep.subr.mxu0 %v238
    %2549 = vmatpush1.msra.mxu0 %v237
    %2550 = vmatprep.subr.mxu0 %v242
    %2551 = vmatpush1.msra.mxu0 %v241
    %2552 = vmatprep.subr.mxu0 %v246
    %2553 = vmatpush1.msra.mxu0 %v245
    %2554 = vmatprep.subr.mxu0 %v250
    %2555 = vmatpush1.msra.mxu0 %v249
    %2556 = vmatprep.subr.mxu0 %v254
    %2557 = vmatpush1.msra.mxu0 %v253
    %2558 = vmatprep.subr.mxu0 %v258
    %2559 = vmatpush1.msra.mxu0 %v257
    %2560 = vmatprep.subr.mxu0 %v262
    %2561 = vmatpush1.msra.mxu0 %v261
    %2562 = vmatprep.subr.mxu0 %v266
    %2563 = vmatpush1.msra.mxu0 %v265
    %2564 = vmatprep.subr.mxu0 %v270
    %2565 = vmatpush1.msra.mxu0 %v269
    %2566 = vmatprep.subr.mxu0 %v274
    %2567 = vmatpush1.msra.mxu0 %v273
    %2568 = vmatprep.subr.mxu0 %v278
    %2569 = vmatpush1.msra.mxu0 %v277
    %2570 = vmatprep.subr.mxu0 %v282
    %2571 = vmatpush1.msra.mxu0 %v281
    %2572 = vmatprep.subr.mxu0 %v286
    %2573 = vmatpush1.msra.mxu0 %v285
    %2574 = vmatprep.subr.mxu0 %v290
    %2575 = vmatpush1.msra.mxu0 %v289
    %2576 = vmatprep.subr.mxu0 %v294
    %2577 = vmatpush1.msra.mxu0 %v293
    %2578 = vmatprep.subr.mxu0 %v298
    %2579 = vmatpush1.msra.mxu0 %v297
    %2580 = vmatprep.subr.mxu0 0.0
    %2581 = vmatpush1.msra.mxu0 0.0
    %2582 = vmatprep.subr.mxu0 0.0
    %2583 = vmatpush1.msra.mxu0 0.0
    %2584 = vmatprep.subr.mxu0 0.0
    %2585 = vmatpush1.msra.mxu0 0.0
    %2586 = vmatprep.subr.mxu0 0.0
    %2587 = vmatpush1.msra.mxu0 0.0
    %2588 = vmatprep.subr.mxu0 0.0
    %2589 = vmatpush1.msra.mxu0 0.0
    %2590 = vmatprep.subr.mxu0 0.0
    %2591 = vmatpush1.msra.mxu0 0.0
    %2592 = vmatprep.subr.mxu0 0.0
    %2593 = vmatpush1.msra.mxu0 0.0
    %2594 = vmatprep.subr.mxu0 0.0
    %2595 = vmatpush1.msra.mxu0 0.0
    %2596 = vmatprep.subr.mxu0 0.0
    %2597 = vmatpush1.msra.mxu0 0.0
    %2598 = vmatprep.subr.mxu0 0.0
    %2599 = vmatpush1.msra.mxu0 0.0
    %2600 = vmatprep.subr.mxu0 0.0
    %2601 = vmatpush1.msra.mxu0 0.0
    %2602 = vmatprep.subr.mxu0 0.0
    %2603 = vmatpush1.msra.mxu0 0.0
    %2604 = vmatprep.subr.mxu0 0.0
    %2605 = vmatpush1.msra.mxu0 0.0
    %2606 = vmatprep.subr.mxu0 0.0
    %2607 = vmatpush1.msra.mxu0 0.0
    %2608 = vmatprep.subr.mxu0 0.0
    %2609 = vmatpush1.msra.mxu0 0.0
    %2610 = vmatprep.subr.mxu0 0.0
    %2611 = vmatpush1.msra.mxu0 0.0
    %2612 = vmatprep.mubr.f32.mxu0 0.0
    %2613 = vmatmul.mubr.f32.gmra.mrb[0].mxu0 %v2230
    %v2614 = vpop.f32.mrb[0].mxu0
    %v2615 = vadd.f32 0.0, %v2614
    %v2616 = vpop.f32.mrb[0].mxu0
    %v2617 = vadd.f32 0.0, %v2616
    %2618 = vdwg.mxu0
    %2619 = vmatprep.subr.mxu0 %v240
    %2620 = vmatpush1.msra.mxu0 %v239
    %2621 = vmatprep.subr.mxu0 %v244
    %2622 = vmatpush1.msra.mxu0 %v243
    %2623 = vmatprep.subr.mxu0 %v248
    %2624 = vmatpush1.msra.mxu0 %v247
    %2625 = vmatprep.subr.mxu0 %v252
    %2626 = vmatpush1.msra.mxu0 %v251
    %2627 = vmatprep.subr.mxu0 %v256
    %2628 = vmatpush1.msra.mxu0 %v255
    %2629 = vmatprep.subr.mxu0 %v260
    %2630 = vmatpush1.msra.mxu0 %v259
    %2631 = vmatprep.subr.mxu0 %v264
    %2632 = vmatpush1.msra.mxu0 %v263
    %2633 = vmatprep.subr.mxu0 %v268
    %2634 = vmatpush1.msra.mxu0 %v267
    %2635 = vmatprep.subr.mxu0 %v272
    %2636 = vmatpush1.msra.mxu0 %v271
    %2637 = vmatprep.subr.mxu0 %v276
    %2638 = vmatpush1.msra.mxu0 %v275
    %2639 = vmatprep.subr.mxu0 %v280
    %2640 = vmatpush1.msra.mxu0 %v279
    %2641 = vmatprep.subr.mxu0 %v284
    %2642 = vmatpush1.msra.mxu0 %v283
    %2643 = vmatprep.subr.mxu0 %v288
    %2644 = vmatpush1.msra.mxu0 %v287
    %2645 = vmatprep.subr.mxu0 %v292
    %2646 = vmatpush1.msra.mxu0 %v291
    %2647 = vmatprep.subr.mxu0 %v296
    %2648 = vmatpush1.msra.mxu0 %v295
    %2649 = vmatprep.subr.mxu0 %v300
    %2650 = vmatpush1.msra.mxu0 %v299
    %2651 = vmatprep.subr.mxu0 0.0
    %2652 = vmatpush1.msra.mxu0 0.0
    %2653 = vmatprep.subr.mxu0 0.0
    %2654 = vmatpush1.msra.mxu0 0.0
    %2655 = vmatprep.subr.mxu0 0.0
    %2656 = vmatpush1.msra.mxu0 0.0
    %2657 = vmatprep.subr.mxu0 0.0
    %2658 = vmatpush1.msra.mxu0 0.0
    %2659 = vmatprep.subr.mxu0 0.0
    %2660 = vmatpush1.msra.mxu0 0.0
    %2661 = vmatprep.subr.mxu0 0.0
    %2662 = vmatpush1.msra.mxu0 0.0
    %2663 = vmatprep.subr.mxu0 0.0
    %2664 = vmatpush1.msra.mxu0 0.0
    %2665 = vmatprep.subr.mxu0 0.0
    %2666 = vmatpush1.msra.mxu0 0.0
    %2667 = vmatprep.subr.mxu0 0.0
    %2668 = vmatpush1.msra.mxu0 0.0
    %2669 = vmatprep.subr.mxu0 0.0
    %2670 = vmatpush1.msra.mxu0 0.0
    %2671 = vmatprep.subr.mxu0 0.0
    %2672 = vmatpush1.msra.mxu0 0.0
    %2673 = vmatprep.subr.mxu0 0.0
    %2674 = vmatpush1.msra.mxu0 0.0
    %2675 = vmatprep.subr.mxu0 0.0
    %2676 = vmatpush1.msra.mxu0 0.0
    %2677 = vmatprep.subr.mxu0 0.0
    %2678 = vmatpush1.msra.mxu0 0.0
    %2679 = vmatprep.subr.mxu0 0.0
    %2680 = vmatpush1.msra.mxu0 0.0
    %2681 = vmatprep.subr.mxu0 0.0
    %2682 = vmatpush1.msra.mxu0 0.0
    %2683 = vmatprep.mubr.f32.mxu0 0.0
    %2684 = vmatmul.mubr.f32.gmra.mrb[0].mxu0 %v2230
    %v2685 = vpop.f32.mrb[0].mxu0
    %v2686 = vadd.f32 0.0, %v2685
    %v2687 = vpop.f32.mrb[0].mxu0
    %v2688 = vadd.f32 0.0, %v2687
    %2689 = vdwg.mxu0
    %2690 = vmatprep.subr.mxu0 %v174
    %2691 = vmatpush1.msra.mxu0 %v173
    %2692 = vmatprep.subr.mxu0 %v178
    %2693 = vmatpush1.msra.mxu0 %v177
    %2694 = vmatprep.subr.mxu0 %v182
    %2695 = vmatpush1.msra.mxu0 %v181
    %2696 = vmatprep.subr.mxu0 %v186
    %2697 = vmatpush1.msra.mxu0 %v185
    %2698 = vmatprep.subr.mxu0 %v190
    %2699 = vmatpush1.msra.mxu0 %v189
    %2700 = vmatprep.subr.mxu0 %v194
    %2701 = vmatpush1.msra.mxu0 %v193
    %2702 = vmatprep.subr.mxu0 %v198
    %2703 = vmatpush1.msra.mxu0 %v197
    %2704 = vmatprep.subr.mxu0 %v202
    %2705 = vmatpush1.msra.mxu0 %v201
    %2706 = vmatprep.subr.mxu0 %v206
    %2707 = vmatpush1.msra.mxu0 %v205
    %2708 = vmatprep.subr.mxu0 %v210
    %2709 = vmatpush1.msra.mxu0 %v209
    %2710 = vmatprep.subr.mxu0 %v214
    %2711 = vmatpush1.msra.mxu0 %v213
    %2712 = vmatprep.subr.mxu0 %v218
    %2713 = vmatpush1.msra.mxu0 %v217
    %2714 = vmatprep.subr.mxu0 %v222
    %2715 = vmatpush1.msra.mxu0 %v221
    %2716 = vmatprep.subr.mxu0 %v226
    %2717 = vmatpush1.msra.mxu0 %v225
    %2718 = vmatprep.subr.mxu0 %v230
    %2719 = vmatpush1.msra.mxu0 %v229
    %2720 = vmatprep.subr.mxu0 %v234
    %2721 = vmatpush1.msra.mxu0 %v233
    %2722 = vmatprep.subr.mxu0 0.0
    %2723 = vmatpush1.msra.mxu0 0.0
    %2724 = vmatprep.subr.mxu0 0.0
    %2725 = vmatpush1.msra.mxu0 0.0
    %2726 = vmatprep.subr.mxu0 0.0
    %2727 = vmatpush1.msra.mxu0 0.0
    %2728 = vmatprep.subr.mxu0 0.0
    %2729 = vmatpush1.msra.mxu0 0.0
    %2730 = vmatprep.subr.mxu0 0.0
    %2731 = vmatpush1.msra.mxu0 0.0
    %2732 = vmatprep.subr.mxu0 0.0
    %2733 = vmatpush1.msra.mxu0 0.0
    %2734 = vmatprep.subr.mxu0 0.0
    %2735 = vmatpush1.msra.mxu0 0.0
    %2736 = vmatprep.subr.mxu0 0.0
    %2737 = vmatpush1.msra.mxu0 0.0
    %2738 = vmatprep.subr.mxu0 0.0
    %2739 = vmatpush1.msra.mxu0 0.0
    %2740 = vmatprep.subr.mxu0 0.0
    %2741 = vmatpush1.msra.mxu0 0.0
    %2742 = vmatprep.subr.mxu0 0.0
    %2743 = vmatpush1.msra.mxu0 0.0
    %2744 = vmatprep.subr.mxu0 0.0
    %2745 = vmatpush1.msra.mxu0 0.0
    %2746 = vmatprep.subr.mxu0 0.0
    %2747 = vmatpush1.msra.mxu0 0.0
    %2748 = vmatprep.subr.mxu0 0.0
    %2749 = vmatpush1.msra.mxu0 0.0
    %2750 = vmatprep.subr.mxu0 0.0
    %2751 = vmatpush1.msra.mxu0 0.0
    %2752 = vmatprep.subr.mxu0 0.0
    %2753 = vmatpush1.msra.mxu0 0.0
    %2754 = vmatprep.mubr.f32.mxu0 0.0
    %2755 = vmatmul.mubr.f32.gmra.mrb[0].mxu0 %v2547
    %v2756 = vpop.f32.mrb[0].mxu0
    %v2757 = vadd.f32 %v2615, %v2756
    %v2758 = vpop.f32.mrb[0].mxu0
    %v2759 = vadd.f32 %v2617, %v2758
    %2760 = vdwg.mxu0
    %2761 = vmatprep.subr.mxu0 %v176
    %2762 = vmatpush1.msra.mxu0 %v175
    %2763 = vmatprep.subr.mxu0 %v180
    %2764 = vmatpush1.msra.mxu0 %v179
    %2765 = vmatprep.subr.mxu0 %v184
    %2766 = vmatpush1.msra.mxu0 %v183
    %2767 = vmatprep.subr.mxu0 %v188
    %2768 = vmatpush1.msra.mxu0 %v187
    %2769 = vmatprep.subr.mxu0 %v192
    %2770 = vmatpush1.msra.mxu0 %v191
    %2771 = vmatprep.subr.mxu0 %v196
    %2772 = vmatpush1.msra.mxu0 %v195
    %2773 = vmatprep.subr.mxu0 %v200
    %2774 = vmatpush1.msra.mxu0 %v199
    %2775 = vmatprep.subr.mxu0 %v204
    %2776 = vmatpush1.msra.mxu0 %v203
    %2777 = vmatprep.subr.mxu0 %v208
    %2778 = vmatpush1.msra.mxu0 %v207
    %2779 = vmatprep.subr.mxu0 %v212
    %2780 = vmatpush1.msra.mxu0 %v211
    %2781 = vmatprep.subr.mxu0 %v216
    %2782 = vmatpush1.msra.mxu0 %v215
    %2783 = vmatprep.subr.mxu0 %v220
    %2784 = vmatpush1.msra.mxu0 %v219
    %2785 = vmatprep.subr.mxu0 %v224
    %2786 = vmatpush1.msra.mxu0 %v223
    %2787 = vmatprep.subr.mxu0 %v228
    %2788 = vmatpush1.msra.mxu0 %v227
    %2789 = vmatprep.subr.mxu0 %v232
    %2790 = vmatpush1.msra.mxu0 %v231
    %2791 = vmatprep.subr.mxu0 %v236
    %2792 = vmatpush1.msra.mxu0 %v235
    %2793 = vmatprep.subr.mxu0 0.0
    %2794 = vmatpush1.msra.mxu0 0.0
    %2795 = vmatprep.subr.mxu0 0.0
    %2796 = vmatpush1.msra.mxu0 0.0
    %2797 = vmatprep.subr.mxu0 0.0
    %2798 = vmatpush1.msra.mxu0 0.0
    %2799 = vmatprep.subr.mxu0 0.0
    %2800 = vmatpush1.msra.mxu0 0.0
    %2801 = vmatprep.subr.mxu0 0.0
    %2802 = vmatpush1.msra.mxu0 0.0
    %2803 = vmatprep.subr.mxu0 0.0
    %2804 = vmatpush1.msra.mxu0 0.0
    %2805 = vmatprep.subr.mxu0 0.0
    %2806 = vmatpush1.msra.mxu0 0.0
    %2807 = vmatprep.subr.mxu0 0.0
    %2808 = vmatpush1.msra.mxu0 0.0
    %2809 = vmatprep.subr.mxu0 0.0
    %2810 = vmatpush1.msra.mxu0 0.0
    %2811 = vmatprep.subr.mxu0 0.0
    %2812 = vmatpush1.msra.mxu0 0.0
    %2813 = vmatprep.subr.mxu0 0.0
    %2814 = vmatpush1.msra.mxu0 0.0
    %2815 = vmatprep.subr.mxu0 0.0
    %2816 = vmatpush1.msra.mxu0 0.0
    %2817 = vmatprep.subr.mxu0 0.0
    %2818 = vmatpush1.msra.mxu0 0.0
    %2819 = vmatprep.subr.mxu0 0.0
    %2820 = vmatpush1.msra.mxu0 0.0
    %2821 = vmatprep.subr.mxu0 0.0
    %2822 = vmatpush1.msra.mxu0 0.0
    %2823 = vmatprep.subr.mxu0 0.0
    %2824 = vmatpush1.msra.mxu0 0.0
    %2825 = vmatprep.mubr.f32.mxu0 0.0
    %2826 = vmatmul.mubr.f32.gmra.mrb[0].mxu0 %v2547
    %v2827 = vpop.f32.mrb[0].mxu0
    %v2828 = vadd.f32 %v2686, %v2827
    %v2829 = vpop.f32.mrb[0].mxu0
    %v2830 = vadd.f32 %v2688, %v2829
    %2831 = vdwg.mxu0
    %v2832 = vadd.f32 %v2757, %v928
    %v2833 = vadd.f32 %v2759, %v932
    %v2834 = vadd.f32 %v2828, %v936
    %v2835 = vadd.f32 %v2830, %v940
    %v2836 = vxor.u32 %v2832, 2147483648
    %v2837 = vmul.f32 %v2836, 1.442695
    %v2838 = vpow.pop %v2837
    %v2839 = vadd.f32 %v2838, 1.0
    %v2840 = vrcp.pop %v2839
    %v2841 = vmul.f32 1.0, %v2840
    %v2842 = vxor.u32 %v2833, 2147483648
    %v2843 = vmul.f32 %v2842, 1.442695
    %v2844 = vpow.pop %v2843
    %v2845 = vadd.f32 %v2844, 1.0
    %v2846 = vrcp.pop %v2845
    %v2847 = vmul.f32 1.0, %v2846
    %v2848 = vtanh.pop %v2834
    %v2849 = vxor.u32 %v2835, 2147483648
    %v2850 = vmul.f32 %v2849, 1.442695
    %v2851 = vpow.pop %v2850
    %v2852 = vadd.f32 %v2851, 1.0
    %v2853 = vrcp.pop %v2852
    %v2854 = vmul.f32 1.0, %v2853
    %v2855 = vmul.f32 %v2847, %v2228
    %v2856 = vmul.f32 %v2841, %v2848
    %v2857 = vadd.f32 %v2855, %v2856
    %v2858 = vtanh.pop %v2857
    %v2859 = vmul.f32 %v2854, %v2858
    %s2860 = scalar_lea.vmem %s0, 8
    %v2861 = vld [vmem:[%s2860] sm:$0x3]
    %2862 = vmatprep.subr.mxu0 %v109
    %2863 = vmatpush1.msra.mxu0 %v108
    %2864 = vmatprep.subr.mxu0 %v113
    %2865 = vmatpush1.msra.mxu0 %v112
    %2866 = vmatprep.subr.mxu0 %v117
    %2867 = vmatpush1.msra.mxu0 %v116
    %2868 = vmatprep.subr.mxu0 %v121
    %2869 = vmatpush1.msra.mxu0 %v120
    %2870 = vmatprep.subr.mxu0 %v125
    %2871 = vmatpush1.msra.mxu0 %v124
    %2872 = vmatprep.subr.mxu0 %v129
    %2873 = vmatpush1.msra.mxu0 %v128
    %2874 = vmatprep.subr.mxu0 %v133
    %2875 = vmatpush1.msra.mxu0 %v132
    %2876 = vmatprep.subr.mxu0 %v137
    %2877 = vmatpush1.msra.mxu0 %v136
    %2878 = vmatprep.subr.mxu0 %v141
    %2879 = vmatpush1.msra.mxu0 %v140
    %2880 = vmatprep.subr.mxu0 %v145
    %2881 = vmatpush1.msra.mxu0 %v144
    %2882 = vmatprep.subr.mxu0 %v149
    %2883 = vmatpush1.msra.mxu0 %v148
    %2884 = vmatprep.subr.mxu0 %v153
    %2885 = vmatpush1.msra.mxu0 %v152
    %2886 = vmatprep.subr.mxu0 %v157
    %2887 = vmatpush1.msra.mxu0 %v156
    %2888 = vmatprep.subr.mxu0 %v161
    %2889 = vmatpush1.msra.mxu0 %v160
    %2890 = vmatprep.subr.mxu0 %v165
    %2891 = vmatpush1.msra.mxu0 %v164
    %2892 = vmatprep.subr.mxu0 %v169
    %2893 = vmatpush1.msra.mxu0 %v168
    %2894 = vmatprep.subr.mxu0 0.0
    %2895 = vmatpush1.msra.mxu0 0.0
    %2896 = vmatprep.subr.mxu0 0.0
    %2897 = vmatpush1.msra.mxu0 0.0
    %2898 = vmatprep.subr.mxu0 0.0
    %2899 = vmatpush1.msra.mxu0 0.0
    %2900 = vmatprep.subr.mxu0 0.0
    %2901 = vmatpush1.msra.mxu0 0.0
    %2902 = vmatprep.subr.mxu0 0.0
    %2903 = vmatpush1.msra.mxu0 0.0
    %2904 = vmatprep.subr.mxu0 0.0
    %2905 = vmatpush1.msra.mxu0 0.0
    %2906 = vmatprep.subr.mxu0 0.0
    %2907 = vmatpush1.msra.mxu0 0.0
    %2908 = vmatprep.subr.mxu0 0.0
    %2909 = vmatpush1.msra.mxu0 0.0
    %2910 = vmatprep.subr.mxu0 0.0
    %2911 = vmatpush1.msra.mxu0 0.0
    %2912 = vmatprep.subr.mxu0 0.0
    %2913 = vmatpush1.msra.mxu0 0.0
    %2914 = vmatprep.subr.mxu0 0.0
    %2915 = vmatpush1.msra.mxu0 0.0
    %2916 = vmatprep.subr.mxu0 0.0
    %2917 = vmatpush1.msra.mxu0 0.0
    %2918 = vmatprep.subr.mxu0 0.0
    %2919 = vmatpush1.msra.mxu0 0.0
    %2920 = vmatprep.subr.mxu0 0.0
    %2921 = vmatpush1.msra.mxu0 0.0
    %2922 = vmatprep.subr.mxu0 0.0
    %2923 = vmatpush1.msra.mxu0 0.0
    %2924 = vmatprep.subr.mxu0 0.0
    %2925 = vmatpush1.msra.mxu0 0.0
    %2926 = vmatprep.mubr.f32.mxu0 0.0
    %2927 = vmatmul.mubr.f32.gmra.mrb[0].mxu0 %v2547
    %v2928 = vpop.f32.mrb[0].mxu0
    %v2929 = vadd.f32 0.0, %v2928
    %v2930 = vpop.f32.mrb[0].mxu0
    %v2931 = vadd.f32 0.0, %v2930
    %2932 = vdwg.mxu0
    %2933 = vmatprep.subr.mxu0 %v111
    %2934 = vmatpush1.msra.mxu0 %v110
    %2935 = vmatprep.subr.mxu0 %v115
    %2936 = vmatpush1.msra.mxu0 %v114
    %2937 = vmatprep.subr.mxu0 %v119
    %2938 = vmatpush1.msra.mxu0 %v118
    %2939 = vmatprep.subr.mxu0 %v123
    %2940 = vmatpush1.msra.mxu0 %v122
    %2941 = vmatprep.subr.mxu0 %v127
    %2942 = vmatpush1.msra.mxu0 %v126
    %2943 = vmatprep.subr.mxu0 %v131
    %2944 = vmatpush1.msra.mxu0 %v130
    %2945 = vmatprep.subr.mxu0 %v135
    %2946 = vmatpush1.msra.mxu0 %v134
    %2947 = vmatprep.subr.mxu0 %v139
    %2948 = vmatpush1.msra.mxu0 %v138
    %2949 = vmatprep.subr.mxu0 %v143
    %2950 = vmatpush1.msra.mxu0 %v142
    %2951 = vmatprep.subr.mxu0 %v147
    %2952 = vmatpush1.msra.mxu0 %v146
    %2953 = vmatprep.subr.mxu0 %v151
    %2954 = vmatpush1.msra.mxu0 %v150
    %2955 = vmatprep.subr.mxu0 %v155
    %2956 = vmatpush1.msra.mxu0 %v154
    %2957 = vmatprep.subr.mxu0 %v159
    %2958 = vmatpush1.msra.mxu0 %v158
    %2959 = vmatprep.subr.mxu0 %v163
    %2960 = vmatpush1.msra.mxu0 %v162
    %2961 = vmatprep.subr.mxu0 %v167
    %2962 = vmatpush1.msra.mxu0 %v166
    %2963 = vmatprep.subr.mxu0 %v171
    %2964 = vmatpush1.msra.mxu0 %v170
    %2965 = vmatprep.subr.mxu0 0.0
    %2966 = vmatpush1.msra.mxu0 0.0
    %2967 = vmatprep.subr.mxu0 0.0
    %2968 = vmatpush1.msra.mxu0 0.0
    %2969 = vmatprep.subr.mxu0 0.0
    %2970 = vmatpush1.msra.mxu0 0.0
    %2971 = vmatprep.subr.mxu0 0.0
    %2972 = vmatpush1.msra.mxu0 0.0
    %2973 = vmatprep.subr.mxu0 0.0
    %2974 = vmatpush1.msra.mxu0 0.0
    %2975 = vmatprep.subr.mxu0 0.0
    %2976 = vmatpush1.msra.mxu0 0.0
    %2977 = vmatprep.subr.mxu0 0.0
    %2978 = vmatpush1.msra.mxu0 0.0
    %2979 = vmatprep.subr.mxu0 0.0
    %2980 = vmatpush1.msra.mxu0 0.0
    %2981 = vmatprep.subr.mxu0 0.0
    %2982 = vmatpush1.msra.mxu0 0.0
    %2983 = vmatprep.subr.mxu0 0.0
    %2984 = vmatpush1.msra.mxu0 0.0
    %2985 = vmatprep.subr.mxu0 0.0
    %2986 = vmatpush1.msra.mxu0 0.0
    %2987 = vmatprep.subr.mxu0 0.0
    %2988 = vmatpush1.msra.mxu0 0.0
    %2989 = vmatprep.subr.mxu0 0.0
    %2990 = vmatpush1.msra.mxu0 0.0
    %2991 = vmatprep.subr.mxu0 0.0
    %2992 = vmatpush1.msra.mxu0 0.0
    %2993 = vmatprep.subr.mxu0 0.0
    %2994 = vmatpush1.msra.mxu0 0.0
    %2995 = vmatprep.subr.mxu0 0.0
    %2996 = vmatpush1.msra.mxu0 0.0
    %2997 = vmatprep.mubr.f32.mxu0 0.0
    %2998 = vmatmul.mubr.f32.gmra.mrb[0].mxu0 %v2547
    %v2999 = vpop.f32.mrb[0].mxu0
    %v3000 = vadd.f32 0.0, %v2999
    %v3001 = vpop.f32.mrb[0].mxu0
    %v3002 = vadd.f32 0.0, %v3001
    %3003 = vdwg.mxu0
    %v3005 = vsel %vm445, %v2861, 0
    %3007 = vmatprep.subr.mxu0 %v101
    %3008 = vmatpush1.msra.mxu0 %v100
    %3009 = vmatprep.subr.mxu0 %v105
    %3010 = vmatpush1.msra.mxu0 %v104
    %3011 = vmatprep.subr.mxu0 0.0
    %3012 = vmatpush1.msra.mxu0 0.0
    %3013 = vmatprep.subr.mxu0 0.0
    %3014 = vmatpush1.msra.mxu0 0.0
    %3015 = vmatprep.subr.mxu0 0.0
    %3016 = vmatpush1.msra.mxu0 0.0
    %3017 = vmatprep.subr.mxu0 0.0
    %3018 = vmatpush1.msra.mxu0 0.0
    %3019 = vmatprep.subr.mxu0 0.0
    %3020 = vmatpush1.msra.mxu0 0.0
    %3021 = vmatprep.subr.mxu0 0.0
    %3022 = vmatpush1.msra.mxu0 0.0
    %3023 = vmatprep.subr.mxu0 0.0
    %3024 = vmatpush1.msra.mxu0 0.0
    %3025 = vmatprep.subr.mxu0 0.0
    %3026 = vmatpush1.msra.mxu0 0.0
    %3027 = vmatprep.subr.mxu0 0.0
    %3028 = vmatpush1.msra.mxu0 0.0
    %3029 = vmatprep.subr.mxu0 0.0
    %3030 = vmatpush1.msra.mxu0 0.0
    %3031 = vmatprep.subr.mxu0 0.0
    %3032 = vmatpush1.msra.mxu0 0.0
    %3033 = vmatprep.subr.mxu0 0.0
    %3034 = vmatpush1.msra.mxu0 0.0
    %3035 = vmatprep.subr.mxu0 0.0
    %3036 = vmatpush1.msra.mxu0 0.0
    %3037 = vmatprep.subr.mxu0 0.0
    %3038 = vmatpush1.msra.mxu0 0.0
    %3039 = vmatprep.subr.mxu0 0.0
    %3040 = vmatpush1.msra.mxu0 0.0
    %3041 = vmatprep.subr.mxu0 0.0
    %3042 = vmatpush1.msra.mxu0 0.0
    %3043 = vmatprep.subr.mxu0 0.0
    %3044 = vmatpush1.msra.mxu0 0.0
    %3045 = vmatprep.subr.mxu0 0.0
    %3046 = vmatpush1.msra.mxu0 0.0
    %3047 = vmatprep.subr.mxu0 0.0
    %3048 = vmatpush1.msra.mxu0 0.0
    %3049 = vmatprep.subr.mxu0 0.0
    %3050 = vmatpush1.msra.mxu0 0.0
    %3051 = vmatprep.subr.mxu0 0.0
    %3052 = vmatpush1.msra.mxu0 0.0
    %3053 = vmatprep.subr.mxu0 0.0
    %3054 = vmatpush1.msra.mxu0 0.0
    %3055 = vmatprep.subr.mxu0 0.0
    %3056 = vmatpush1.msra.mxu0 0.0
    %3057 = vmatprep.subr.mxu0 0.0
    %3058 = vmatpush1.msra.mxu0 0.0
    %3059 = vmatprep.subr.mxu0 0.0
    %3060 = vmatpush1.msra.mxu0 0.0
    %3061 = vmatprep.subr.mxu0 0.0
    %3062 = vmatpush1.msra.mxu0 0.0
    %3063 = vmatprep.subr.mxu0 0.0
    %3064 = vmatpush1.msra.mxu0 0.0
    %3065 = vmatprep.subr.mxu0 0.0
    %3066 = vmatpush1.msra.mxu0 0.0
    %3067 = vmatprep.subr.mxu0 0.0
    %3068 = vmatpush1.msra.mxu0 0.0
    %3069 = vmatprep.subr.mxu0 0.0
    %3070 = vmatpush1.msra.mxu0 0.0
    %3071 = vmatprep.mubr.f32.mxu0 0.0
    %3072 = vmatmul.mubr.f32.gmra.mrb[0].mxu0 %v3005
    %v3073 = vpop.f32.mrb[0].mxu0
    %v3074 = vadd.f32 %v2929, %v3073
    %v3075 = vpop.f32.mrb[0].mxu0
    %v3076 = vadd.f32 %v2931, %v3075
    %3077 = vdwg.mxu0
    %3078 = vmatprep.subr.mxu0 %v103
    %3079 = vmatpush1.msra.mxu0 %v102
    %3080 = vmatprep.subr.mxu0 %v107
    %3081 = vmatpush1.msra.mxu0 %v106
    %3082 = vmatprep.subr.mxu0 0.0
    %3083 = vmatpush1.msra.mxu0 0.0
    %3084 = vmatprep.subr.mxu0 0.0
    %3085 = vmatpush1.msra.mxu0 0.0
    %3086 = vmatprep.subr.mxu0 0.0
    %3087 = vmatpush1.msra.mxu0 0.0
    %3088 = vmatprep.subr.mxu0 0.0
    %3089 = vmatpush1.msra.mxu0 0.0
    %3090 = vmatprep.subr.mxu0 0.0
    %3091 = vmatpush1.msra.mxu0 0.0
    %3092 = vmatprep.subr.mxu0 0.0
    %3093 = vmatpush1.msra.mxu0 0.0
    %3094 = vmatprep.subr.mxu0 0.0
    %3095 = vmatpush1.msra.mxu0 0.0
    %3096 = vmatprep.subr.mxu0 0.0
    %3097 = vmatpush1.msra.mxu0 0.0
    %3098 = vmatprep.subr.mxu0 0.0
    %3099 = vmatpush1.msra.mxu0 0.0
    %3100 = vmatprep.subr.mxu0 0.0
    %3101 = vmatpush1.msra.mxu0 0.0
    %3102 = vmatprep.subr.mxu0 0.0
    %3103 = vmatpush1.msra.mxu0 0.0
    %3104 = vmatprep.subr.mxu0 0.0
    %3105 = vmatpush1.msra.mxu0 0.0
    %3106 = vmatprep.subr.mxu0 0.0
    %3107 = vmatpush1.msra.mxu0 0.0
    %3108 = vmatprep.subr.mxu0 0.0
    %3109 = vmatpush1.msra.mxu0 0.0
    %3110 = vmatprep.subr.mxu0 0.0
    %3111 = vmatpush1.msra.mxu0 0.0
    %3112 = vmatprep.subr.mxu0 0.0
    %3113 = vmatpush1.msra.mxu0 0.0
    %3114 = vmatprep.subr.mxu0 0.0
    %3115 = vmatpush1.msra.mxu0 0.0
    %3116 = vmatprep.subr.mxu0 0.0
    %3117 = vmatpush1.msra.mxu0 0.0
    %3118 = vmatprep.subr.mxu0 0.0
    %3119 = vmatpush1.msra.mxu0 0.0
    %3120 = vmatprep.subr.mxu0 0.0
    %3121 = vmatpush1.msra.mxu0 0.0
    %3122 = vmatprep.subr.mxu0 0.0
    %3123 = vmatpush1.msra.mxu0 0.0
    %3124 = vmatprep.subr.mxu0 0.0
    %3125 = vmatpush1.msra.mxu0 0.0
    %3126 = vmatprep.subr.mxu0 0.0
    %3127 = vmatpush1.msra.mxu0 0.0
    %3128 = vmatprep.subr.mxu0 0.0
    %3129 = vmatpush1.msra.mxu0 0.0
    %3130 = vmatprep.subr.mxu0 0.0
    %3131 = vmatpush1.msra.mxu0 0.0
    %3132 = vmatprep.subr.mxu0 0.0
    %3133 = vmatpush1.msra.mxu0 0.0
    %3134 = vmatprep.subr.mxu0 0.0
    %3135 = vmatpush1.msra.mxu0 0.0
    %3136 = vmatprep.subr.mxu0 0.0
    %3137 = vmatpush1.msra.mxu0 0.0
    %3138 = vmatprep.subr.mxu0 0.0
    %3139 = vmatpush1.msra.mxu0 0.0
    %3140 = vmatprep.subr.mxu0 0.0
    %3141 = vmatpush1.msra.mxu0 0.0
    %3142 = vmatprep.mubr.f32.mxu0 0.0
    %3143 = vmatmul.mubr.f32.gmra.mrb[0].mxu0 %v3005
    %v3144 = vpop.f32.mrb[0].mxu0
    %v3145 = vadd.f32 %v3000, %v3144
    %v3146 = vpop.f32.mrb[0].mxu0
    %v3147 = vadd.f32 %v3002, %v3146
    %3148 = vdwg.mxu0
    %v3149 = vadd.f32 %v3074, %v595
    %v3150 = vadd.f32 %v3076, %v599
    %v3151 = vadd.f32 %v3145, %v603
    %v3152 = vadd.f32 %v3147, %v607
    %v3153 = vxor.u32 %v3149, 2147483648
    %v3154 = vmul.f32 %v3153, 1.442695
    %v3155 = vpow.pop %v3154
    %v3156 = vadd.f32 %v3155, 1.0
    %v3157 = vrcp.pop %v3156
    %v3158 = vmul.f32 1.0, %v3157
    %v3159 = vxor.u32 %v3150, 2147483648
    %v3160 = vmul.f32 %v3159, 1.442695
    %v3161 = vpow.pop %v3160
    %v3162 = vadd.f32 %v3161, 1.0
    %v3163 = vrcp.pop %v3162
    %v3164 = vmul.f32 1.0, %v3163
    %v3165 = vtanh.pop %v3151
    %v3166 = vxor.u32 %v3152, 2147483648
    %v3167 = vmul.f32 %v3166, 1.442695
    %v3168 = vpow.pop %v3167
    %v3169 = vadd.f32 %v3168, 1.0
    %v3170 = vrcp.pop %v3169
    %v3171 = vmul.f32 1.0, %v3170
    %v3172 = vmul.f32 %v3164, %v2545
    %v3173 = vmul.f32 %v3158, %v3165
    %v3174 = vadd.f32 %v3172, %v3173
    %v3175 = vtanh.pop %v3174
    %v3176 = vmul.f32 %v3171, %v3175
    %3177 = vmatprep.subr.mxu0 %v238
    %3178 = vmatpush1.msra.mxu0 %v237
    %3179 = vmatprep.subr.mxu0 %v242
    %3180 = vmatpush1.msra.mxu0 %v241
    %3181 = vmatprep.subr.mxu0 %v246
    %3182 = vmatpush1.msra.mxu0 %v245
    %3183 = vmatprep.subr.mxu0 %v250
    %3184 = vmatpush1.msra.mxu0 %v249
    %3185 = vmatprep.subr.mxu0 %v254
    %3186 = vmatpush1.msra.mxu0 %v253
    %3187 = vmatprep.subr.mxu0 %v258
    %3188 = vmatpush1.msra.mxu0 %v257
    %3189 = vmatprep.subr.mxu0 %v262
    %3190 = vmatpush1.msra.mxu0 %v261
    %3191 = vmatprep.subr.mxu0 %v266
    %3192 = vmatpush1.msra.mxu0 %v265
    %3193 = vmatprep.subr.mxu0 %v270
    %3194 = vmatpush1.msra.mxu0 %v269
    %3195 = vmatprep.subr.mxu0 %v274
    %3196 = vmatpush1.msra.mxu0 %v273
    %3197 = vmatprep.subr.mxu0 %v278
    %3198 = vmatpush1.msra.mxu0 %v277
    %3199 = vmatprep.subr.mxu0 %v282
    %3200 = vmatpush1.msra.mxu0 %v281
    %3201 = vmatprep.subr.mxu0 %v286
    %3202 = vmatpush1.msra.mxu0 %v285
    %3203 = vmatprep.subr.mxu0 %v290
    %3204 = vmatpush1.msra.mxu0 %v289
    %3205 = vmatprep.subr.mxu0 %v294
    %3206 = vmatpush1.msra.mxu0 %v293
    %3207 = vmatprep.subr.mxu0 %v298
    %3208 = vmatpush1.msra.mxu0 %v297
    %3209 = vmatprep.subr.mxu0 0.0
    %3210 = vmatpush1.msra.mxu0 0.0
    %3211 = vmatprep.subr.mxu0 0.0
    %3212 = vmatpush1.msra.mxu0 0.0
    %3213 = vmatprep.subr.mxu0 0.0
    %3214 = vmatpush1.msra.mxu0 0.0
    %3215 = vmatprep.subr.mxu0 0.0
    %3216 = vmatpush1.msra.mxu0 0.0
    %3217 = vmatprep.subr.mxu0 0.0
    %3218 = vmatpush1.msra.mxu0 0.0
    %3219 = vmatprep.subr.mxu0 0.0
    %3220 = vmatpush1.msra.mxu0 0.0
    %3221 = vmatprep.subr.mxu0 0.0
    %3222 = vmatpush1.msra.mxu0 0.0
    %3223 = vmatprep.subr.mxu0 0.0
    %3224 = vmatpush1.msra.mxu0 0.0
    %3225 = vmatprep.subr.mxu0 0.0
    %3226 = vmatpush1.msra.mxu0 0.0
    %3227 = vmatprep.subr.mxu0 0.0
    %3228 = vmatpush1.msra.mxu0 0.0
    %3229 = vmatprep.subr.mxu0 0.0
    %3230 = vmatpush1.msra.mxu0 0.0
    %3231 = vmatprep.subr.mxu0 0.0
    %3232 = vmatpush1.msra.mxu0 0.0
    %3233 = vmatprep.subr.mxu0 0.0
    %3234 = vmatpush1.msra.mxu0 0.0
    %3235 = vmatprep.subr.mxu0 0.0
    %3236 = vmatpush1.msra.mxu0 0.0
    %3237 = vmatprep.subr.mxu0 0.0
    %3238 = vmatpush1.msra.mxu0 0.0
    %3239 = vmatprep.subr.mxu0 0.0
    %3240 = vmatpush1.msra.mxu0 0.0
    %3241 = vmatprep.mubr.f32.mxu0 0.0
    %3242 = vmatmul.mubr.f32.gmra.mrb[0].mxu0 %v2859
    %v3243 = vpop.f32.mrb[0].mxu0
    %v3244 = vadd.f32 0.0, %v3243
    %v3245 = vpop.f32.mrb[0].mxu0
    %v3246 = vadd.f32 0.0, %v3245
    %3247 = vdwg.mxu0
    %3248 = vmatprep.subr.mxu0 %v240
    %3249 = vmatpush1.msra.mxu0 %v239
    %3250 = vmatprep.subr.mxu0 %v244
    %3251 = vmatpush1.msra.mxu0 %v243
    %3252 = vmatprep.subr.mxu0 %v248
    %3253 = vmatpush1.msra.mxu0 %v247
    %3254 = vmatprep.subr.mxu0 %v252
    %3255 = vmatpush1.msra.mxu0 %v251
    %3256 = vmatprep.subr.mxu0 %v256
    %3257 = vmatpush1.msra.mxu0 %v255
    %3258 = vmatprep.subr.mxu0 %v260
    %3259 = vmatpush1.msra.mxu0 %v259
    %3260 = vmatprep.subr.mxu0 %v264
    %3261 = vmatpush1.msra.mxu0 %v263
    %3262 = vmatprep.subr.mxu0 %v268
    %3263 = vmatpush1.msra.mxu0 %v267
    %3264 = vmatprep.subr.mxu0 %v272
    %3265 = vmatpush1.msra.mxu0 %v271
    %3266 = vmatprep.subr.mxu0 %v276
    %3267 = vmatpush1.msra.mxu0 %v275
    %3268 = vmatprep.subr.mxu0 %v280
    %3269 = vmatpush1.msra.mxu0 %v279
    %3270 = vmatprep.subr.mxu0 %v284
    %3271 = vmatpush1.msra.mxu0 %v283
    %3272 = vmatprep.subr.mxu0 %v288
    %3273 = vmatpush1.msra.mxu0 %v287
    %3274 = vmatprep.subr.mxu0 %v292
    %3275 = vmatpush1.msra.mxu0 %v291
    %3276 = vmatprep.subr.mxu0 %v296
    %3277 = vmatpush1.msra.mxu0 %v295
    %3278 = vmatprep.subr.mxu0 %v300
    %3279 = vmatpush1.msra.mxu0 %v299
    %3280 = vmatprep.subr.mxu0 0.0
    %3281 = vmatpush1.msra.mxu0 0.0
    %3282 = vmatprep.subr.mxu0 0.0
    %3283 = vmatpush1.msra.mxu0 0.0
    %3284 = vmatprep.subr.mxu0 0.0
    %3285 = vmatpush1.msra.mxu0 0.0
    %3286 = vmatprep.subr.mxu0 0.0
    %3287 = vmatpush1.msra.mxu0 0.0
    %3288 = vmatprep.subr.mxu0 0.0
    %3289 = vmatpush1.msra.mxu0 0.0
    %3290 = vmatprep.subr.mxu0 0.0
    %3291 = vmatpush1.msra.mxu0 0.0
    %3292 = vmatprep.subr.mxu0 0.0
    %3293 = vmatpush1.msra.mxu0 0.0
    %3294 = vmatprep.subr.mxu0 0.0
    %3295 = vmatpush1.msra.mxu0 0.0
    %3296 = vmatprep.subr.mxu0 0.0
    %3297 = vmatpush1.msra.mxu0 0.0
    %3298 = vmatprep.subr.mxu0 0.0
    %3299 = vmatpush1.msra.mxu0 0.0
    %3300 = vmatprep.subr.mxu0 0.0
    %3301 = vmatpush1.msra.mxu0 0.0
    %3302 = vmatprep.subr.mxu0 0.0
    %3303 = vmatpush1.msra.mxu0 0.0
    %3304 = vmatprep.subr.mxu0 0.0
    %3305 = vmatpush1.msra.mxu0 0.0
    %3306 = vmatprep.subr.mxu0 0.0
    %3307 = vmatpush1.msra.mxu0 0.0
    %3308 = vmatprep.subr.mxu0 0.0
    %3309 = vmatpush1.msra.mxu0 0.0
    %3310 = vmatprep.subr.mxu0 0.0
    %3311 = vmatpush1.msra.mxu0 0.0
    %3312 = vmatprep.mubr.f32.mxu0 0.0
    %3313 = vmatmul.mubr.f32.gmra.mrb[0].mxu0 %v2859
    %v3314 = vpop.f32.mrb[0].mxu0
    %v3315 = vadd.f32 0.0, %v3314
    %v3316 = vpop.f32.mrb[0].mxu0
    %v3317 = vadd.f32 0.0, %v3316
    %3318 = vdwg.mxu0
    %3319 = vmatprep.subr.mxu0 %v174
    %3320 = vmatpush1.msra.mxu0 %v173
    %3321 = vmatprep.subr.mxu0 %v178
    %3322 = vmatpush1.msra.mxu0 %v177
    %3323 = vmatprep.subr.mxu0 %v182
    %3324 = vmatpush1.msra.mxu0 %v181
    %3325 = vmatprep.subr.mxu0 %v186
    %3326 = vmatpush1.msra.mxu0 %v185
    %3327 = vmatprep.subr.mxu0 %v190
    %3328 = vmatpush1.msra.mxu0 %v189
    %3329 = vmatprep.subr.mxu0 %v194
    %3330 = vmatpush1.msra.mxu0 %v193
    %3331 = vmatprep.subr.mxu0 %v198
    %3332 = vmatpush1.msra.mxu0 %v197
    %3333 = vmatprep.subr.mxu0 %v202
    %3334 = vmatpush1.msra.mxu0 %v201
    %3335 = vmatprep.subr.mxu0 %v206
    %3336 = vmatpush1.msra.mxu0 %v205
    %3337 = vmatprep.subr.mxu0 %v210
    %3338 = vmatpush1.msra.mxu0 %v209
    %3339 = vmatprep.subr.mxu0 %v214
    %3340 = vmatpush1.msra.mxu0 %v213
    %3341 = vmatprep.subr.mxu0 %v218
    %3342 = vmatpush1.msra.mxu0 %v217
    %3343 = vmatprep.subr.mxu0 %v222
    %3344 = vmatpush1.msra.mxu0 %v221
    %3345 = vmatprep.subr.mxu0 %v226
    %3346 = vmatpush1.msra.mxu0 %v225
    %3347 = vmatprep.subr.mxu0 %v230
    %3348 = vmatpush1.msra.mxu0 %v229
    %3349 = vmatprep.subr.mxu0 %v234
    %3350 = vmatpush1.msra.mxu0 %v233
    %3351 = vmatprep.subr.mxu0 0.0
    %3352 = vmatpush1.msra.mxu0 0.0
    %3353 = vmatprep.subr.mxu0 0.0
    %3354 = vmatpush1.msra.mxu0 0.0
    %3355 = vmatprep.subr.mxu0 0.0
    %3356 = vmatpush1.msra.mxu0 0.0
    %3357 = vmatprep.subr.mxu0 0.0
    %3358 = vmatpush1.msra.mxu0 0.0
    %3359 = vmatprep.subr.mxu0 0.0
    %3360 = vmatpush1.msra.mxu0 0.0
    %3361 = vmatprep.subr.mxu0 0.0
    %3362 = vmatpush1.msra.mxu0 0.0
    %3363 = vmatprep.subr.mxu0 0.0
    %3364 = vmatpush1.msra.mxu0 0.0
    %3365 = vmatprep.subr.mxu0 0.0
    %3366 = vmatpush1.msra.mxu0 0.0
    %3367 = vmatprep.subr.mxu0 0.0
    %3368 = vmatpush1.msra.mxu0 0.0
    %3369 = vmatprep.subr.mxu0 0.0
    %3370 = vmatpush1.msra.mxu0 0.0
    %3371 = vmatprep.subr.mxu0 0.0
    %3372 = vmatpush1.msra.mxu0 0.0
    %3373 = vmatprep.subr.mxu0 0.0
    %3374 = vmatpush1.msra.mxu0 0.0
    %3375 = vmatprep.subr.mxu0 0.0
    %3376 = vmatpush1.msra.mxu0 0.0
    %3377 = vmatprep.subr.mxu0 0.0
    %3378 = vmatpush1.msra.mxu0 0.0
    %3379 = vmatprep.subr.mxu0 0.0
    %3380 = vmatpush1.msra.mxu0 0.0
    %3381 = vmatprep.subr.mxu0 0.0
    %3382 = vmatpush1.msra.mxu0 0.0
    %3383 = vmatprep.mubr.f32.mxu0 0.0
    %3384 = vmatmul.mubr.f32.gmra.mrb[0].mxu0 %v3176
    %v3385 = vpop.f32.mrb[0].mxu0
    %v3386 = vadd.f32 %v3244, %v3385
    %v3387 = vpop.f32.mrb[0].mxu0
    %v3388 = vadd.f32 %v3246, %v3387
    %3389 = vdwg.mxu0
    %3390 = vmatprep.subr.mxu0 %v176
    %3391 = vmatpush1.msra.mxu0 %v175
    %3392 = vmatprep.subr.mxu0 %v180
    %3393 = vmatpush1.msra.mxu0 %v179
    %3394 = vmatprep.subr.mxu0 %v184
    %3395 = vmatpush1.msra.mxu0 %v183
    %3396 = vmatprep.subr.mxu0 %v188
    %3397 = vmatpush1.msra.mxu0 %v187
    %3398 = vmatprep.subr.mxu0 %v192
    %3399 = vmatpush1.msra.mxu0 %v191
    %3400 = vmatprep.subr.mxu0 %v196
    %3401 = vmatpush1.msra.mxu0 %v195
    %3402 = vmatprep.subr.mxu0 %v200
    %3403 = vmatpush1.msra.mxu0 %v199
    %3404 = vmatprep.subr.mxu0 %v204
    %3405 = vmatpush1.msra.mxu0 %v203
    %3406 = vmatprep.subr.mxu0 %v208
    %3407 = vmatpush1.msra.mxu0 %v207
    %3408 = vmatprep.subr.mxu0 %v212
    %3409 = vmatpush1.msra.mxu0 %v211
    %3410 = vmatprep.subr.mxu0 %v216
    %3411 = vmatpush1.msra.mxu0 %v215
    %3412 = vmatprep.subr.mxu0 %v220
    %3413 = vmatpush1.msra.mxu0 %v219
    %3414 = vmatprep.subr.mxu0 %v224
    %3415 = vmatpush1.msra.mxu0 %v223
    %3416 = vmatprep.subr.mxu0 %v228
    %3417 = vmatpush1.msra.mxu0 %v227
    %3418 = vmatprep.subr.mxu0 %v232
    %3419 = vmatpush1.msra.mxu0 %v231
    %3420 = vmatprep.subr.mxu0 %v236
    %3421 = vmatpush1.msra.mxu0 %v235
    %3422 = vmatprep.subr.mxu0 0.0
    %3423 = vmatpush1.msra.mxu0 0.0
    %3424 = vmatprep.subr.mxu0 0.0
    %3425 = vmatpush1.msra.mxu0 0.0
    %3426 = vmatprep.subr.mxu0 0.0
    %3427 = vmatpush1.msra.mxu0 0.0
    %3428 = vmatprep.subr.mxu0 0.0
    %3429 = vmatpush1.msra.mxu0 0.0
    %3430 = vmatprep.subr.mxu0 0.0
    %3431 = vmatpush1.msra.mxu0 0.0
    %3432 = vmatprep.subr.mxu0 0.0
    %3433 = vmatpush1.msra.mxu0 0.0
    %3434 = vmatprep.subr.mxu0 0.0
    %3435 = vmatpush1.msra.mxu0 0.0
    %3436 = vmatprep.subr.mxu0 0.0
    %3437 = vmatpush1.msra.mxu0 0.0
    %3438 = vmatprep.subr.mxu0 0.0
    %3439 = vmatpush1.msra.mxu0 0.0
    %3440 = vmatprep.subr.mxu0 0.0
    %3441 = vmatpush1.msra.mxu0 0.0
    %3442 = vmatprep.subr.mxu0 0.0
    %3443 = vmatpush1.msra.mxu0 0.0
    %3444 = vmatprep.subr.mxu0 0.0
    %3445 = vmatpush1.msra.mxu0 0.0
    %3446 = vmatprep.subr.mxu0 0.0
    %3447 = vmatpush1.msra.mxu0 0.0
    %3448 = vmatprep.subr.mxu0 0.0
    %3449 = vmatpush1.msra.mxu0 0.0
    %3450 = vmatprep.subr.mxu0 0.0
    %3451 = vmatpush1.msra.mxu0 0.0
    %3452 = vmatprep.subr.mxu0 0.0
    %3453 = vmatpush1.msra.mxu0 0.0
    %3454 = vmatprep.mubr.f32.mxu0 0.0
    %3455 = vmatmul.mubr.f32.gmra.mrb[0].mxu0 %v3176
    %v3456 = vpop.f32.mrb[0].mxu0
    %v3457 = vadd.f32 %v3315, %v3456
    %v3458 = vpop.f32.mrb[0].mxu0
    %v3459 = vadd.f32 %v3317, %v3458
    %3460 = vdwg.mxu0
    %v3461 = vadd.f32 %v3386, %v928
    %v3462 = vadd.f32 %v3388, %v932
    %v3463 = vadd.f32 %v3457, %v936
    %v3464 = vadd.f32 %v3459, %v940
    %v3465 = vxor.u32 %v3461, 2147483648
    %v3466 = vmul.f32 %v3465, 1.442695
    %v3467 = vpow.pop %v3466
    %v3468 = vadd.f32 %v3467, 1.0
    %v3469 = vrcp.pop %v3468
    %v3470 = vmul.f32 1.0, %v3469
    %v3471 = vxor.u32 %v3462, 2147483648
    %v3472 = vmul.f32 %v3471, 1.442695
    %v3473 = vpow.pop %v3472
    %v3474 = vadd.f32 %v3473, 1.0
    %v3475 = vrcp.pop %v3474
    %v3476 = vmul.f32 1.0, %v3475
    %v3477 = vtanh.pop %v3463
    %v3478 = vxor.u32 %v3464, 2147483648
    %v3479 = vmul.f32 %v3478, 1.442695
    %v3480 = vpow.pop %v3479
    %v3481 = vadd.f32 %v3480, 1.0
    %v3482 = vrcp.pop %v3481
    %v3483 = vmul.f32 1.0, %v3482
    %v3484 = vmul.f32 %v3476, %v2857
    %v3485 = vmul.f32 %v3470, %v3477
    %v3486 = vadd.f32 %v3484, %v3485
    %v3487 = vtanh.pop %v3486
    %v3488 = vmul.f32 %v3483, %v3487
    %s3489 = scalar_lea.vmem %s0, 10
    %v3490 = vld [vmem:[%s3489] sm:$0x3]
    %3491 = vmatprep.subr.mxu0 %v109
    %3492 = vmatpush1.msra.mxu0 %v108
    %3493 = vmatprep.subr.mxu0 %v113
    %3494 = vmatpush1.msra.mxu0 %v112
    %3495 = vmatprep.subr.mxu0 %v117
    %3496 = vmatpush1.msra.mxu0 %v116
    %3497 = vmatprep.subr.mxu0 %v121
    %3498 = vmatpush1.msra.mxu0 %v120
    %3499 = vmatprep.subr.mxu0 %v125
    %3500 = vmatpush1.msra.mxu0 %v124
    %3501 = vmatprep.subr.mxu0 %v129
    %3502 = vmatpush1.msra.mxu0 %v128
    %3503 = vmatprep.subr.mxu0 %v133
    %3504 = vmatpush1.msra.mxu0 %v132
    %3505 = vmatprep.subr.mxu0 %v137
    %3506 = vmatpush1.msra.mxu0 %v136
    %3507 = vmatprep.subr.mxu0 %v141
    %3508 = vmatpush1.msra.mxu0 %v140
    %3509 = vmatprep.subr.mxu0 %v145
    %3510 = vmatpush1.msra.mxu0 %v144
    %3511 = vmatprep.subr.mxu0 %v149
    %3512 = vmatpush1.msra.mxu0 %v148
    %3513 = vmatprep.subr.mxu0 %v153
    %3514 = vmatpush1.msra.mxu0 %v152
    %3515 = vmatprep.subr.mxu0 %v157
    %3516 = vmatpush1.msra.mxu0 %v156
    %3517 = vmatprep.subr.mxu0 %v161
    %3518 = vmatpush1.msra.mxu0 %v160
    %3519 = vmatprep.subr.mxu0 %v165
    %3520 = vmatpush1.msra.mxu0 %v164
    %3521 = vmatprep.subr.mxu0 %v169
    %3522 = vmatpush1.msra.mxu0 %v168
    %3523 = vmatprep.subr.mxu0 0.0
    %3524 = vmatpush1.msra.mxu0 0.0
    %3525 = vmatprep.subr.mxu0 0.0
    %3526 = vmatpush1.msra.mxu0 0.0
    %3527 = vmatprep.subr.mxu0 0.0
    %3528 = vmatpush1.msra.mxu0 0.0
    %3529 = vmatprep.subr.mxu0 0.0
    %3530 = vmatpush1.msra.mxu0 0.0
    %3531 = vmatprep.subr.mxu0 0.0
    %3532 = vmatpush1.msra.mxu0 0.0
    %3533 = vmatprep.subr.mxu0 0.0
    %3534 = vmatpush1.msra.mxu0 0.0
    %3535 = vmatprep.subr.mxu0 0.0
    %3536 = vmatpush1.msra.mxu0 0.0
    %3537 = vmatprep.subr.mxu0 0.0
    %3538 = vmatpush1.msra.mxu0 0.0
    %3539 = vmatprep.subr.mxu0 0.0
    %3540 = vmatpush1.msra.mxu0 0.0
    %3541 = vmatprep.subr.mxu0 0.0
    %3542 = vmatpush1.msra.mxu0 0.0
    %3543 = vmatprep.subr.mxu0 0.0
    %3544 = vmatpush1.msra.mxu0 0.0
    %3545 = vmatprep.subr.mxu0 0.0
    %3546 = vmatpush1.msra.mxu0 0.0
    %3547 = vmatprep.subr.mxu0 0.0
    %3548 = vmatpush1.msra.mxu0 0.0
    %3549 = vmatprep.subr.mxu0 0.0
    %3550 = vmatpush1.msra.mxu0 0.0
    %3551 = vmatprep.subr.mxu0 0.0
    %3552 = vmatpush1.msra.mxu0 0.0
    %3553 = vmatprep.subr.mxu0 0.0
    %3554 = vmatpush1.msra.mxu0 0.0
    %3555 = vmatprep.mubr.f32.mxu0 0.0
    %3556 = vmatmul.mubr.f32.gmra.mrb[0].mxu0 %v3176
    %v3557 = vpop.f32.mrb[0].mxu0
    %v3558 = vadd.f32 0.0, %v3557
    %v3559 = vpop.f32.mrb[0].mxu0
    %v3560 = vadd.f32 0.0, %v3559
    %3561 = vdwg.mxu0
    %3562 = vmatprep.subr.mxu0 %v111
    %3563 = vmatpush1.msra.mxu0 %v110
    %3564 = vmatprep.subr.mxu0 %v115
    %3565 = vmatpush1.msra.mxu0 %v114
    %3566 = vmatprep.subr.mxu0 %v119
    %3567 = vmatpush1.msra.mxu0 %v118
    %3568 = vmatprep.subr.mxu0 %v123
    %3569 = vmatpush1.msra.mxu0 %v122
    %3570 = vmatprep.subr.mxu0 %v127
    %3571 = vmatpush1.msra.mxu0 %v126
    %3572 = vmatprep.subr.mxu0 %v131
    %3573 = vmatpush1.msra.mxu0 %v130
    %3574 = vmatprep.subr.mxu0 %v135
    %3575 = vmatpush1.msra.mxu0 %v134
    %3576 = vmatprep.subr.mxu0 %v139
    %3577 = vmatpush1.msra.mxu0 %v138
    %3578 = vmatprep.subr.mxu0 %v143
    %3579 = vmatpush1.msra.mxu0 %v142
    %3580 = vmatprep.subr.mxu0 %v147
    %3581 = vmatpush1.msra.mxu0 %v146
    %3582 = vmatprep.subr.mxu0 %v151
    %3583 = vmatpush1.msra.mxu0 %v150
    %3584 = vmatprep.subr.mxu0 %v155
    %3585 = vmatpush1.msra.mxu0 %v154
    %3586 = vmatprep.subr.mxu0 %v159
    %3587 = vmatpush1.msra.mxu0 %v158
    %3588 = vmatprep.subr.mxu0 %v163
    %3589 = vmatpush1.msra.mxu0 %v162
    %3590 = vmatprep.subr.mxu0 %v167
    %3591 = vmatpush1.msra.mxu0 %v166
    %3592 = vmatprep.subr.mxu0 %v171
    %3593 = vmatpush1.msra.mxu0 %v170
    %3594 = vmatprep.subr.mxu0 0.0
    %3595 = vmatpush1.msra.mxu0 0.0
    %3596 = vmatprep.subr.mxu0 0.0
    %3597 = vmatpush1.msra.mxu0 0.0
    %3598 = vmatprep.subr.mxu0 0.0
    %3599 = vmatpush1.msra.mxu0 0.0
    %3600 = vmatprep.subr.mxu0 0.0
    %3601 = vmatpush1.msra.mxu0 0.0
    %3602 = vmatprep.subr.mxu0 0.0
    %3603 = vmatpush1.msra.mxu0 0.0
    %3604 = vmatprep.subr.mxu0 0.0
    %3605 = vmatpush1.msra.mxu0 0.0
    %3606 = vmatprep.subr.mxu0 0.0
    %3607 = vmatpush1.msra.mxu0 0.0
    %3608 = vmatprep.subr.mxu0 0.0
    %3609 = vmatpush1.msra.mxu0 0.0
    %3610 = vmatprep.subr.mxu0 0.0
    %3611 = vmatpush1.msra.mxu0 0.0
    %3612 = vmatprep.subr.mxu0 0.0
    %3613 = vmatpush1.msra.mxu0 0.0
    %3614 = vmatprep.subr.mxu0 0.0
    %3615 = vmatpush1.msra.mxu0 0.0
    %3616 = vmatprep.subr.mxu0 0.0
    %3617 = vmatpush1.msra.mxu0 0.0
    %3618 = vmatprep.subr.mxu0 0.0
    %3619 = vmatpush1.msra.mxu0 0.0
    %3620 = vmatprep.subr.mxu0 0.0
    %3621 = vmatpush1.msra.mxu0 0.0
    %3622 = vmatprep.subr.mxu0 0.0
    %3623 = vmatpush1.msra.mxu0 0.0
    %3624 = vmatprep.subr.mxu0 0.0
    %3625 = vmatpush1.msra.mxu0 0.0
    %3626 = vmatprep.mubr.f32.mxu0 0.0
    %3627 = vmatmul.mubr.f32.gmra.mrb[0].mxu0 %v3176
    %v3628 = vpop.f32.mrb[0].mxu0
    %v3629 = vadd.f32 0.0, %v3628
    %v3630 = vpop.f32.mrb[0].mxu0
    %v3631 = vadd.f32 0.0, %v3630
    %3632 = vdwg.mxu0
    %v3634 = vsel %vm445, %v3490, 0
    %3636 = vmatprep.subr.mxu0 %v101
    %3637 = vmatpush1.msra.mxu0 %v100
    %3638 = vmatprep.subr.mxu0 %v105
    %3639 = vmatpush1.msra.mxu0 %v104
    %3640 = vmatprep.subr.mxu0 0.0
    %3641 = vmatpush1.msra.mxu0 0.0
    %3642 = vmatprep.subr.mxu0 0.0
    %3643 = vmatpush1.msra.mxu0 0.0
    %3644 = vmatprep.subr.mxu0 0.0
    %3645 = vmatpush1.msra.mxu0 0.0
    %3646 = vmatprep.subr.mxu0 0.0
    %3647 = vmatpush1.msra.mxu0 0.0
    %3648 = vmatprep.subr.mxu0 0.0
    %3649 = vmatpush1.msra.mxu0 0.0
    %3650 = vmatprep.subr.mxu0 0.0
    %3651 = vmatpush1.msra.mxu0 0.0
    %3652 = vmatprep.subr.mxu0 0.0
    %3653 = vmatpush1.msra.mxu0 0.0
    %3654 = vmatprep.subr.mxu0 0.0
    %3655 = vmatpush1.msra.mxu0 0.0
    %3656 = vmatprep.subr.mxu0 0.0
    %3657 = vmatpush1.msra.mxu0 0.0
    %3658 = vmatprep.subr.mxu0 0.0
    %3659 = vmatpush1.msra.mxu0 0.0
    %3660 = vmatprep.subr.mxu0 0.0
    %3661 = vmatpush1.msra.mxu0 0.0
    %3662 = vmatprep.subr.mxu0 0.0
    %3663 = vmatpush1.msra.mxu0 0.0
    %3664 = vmatprep.subr.mxu0 0.0
    %3665 = vmatpush1.msra.mxu0 0.0
    %3666 = vmatprep.subr.mxu0 0.0
    %3667 = vmatpush1.msra.mxu0 0.0
    %3668 = vmatprep.subr.mxu0 0.0
    %3669 = vmatpush1.msra.mxu0 0.0
    %3670 = vmatprep.subr.mxu0 0.0
    %3671 = vmatpush1.msra.mxu0 0.0
    %3672 = vmatprep.subr.mxu0 0.0
    %3673 = vmatpush1.msra.mxu0 0.0
    %3674 = vmatprep.subr.mxu0 0.0
    %3675 = vmatpush1.msra.mxu0 0.0
    %3676 = vmatprep.subr.mxu0 0.0
    %3677 = vmatpush1.msra.mxu0 0.0
    %3678 = vmatprep.subr.mxu0 0.0
    %3679 = vmatpush1.msra.mxu0 0.0
    %3680 = vmatprep.subr.mxu0 0.0
    %3681 = vmatpush1.msra.mxu0 0.0
    %3682 = vmatprep.subr.mxu0 0.0
    %3683 = vmatpush1.msra.mxu0 0.0
    %3684 = vmatprep.subr.mxu0 0.0
    %3685 = vmatpush1.msra.mxu0 0.0
    %3686 = vmatprep.subr.mxu0 0.0
    %3687 = vmatpush1.msra.mxu0 0.0
    %3688 = vmatprep.subr.mxu0 0.0
    %3689 = vmatpush1.msra.mxu0 0.0
    %3690 = vmatprep.subr.mxu0 0.0
    %3691 = vmatpush1.msra.mxu0 0.0
    %3692 = vmatprep.subr.mxu0 0.0
    %3693 = vmatpush1.msra.mxu0 0.0
    %3694 = vmatprep.subr.mxu0 0.0
    %3695 = vmatpush1.msra.mxu0 0.0
    %3696 = vmatprep.subr.mxu0 0.0
    %3697 = vmatpush1.msra.mxu0 0.0
    %3698 = vmatprep.subr.mxu0 0.0
    %3699 = vmatpush1.msra.mxu0 0.0
    %3700 = vmatprep.mubr.f32.mxu0 0.0
    %3701 = vmatmul.mubr.f32.gmra.mrb[0].mxu0 %v3634
    %v3702 = vpop.f32.mrb[0].mxu0
    %v3703 = vadd.f32 %v3558, %v3702
    %v3704 = vpop.f32.mrb[0].mxu0
    %v3705 = vadd.f32 %v3560, %v3704
    %3706 = vdwg.mxu0
    %3707 = vmatprep.subr.mxu0 %v103
    %3708 = vmatpush1.msra.mxu0 %v102
    %3709 = vmatprep.subr.mxu0 %v107
    %3710 = vmatpush1.msra.mxu0 %v106
    %3711 = vmatprep.subr.mxu0 0.0
    %3712 = vmatpush1.msra.mxu0 0.0
    %3713 = vmatprep.subr.mxu0 0.0
    %3714 = vmatpush1.msra.mxu0 0.0
    %3715 = vmatprep.subr.mxu0 0.0
    %3716 = vmatpush1.msra.mxu0 0.0
    %3717 = vmatprep.subr.mxu0 0.0
    %3718 = vmatpush1.msra.mxu0 0.0
    %3719 = vmatprep.subr.mxu0 0.0
    %3720 = vmatpush1.msra.mxu0 0.0
    %3721 = vmatprep.subr.mxu0 0.0
    %3722 = vmatpush1.msra.mxu0 0.0
    %3723 = vmatprep.subr.mxu0 0.0
    %3724 = vmatpush1.msra.mxu0 0.0
    %3725 = vmatprep.subr.mxu0 0.0
    %3726 = vmatpush1.msra.mxu0 0.0
    %3727 = vmatprep.subr.mxu0 0.0
    %3728 = vmatpush1.msra.mxu0 0.0
    %3729 = vmatprep.subr.mxu0 0.0
    %3730 = vmatpush1.msra.mxu0 0.0
    %3731 = vmatprep.subr.mxu0 0.0
    %3732 = vmatpush1.msra.mxu0 0.0
    %3733 = vmatprep.subr.mxu0 0.0
    %3734 = vmatpush1.msra.mxu0 0.0
    %3735 = vmatprep.subr.mxu0 0.0
    %3736 = vmatpush1.msra.mxu0 0.0
    %3737 = vmatprep.subr.mxu0 0.0
    %3738 = vmatpush1.msra.mxu0 0.0
    %3739 = vmatprep.subr.mxu0 0.0
    %3740 = vmatpush1.msra.mxu0 0.0
    %3741 = vmatprep.subr.mxu0 0.0
    %3742 = vmatpush1.msra.mxu0 0.0
    %3743 = vmatprep.subr.mxu0 0.0
    %3744 = vmatpush1.msra.mxu0 0.0
    %3745 = vmatprep.subr.mxu0 0.0
    %3746 = vmatpush1.msra.mxu0 0.0
    %3747 = vmatprep.subr.mxu0 0.0
    %3748 = vmatpush1.msra.mxu0 0.0
    %3749 = vmatprep.subr.mxu0 0.0
    %3750 = vmatpush1.msra.mxu0 0.0
    %3751 = vmatprep.subr.mxu0 0.0
    %3752 = vmatpush1.msra.mxu0 0.0
    %3753 = vmatprep.subr.mxu0 0.0
    %3754 = vmatpush1.msra.mxu0 0.0
    %3755 = vmatprep.subr.mxu0 0.0
    %3756 = vmatpush1.msra.mxu0 0.0
    %3757 = vmatprep.subr.mxu0 0.0
    %3758 = vmatpush1.msra.mxu0 0.0
    %3759 = vmatprep.subr.mxu0 0.0
    %3760 = vmatpush1.msra.mxu0 0.0
    %3761 = vmatprep.subr.mxu0 0.0
    %3762 = vmatpush1.msra.mxu0 0.0
    %3763 = vmatprep.subr.mxu0 0.0
    %3764 = vmatpush1.msra.mxu0 0.0
    %3765 = vmatprep.subr.mxu0 0.0
    %3766 = vmatpush1.msra.mxu0 0.0
    %3767 = vmatprep.subr.mxu0 0.0
    %3768 = vmatpush1.msra.mxu0 0.0
    %3769 = vmatprep.subr.mxu0 0.0
    %3770 = vmatpush1.msra.mxu0 0.0
    %3771 = vmatprep.mubr.f32.mxu0 0.0
    %3772 = vmatmul.mubr.f32.gmra.mrb[0].mxu0 %v3634
    %v3773 = vpop.f32.mrb[0].mxu0
    %v3774 = vadd.f32 %v3629, %v3773
    %v3775 = vpop.f32.mrb[0].mxu0
    %v3776 = vadd.f32 %v3631, %v3775
    %3777 = vdwg.mxu0
    %v3778 = vadd.f32 %v3703, %v595
    %v3779 = vadd.f32 %v3705, %v599
    %v3780 = vadd.f32 %v3774, %v603
    %v3781 = vadd.f32 %v3776, %v607
    %v3782 = vxor.u32 %v3778, 2147483648
    %v3783 = vmul.f32 %v3782, 1.442695
    %v3784 = vpow.pop %v3783
    %v3785 = vadd.f32 %v3784, 1.0
    %v3786 = vrcp.pop %v3785
    %v3787 = vmul.f32 1.0, %v3786
    %v3788 = vxor.u32 %v3779, 2147483648
    %v3789 = vmul.f32 %v3788, 1.442695
    %v3790 = vpow.pop %v3789
    %v3791 = vadd.f32 %v3790, 1.0
    %v3792 = vrcp.pop %v3791
    %v3793 = vmul.f32 1.0, %v3792
    %v3794 = vtanh.pop %v3780
    %v3795 = vxor.u32 %v3781, 2147483648
    %v3796 = vmul.f32 %v3795, 1.442695
    %v3797 = vpow.pop %v3796
    %v3798 = vadd.f32 %v3797, 1.0
    %v3799 = vrcp.pop %v3798
    %v3800 = vmul.f32 1.0, %v3799
    %v3801 = vmul.f32 %v3793, %v3174
    %v3802 = vmul.f32 %v3787, %v3794
    %v3803 = vadd.f32 %v3801, %v3802
    %v3804 = vtanh.pop %v3803
    %v3805 = vmul.f32 %v3800, %v3804
    %3806 = vmatprep.subr.mxu0 %v238
    %3807 = vmatpush1.msra.mxu0 %v237
    %3808 = vmatprep.subr.mxu0 %v242
    %3809 = vmatpush1.msra.mxu0 %v241
    %3810 = vmatprep.subr.mxu0 %v246
    %3811 = vmatpush1.msra.mxu0 %v245
    %3812 = vmatprep.subr.mxu0 %v250
    %3813 = vmatpush1.msra.mxu0 %v249
    %3814 = vmatprep.subr.mxu0 %v254
    %3815 = vmatpush1.msra.mxu0 %v253
    %3816 = vmatprep.subr.mxu0 %v258
    %3817 = vmatpush1.msra.mxu0 %v257
    %3818 = vmatprep.subr.mxu0 %v262
    %3819 = vmatpush1.msra.mxu0 %v261
    %3820 = vmatprep.subr.mxu0 %v266
    %3821 = vmatpush1.msra.mxu0 %v265
    %3822 = vmatprep.subr.mxu0 %v270
    %3823 = vmatpush1.msra.mxu0 %v269
    %3824 = vmatprep.subr.mxu0 %v274
    %3825 = vmatpush1.msra.mxu0 %v273
    %3826 = vmatprep.subr.mxu0 %v278
    %3827 = vmatpush1.msra.mxu0 %v277
    %3828 = vmatprep.subr.mxu0 %v282
    %3829 = vmatpush1.msra.mxu0 %v281
    %3830 = vmatprep.subr.mxu0 %v286
    %3831 = vmatpush1.msra.mxu0 %v285
    %3832 = vmatprep.subr.mxu0 %v290
    %3833 = vmatpush1.msra.mxu0 %v289
    %3834 = vmatprep.subr.mxu0 %v294
    %3835 = vmatpush1.msra.mxu0 %v293
    %3836 = vmatprep.subr.mxu0 %v298
    %3837 = vmatpush1.msra.mxu0 %v297
    %3838 = vmatprep.subr.mxu0 0.0
    %3839 = vmatpush1.msra.mxu0 0.0
    %3840 = vmatprep.subr.mxu0 0.0
    %3841 = vmatpush1.msra.mxu0 0.0
    %3842 = vmatprep.subr.mxu0 0.0
    %3843 = vmatpush1.msra.mxu0 0.0
    %3844 = vmatprep.subr.mxu0 0.0
    %3845 = vmatpush1.msra.mxu0 0.0
    %3846 = vmatprep.subr.mxu0 0.0
    %3847 = vmatpush1.msra.mxu0 0.0
    %3848 = vmatprep.subr.mxu0 0.0
    %3849 = vmatpush1.msra.mxu0 0.0
    %3850 = vmatprep.subr.mxu0 0.0
    %3851 = vmatpush1.msra.mxu0 0.0
    %3852 = vmatprep.subr.mxu0 0.0
    %3853 = vmatpush1.msra.mxu0 0.0
    %3854 = vmatprep.subr.mxu0 0.0
    %3855 = vmatpush1.msra.mxu0 0.0
    %3856 = vmatprep.subr.mxu0 0.0
    %3857 = vmatpush1.msra.mxu0 0.0
    %3858 = vmatprep.subr.mxu0 0.0
    %3859 = vmatpush1.msra.mxu0 0.0
    %3860 = vmatprep.subr.mxu0 0.0
    %3861 = vmatpush1.msra.mxu0 0.0
    %3862 = vmatprep.subr.mxu0 0.0
    %3863 = vmatpush1.msra.mxu0 0.0
    %3864 = vmatprep.subr.mxu0 0.0
    %3865 = vmatpush1.msra.mxu0 0.0
    %3866 = vmatprep.subr.mxu0 0.0
    %3867 = vmatpush1.msra.mxu0 0.0
    %3868 = vmatprep.subr.mxu0 0.0
    %3869 = vmatpush1.msra.mxu0 0.0
    %3870 = vmatprep.mubr.f32.mxu0 0.0
    %3871 = vmatmul.mubr.f32.gmra.mrb[0].mxu0 %v3488
    %v3872 = vpop.f32.mrb[0].mxu0
    %v3873 = vadd.f32 0.0, %v3872
    %v3874 = vpop.f32.mrb[0].mxu0
    %v3875 = vadd.f32 0.0, %v3874
    %3876 = vdwg.mxu0
    %3877 = vmatprep.subr.mxu0 %v240
    %3878 = vmatpush1.msra.mxu0 %v239
    %3879 = vmatprep.subr.mxu0 %v244
    %3880 = vmatpush1.msra.mxu0 %v243
    %3881 = vmatprep.subr.mxu0 %v248
    %3882 = vmatpush1.msra.mxu0 %v247
    %3883 = vmatprep.subr.mxu0 %v252
    %3884 = vmatpush1.msra.mxu0 %v251
    %3885 = vmatprep.subr.mxu0 %v256
    %3886 = vmatpush1.msra.mxu0 %v255
    %3887 = vmatprep.subr.mxu0 %v260
    %3888 = vmatpush1.msra.mxu0 %v259
    %3889 = vmatprep.subr.mxu0 %v264
    %3890 = vmatpush1.msra.mxu0 %v263
    %3891 = vmatprep.subr.mxu0 %v268
    %3892 = vmatpush1.msra.mxu0 %v267
    %3893 = vmatprep.subr.mxu0 %v272
    %3894 = vmatpush1.msra.mxu0 %v271
    %3895 = vmatprep.subr.mxu0 %v276
    %3896 = vmatpush1.msra.mxu0 %v275
    %3897 = vmatprep.subr.mxu0 %v280
    %3898 = vmatpush1.msra.mxu0 %v279
    %3899 = vmatprep.subr.mxu0 %v284
    %3900 = vmatpush1.msra.mxu0 %v283
    %3901 = vmatprep.subr.mxu0 %v288
    %3902 = vmatpush1.msra.mxu0 %v287
    %3903 = vmatprep.subr.mxu0 %v292
    %3904 = vmatpush1.msra.mxu0 %v291
    %3905 = vmatprep.subr.mxu0 %v296
    %3906 = vmatpush1.msra.mxu0 %v295
    %3907 = vmatprep.subr.mxu0 %v300
    %3908 = vmatpush1.msra.mxu0 %v299
    %3909 = vmatprep.subr.mxu0 0.0
    %3910 = vmatpush1.msra.mxu0 0.0
    %3911 = vmatprep.subr.mxu0 0.0
    %3912 = vmatpush1.msra.mxu0 0.0
    %3913 = vmatprep.subr.mxu0 0.0
    %3914 = vmatpush1.msra.mxu0 0.0
    %3915 = vmatprep.subr.mxu0 0.0
    %3916 = vmatpush1.msra.mxu0 0.0
    %3917 = vmatprep.subr.mxu0 0.0
    %3918 = vmatpush1.msra.mxu0 0.0
    %3919 = vmatprep.subr.mxu0 0.0
    %3920 = vmatpush1.msra.mxu0 0.0
    %3921 = vmatprep.subr.mxu0 0.0
    %3922 = vmatpush1.msra.mxu0 0.0
    %3923 = vmatprep.subr.mxu0 0.0
    %3924 = vmatpush1.msra.mxu0 0.0
    %3925 = vmatprep.subr.mxu0 0.0
    %3926 = vmatpush1.msra.mxu0 0.0
    %3927 = vmatprep.subr.mxu0 0.0
    %3928 = vmatpush1.msra.mxu0 0.0
    %3929 = vmatprep.subr.mxu0 0.0
    %3930 = vmatpush1.msra.mxu0 0.0
    %3931 = vmatprep.subr.mxu0 0.0
    %3932 = vmatpush1.msra.mxu0 0.0
    %3933 = vmatprep.subr.mxu0 0.0
    %3934 = vmatpush1.msra.mxu0 0.0
    %3935 = vmatprep.subr.mxu0 0.0
    %3936 = vmatpush1.msra.mxu0 0.0
    %3937 = vmatprep.subr.mxu0 0.0
    %3938 = vmatpush1.msra.mxu0 0.0
    %3939 = vmatprep.subr.mxu0 0.0
    %3940 = vmatpush1.msra.mxu0 0.0
    %3941 = vmatprep.mubr.f32.mxu0 0.0
    %3942 = vmatmul.mubr.f32.gmra.mrb[0].mxu0 %v3488
    %v3943 = vpop.f32.mrb[0].mxu0
    %v3944 = vadd.f32 0.0, %v3943
    %v3945 = vpop.f32.mrb[0].mxu0
    %v3946 = vadd.f32 0.0, %v3945
    %3947 = vdwg.mxu0
    %3948 = vmatprep.subr.mxu0 %v174
    %3949 = vmatpush1.msra.mxu0 %v173
    %3950 = vmatprep.subr.mxu0 %v178
    %3951 = vmatpush1.msra.mxu0 %v177
    %3952 = vmatprep.subr.mxu0 %v182
    %3953 = vmatpush1.msra.mxu0 %v181
    %3954 = vmatprep.subr.mxu0 %v186
    %3955 = vmatpush1.msra.mxu0 %v185
    %3956 = vmatprep.subr.mxu0 %v190
    %3957 = vmatpush1.msra.mxu0 %v189
    %3958 = vmatprep.subr.mxu0 %v194
    %3959 = vmatpush1.msra.mxu0 %v193
    %3960 = vmatprep.subr.mxu0 %v198
    %3961 = vmatpush1.msra.mxu0 %v197
    %3962 = vmatprep.subr.mxu0 %v202
    %3963 = vmatpush1.msra.mxu0 %v201
    %3964 = vmatprep.subr.mxu0 %v206
    %3965 = vmatpush1.msra.mxu0 %v205
    %3966 = vmatprep.subr.mxu0 %v210
    %3967 = vmatpush1.msra.mxu0 %v209
    %3968 = vmatprep.subr.mxu0 %v214
    %3969 = vmatpush1.msra.mxu0 %v213
    %3970 = vmatprep.subr.mxu0 %v218
    %3971 = vmatpush1.msra.mxu0 %v217
    %3972 = vmatprep.subr.mxu0 %v222
    %3973 = vmatpush1.msra.mxu0 %v221
    %3974 = vmatprep.subr.mxu0 %v226
    %3975 = vmatpush1.msra.mxu0 %v225
    %3976 = vmatprep.subr.mxu0 %v230
    %3977 = vmatpush1.msra.mxu0 %v229
    %3978 = vmatprep.subr.mxu0 %v234
    %3979 = vmatpush1.msra.mxu0 %v233
    %3980 = vmatprep.subr.mxu0 0.0
    %3981 = vmatpush1.msra.mxu0 0.0
    %3982 = vmatprep.subr.mxu0 0.0
    %3983 = vmatpush1.msra.mxu0 0.0
    %3984 = vmatprep.subr.mxu0 0.0
    %3985 = vmatpush1.msra.mxu0 0.0
    %3986 = vmatprep.subr.mxu0 0.0
    %3987 = vmatpush1.msra.mxu0 0.0
    %3988 = vmatprep.subr.mxu0 0.0
    %3989 = vmatpush1.msra.mxu0 0.0
    %3990 = vmatprep.subr.mxu0 0.0
    %3991 = vmatpush1.msra.mxu0 0.0
    %3992 = vmatprep.subr.mxu0 0.0
    %3993 = vmatpush1.msra.mxu0 0.0
    %3994 = vmatprep.subr.mxu0 0.0
    %3995 = vmatpush1.msra.mxu0 0.0
    %3996 = vmatprep.subr.mxu0 0.0
    %3997 = vmatpush1.msra.mxu0 0.0
    %3998 = vmatprep.subr.mxu0 0.0
    %3999 = vmatpush1.msra.mxu0 0.0
    %4000 = vmatprep.subr.mxu0 0.0
    %4001 = vmatpush1.msra.mxu0 0.0
    %4002 = vmatprep.subr.mxu0 0.0
    %4003 = vmatpush1.msra.mxu0 0.0
    %4004 = vmatprep.subr.mxu0 0.0
    %4005 = vmatpush1.msra.mxu0 0.0
    %4006 = vmatprep.subr.mxu0 0.0
    %4007 = vmatpush1.msra.mxu0 0.0
    %4008 = vmatprep.subr.mxu0 0.0
    %4009 = vmatpush1.msra.mxu0 0.0
    %4010 = vmatprep.subr.mxu0 0.0
    %4011 = vmatpush1.msra.mxu0 0.0
    %4012 = vmatprep.mubr.f32.mxu0 0.0
    %4013 = vmatmul.mubr.f32.gmra.mrb[0].mxu0 %v3805
    %v4014 = vpop.f32.mrb[0].mxu0
    %v4015 = vadd.f32 %v3873, %v4014
    %v4016 = vpop.f32.mrb[0].mxu0
    %v4017 = vadd.f32 %v3875, %v4016
    %4018 = vdwg.mxu0
    %4019 = vmatprep.subr.mxu0 %v176
    %4020 = vmatpush1.msra.mxu0 %v175
    %4021 = vmatprep.subr.mxu0 %v180
    %4022 = vmatpush1.msra.mxu0 %v179
    %4023 = vmatprep.subr.mxu0 %v184
    %4024 = vmatpush1.msra.mxu0 %v183
    %4025 = vmatprep.subr.mxu0 %v188
    %4026 = vmatpush1.msra.mxu0 %v187
    %4027 = vmatprep.subr.mxu0 %v192
    %4028 = vmatpush1.msra.mxu0 %v191
    %4029 = vmatprep.subr.mxu0 %v196
    %4030 = vmatpush1.msra.mxu0 %v195
    %4031 = vmatprep.subr.mxu0 %v200
    %4032 = vmatpush1.msra.mxu0 %v199
    %4033 = vmatprep.subr.mxu0 %v204
    %4034 = vmatpush1.msra.mxu0 %v203
    %4035 = vmatprep.subr.mxu0 %v208
    %4036 = vmatpush1.msra.mxu0 %v207
    %4037 = vmatprep.subr.mxu0 %v212
    %4038 = vmatpush1.msra.mxu0 %v211
    %4039 = vmatprep.subr.mxu0 %v216
    %4040 = vmatpush1.msra.mxu0 %v215
    %4041 = vmatprep.subr.mxu0 %v220
    %4042 = vmatpush1.msra.mxu0 %v219
    %4043 = vmatprep.subr.mxu0 %v224
    %4044 = vmatpush1.msra.mxu0 %v223
    %4045 = vmatprep.subr.mxu0 %v228
    %4046 = vmatpush1.msra.mxu0 %v227
    %4047 = vmatprep.subr.mxu0 %v232
    %4048 = vmatpush1.msra.mxu0 %v231
    %4049 = vmatprep.subr.mxu0 %v236
    %4050 = vmatpush1.msra.mxu0 %v235
    %4051 = vmatprep.subr.mxu0 0.0
    %4052 = vmatpush1.msra.mxu0 0.0
    %4053 = vmatprep.subr.mxu0 0.0
    %4054 = vmatpush1.msra.mxu0 0.0
    %4055 = vmatprep.subr.mxu0 0.0
    %4056 = vmatpush1.msra.mxu0 0.0
    %4057 = vmatprep.subr.mxu0 0.0
    %4058 = vmatpush1.msra.mxu0 0.0
    %4059 = vmatprep.subr.mxu0 0.0
    %4060 = vmatpush1.msra.mxu0 0.0
    %4061 = vmatprep.subr.mxu0 0.0
    %4062 = vmatpush1.msra.mxu0 0.0
    %4063 = vmatprep.subr.mxu0 0.0
    %4064 = vmatpush1.msra.mxu0 0.0
    %4065 = vmatprep.subr.mxu0 0.0
    %4066 = vmatpush1.msra.mxu0 0.0
    %4067 = vmatprep.subr.mxu0 0.0
    %4068 = vmatpush1.msra.mxu0 0.0
    %4069 = vmatprep.subr.mxu0 0.0
    %4070 = vmatpush1.msra.mxu0 0.0
    %4071 = vmatprep.subr.mxu0 0.0
    %4072 = vmatpush1.msra.mxu0 0.0
    %4073 = vmatprep.subr.mxu0 0.0
    %4074 = vmatpush1.msra.mxu0 0.0
    %4075 = vmatprep.subr.mxu0 0.0
    %4076 = vmatpush1.msra.mxu0 0.0
    %4077 = vmatprep.subr.mxu0 0.0
    %4078 = vmatpush1.msra.mxu0 0.0
    %4079 = vmatprep.subr.mxu0 0.0
    %4080 = vmatpush1.msra.mxu0 0.0
    %4081 = vmatprep.subr.mxu0 0.0
    %4082 = vmatpush1.msra.mxu0 0.0
    %4083 = vmatprep.mubr.f32.mxu0 0.0
    %4084 = vmatmul.mubr.f32.gmra.mrb[0].mxu0 %v3805
    %v4085 = vpop.f32.mrb[0].mxu0
    %v4086 = vadd.f32 %v3944, %v4085
    %v4087 = vpop.f32.mrb[0].mxu0
    %v4088 = vadd.f32 %v3946, %v4087
    %4089 = vdwg.mxu0
    %v4090 = vadd.f32 %v4015, %v928
    %v4091 = vadd.f32 %v4017, %v932
    %v4092 = vadd.f32 %v4086, %v936
    %v4093 = vadd.f32 %v4088, %v940
    %v4094 = vxor.u32 %v4090, 2147483648
    %v4095 = vmul.f32 %v4094, 1.442695
    %v4096 = vpow.pop %v4095
    %v4097 = vadd.f32 %v4096, 1.0
    %v4098 = vrcp.pop %v4097
    %v4099 = vmul.f32 1.0, %v4098
    %v4100 = vxor.u32 %v4091, 2147483648
    %v4101 = vmul.f32 %v4100, 1.442695
    %v4102 = vpow.pop %v4101
    %v4103 = vadd.f32 %v4102, 1.0
    %v4104 = vrcp.pop %v4103
    %v4105 = vmul.f32 1.0, %v4104
    %v4106 = vtanh.pop %v4092
    %v4107 = vxor.u32 %v4093, 2147483648
    %v4108 = vmul.f32 %v4107, 1.442695
    %v4109 = vpow.pop %v4108
    %v4110 = vadd.f32 %v4109, 1.0
    %v4111 = vrcp.pop %v4110
    %v4112 = vmul.f32 1.0, %v4111
    %v4113 = vmul.f32 %v4105, %v3486
    %v4114 = vmul.f32 %v4099, %v4106
    %v4115 = vadd.f32 %v4113, %v4114
    %v4116 = vtanh.pop %v4115
    %v4117 = vmul.f32 %v4112, %v4116
    %s4118 = scalar_lea.vmem %s0, 12
    %v4119 = vld [vmem:[%s4118] sm:$0x3]
    %4120 = vmatprep.subr.mxu0 %v109
    %4121 = vmatpush1.msra.mxu0 %v108
    %4122 = vmatprep.subr.mxu0 %v113
    %4123 = vmatpush1.msra.mxu0 %v112
    %4124 = vmatprep.subr.mxu0 %v117
    %4125 = vmatpush1.msra.mxu0 %v116
    %4126 = vmatprep.subr.mxu0 %v121
    %4127 = vmatpush1.msra.mxu0 %v120
    %4128 = vmatprep.subr.mxu0 %v125
    %4129 = vmatpush1.msra.mxu0 %v124
    %4130 = vmatprep.subr.mxu0 %v129
    %4131 = vmatpush1.msra.mxu0 %v128
    %4132 = vmatprep.subr.mxu0 %v133
    %4133 = vmatpush1.msra.mxu0 %v132
    %4134 = vmatprep.subr.mxu0 %v137
    %4135 = vmatpush1.msra.mxu0 %v136
    %4136 = vmatprep.subr.mxu0 %v141
    %4137 = vmatpush1.msra.mxu0 %v140
    %4138 = vmatprep.subr.mxu0 %v145
    %4139 = vmatpush1.msra.mxu0 %v144
    %4140 = vmatprep.subr.mxu0 %v149
    %4141 = vmatpush1.msra.mxu0 %v148
    %4142 = vmatprep.subr.mxu0 %v153
    %4143 = vmatpush1.msra.mxu0 %v152
    %4144 = vmatprep.subr.mxu0 %v157
    %4145 = vmatpush1.msra.mxu0 %v156
    %4146 = vmatprep.subr.mxu0 %v161
    %4147 = vmatpush1.msra.mxu0 %v160
    %4148 = vmatprep.subr.mxu0 %v165
    %4149 = vmatpush1.msra.mxu0 %v164
    %4150 = vmatprep.subr.mxu0 %v169
    %4151 = vmatpush1.msra.mxu0 %v168
    %4152 = vmatprep.subr.mxu0 0.0
    %4153 = vmatpush1.msra.mxu0 0.0
    %4154 = vmatprep.subr.mxu0 0.0
    %4155 = vmatpush1.msra.mxu0 0.0
    %4156 = vmatprep.subr.mxu0 0.0
    %4157 = vmatpush1.msra.mxu0 0.0
    %4158 = vmatprep.subr.mxu0 0.0
    %4159 = vmatpush1.msra.mxu0 0.0
    %4160 = vmatprep.subr.mxu0 0.0
    %4161 = vmatpush1.msra.mxu0 0.0
    %4162 = vmatprep.subr.mxu0 0.0
    %4163 = vmatpush1.msra.mxu0 0.0
    %4164 = vmatprep.subr.mxu0 0.0
    %4165 = vmatpush1.msra.mxu0 0.0
    %4166 = vmatprep.subr.mxu0 0.0
    %4167 = vmatpush1.msra.mxu0 0.0
    %4168 = vmatprep.subr.mxu0 0.0
    %4169 = vmatpush1.msra.mxu0 0.0
    %4170 = vmatprep.subr.mxu0 0.0
    %4171 = vmatpush1.msra.mxu0 0.0
    %4172 = vmatprep.subr.mxu0 0.0
    %4173 = vmatpush1.msra.mxu0 0.0
    %4174 = vmatprep.subr.mxu0 0.0
    %4175 = vmatpush1.msra.mxu0 0.0
    %4176 = vmatprep.subr.mxu0 0.0
    %4177 = vmatpush1.msra.mxu0 0.0
    %4178 = vmatprep.subr.mxu0 0.0
    %4179 = vmatpush1.msra.mxu0 0.0
    %4180 = vmatprep.subr.mxu0 0.0
    %4181 = vmatpush1.msra.mxu0 0.0
    %4182 = vmatprep.subr.mxu0 0.0
    %4183 = vmatpush1.msra.mxu0 0.0
    %4184 = vmatprep.mubr.f32.mxu0 0.0
    %4185 = vmatmul.mubr.f32.gmra.mrb[0].mxu0 %v3805
    %v4186 = vpop.f32.mrb[0].mxu0
    %v4187 = vadd.f32 0.0, %v4186
    %v4188 = vpop.f32.mrb[0].mxu0
    %v4189 = vadd.f32 0.0, %v4188
    %4190 = vdwg.mxu0
    %4191 = vmatprep.subr.mxu0 %v111
    %4192 = vmatpush1.msra.mxu0 %v110
    %4193 = vmatprep.subr.mxu0 %v115
    %4194 = vmatpush1.msra.mxu0 %v114
    %4195 = vmatprep.subr.mxu0 %v119
    %4196 = vmatpush1.msra.mxu0 %v118
    %4197 = vmatprep.subr.mxu0 %v123
    %4198 = vmatpush1.msra.mxu0 %v122
    %4199 = vmatprep.subr.mxu0 %v127
    %4200 = vmatpush1.msra.mxu0 %v126
    %4201 = vmatprep.subr.mxu0 %v131
    %4202 = vmatpush1.msra.mxu0 %v130
    %4203 = vmatprep.subr.mxu0 %v135
    %4204 = vmatpush1.msra.mxu0 %v134
    %4205 = vmatprep.subr.mxu0 %v139
    %4206 = vmatpush1.msra.mxu0 %v138
    %4207 = vmatprep.subr.mxu0 %v143
    %4208 = vmatpush1.msra.mxu0 %v142
    %4209 = vmatprep.subr.mxu0 %v147
    %4210 = vmatpush1.msra.mxu0 %v146
    %4211 = vmatprep.subr.mxu0 %v151
    %4212 = vmatpush1.msra.mxu0 %v150
    %4213 = vmatprep.subr.mxu0 %v155
    %4214 = vmatpush1.msra.mxu0 %v154
    %4215 = vmatprep.subr.mxu0 %v159
    %4216 = vmatpush1.msra.mxu0 %v158
    %4217 = vmatprep.subr.mxu0 %v163
    %4218 = vmatpush1.msra.mxu0 %v162
    %4219 = vmatprep.subr.mxu0 %v167
    %4220 = vmatpush1.msra.mxu0 %v166
    %4221 = vmatprep.subr.mxu0 %v171
    %4222 = vmatpush1.msra.mxu0 %v170
    %4223 = vmatprep.subr.mxu0 0.0
    %4224 = vmatpush1.msra.mxu0 0.0
    %4225 = vmatprep.subr.mxu0 0.0
    %4226 = vmatpush1.msra.mxu0 0.0
    %4227 = vmatprep.subr.mxu0 0.0
    %4228 = vmatpush1.msra.mxu0 0.0
    %4229 = vmatprep.subr.mxu0 0.0
    %4230 = vmatpush1.msra.mxu0 0.0
    %4231 = vmatprep.subr.mxu0 0.0
    %4232 = vmatpush1.msra.mxu0 0.0
    %4233 = vmatprep.subr.mxu0 0.0
    %4234 = vmatpush1.msra.mxu0 0.0
    %4235 = vmatprep.subr.mxu0 0.0
    %4236 = vmatpush1.msra.mxu0 0.0
    %4237 = vmatprep.subr.mxu0 0.0
    %4238 = vmatpush1.msra.mxu0 0.0
    %4239 = vmatprep.subr.mxu0 0.0
    %4240 = vmatpush1.msra.mxu0 0.0
    %4241 = vmatprep.subr.mxu0 0.0
    %4242 = vmatpush1.msra.mxu0 0.0
    %4243 = vmatprep.subr.mxu0 0.0
    %4244 = vmatpush1.msra.mxu0 0.0
    %4245 = vmatprep.subr.mxu0 0.0
    %4246 = vmatpush1.msra.mxu0 0.0
    %4247 = vmatprep.subr.mxu0 0.0
    %4248 = vmatpush1.msra.mxu0 0.0
    %4249 = vmatprep.subr.mxu0 0.0
    %4250 = vmatpush1.msra.mxu0 0.0
    %4251 = vmatprep.subr.mxu0 0.0
    %4252 = vmatpush1.msra.mxu0 0.0
    %4253 = vmatprep.subr.mxu0 0.0
    %4254 = vmatpush1.msra.mxu0 0.0
    %4255 = vmatprep.mubr.f32.mxu0 0.0
    %4256 = vmatmul.mubr.f32.gmra.mrb[0].mxu0 %v3805
    %v4257 = vpop.f32.mrb[0].mxu0
    %v4258 = vadd.f32 0.0, %v4257
    %v4259 = vpop.f32.mrb[0].mxu0
    %v4260 = vadd.f32 0.0, %v4259
    %4261 = vdwg.mxu0
    %v4263 = vsel %vm445, %v4119, 0
    %4265 = vmatprep.subr.mxu0 %v101
    %4266 = vmatpush1.msra.mxu0 %v100
    %4267 = vmatprep.subr.mxu0 %v105
    %4268 = vmatpush1.msra.mxu0 %v104
    %4269 = vmatprep.subr.mxu0 0.0
    %4270 = vmatpush1.msra.mxu0 0.0
    %4271 = vmatprep.subr.mxu0 0.0
    %4272 = vmatpush1.msra.mxu0 0.0
    %4273 = vmatprep.subr.mxu0 0.0
    %4274 = vmatpush1.msra.mxu0 0.0
    %4275 = vmatprep.subr.mxu0 0.0
    %4276 = vmatpush1.msra.mxu0 0.0
    %4277 = vmatprep.subr.mxu0 0.0
    %4278 = vmatpush1.msra.mxu0 0.0
    %4279 = vmatprep.subr.mxu0 0.0
    %4280 = vmatpush1.msra.mxu0 0.0
    %4281 = vmatprep.subr.mxu0 0.0
    %4282 = vmatpush1.msra.mxu0 0.0
    %4283 = vmatprep.subr.mxu0 0.0
    %4284 = vmatpush1.msra.mxu0 0.0
    %4285 = vmatprep.subr.mxu0 0.0
    %4286 = vmatpush1.msra.mxu0 0.0
    %4287 = vmatprep.subr.mxu0 0.0
    %4288 = vmatpush1.msra.mxu0 0.0
    %4289 = vmatprep.subr.mxu0 0.0
    %4290 = vmatpush1.msra.mxu0 0.0
    %4291 = vmatprep.subr.mxu0 0.0
    %4292 = vmatpush1.msra.mxu0 0.0
    %4293 = vmatprep.subr.mxu0 0.0
    %4294 = vmatpush1.msra.mxu0 0.0
    %4295 = vmatprep.subr.mxu0 0.0
    %4296 = vmatpush1.msra.mxu0 0.0
    %4297 = vmatprep.subr.mxu0 0.0
    %4298 = vmatpush1.msra.mxu0 0.0
    %4299 = vmatprep.subr.mxu0 0.0
    %4300 = vmatpush1.msra.mxu0 0.0
    %4301 = vmatprep.subr.mxu0 0.0
    %4302 = vmatpush1.msra.mxu0 0.0
    %4303 = vmatprep.subr.mxu0 0.0
    %4304 = vmatpush1.msra.mxu0 0.0
    %4305 = vmatprep.subr.mxu0 0.0
    %4306 = vmatpush1.msra.mxu0 0.0
    %4307 = vmatprep.subr.mxu0 0.0
    %4308 = vmatpush1.msra.mxu0 0.0
    %4309 = vmatprep.subr.mxu0 0.0
    %4310 = vmatpush1.msra.mxu0 0.0
    %4311 = vmatprep.subr.mxu0 0.0
    %4312 = vmatpush1.msra.mxu0 0.0
    %4313 = vmatprep.subr.mxu0 0.0
    %4314 = vmatpush1.msra.mxu0 0.0
    %4315 = vmatprep.subr.mxu0 0.0
    %4316 = vmatpush1.msra.mxu0 0.0
    %4317 = vmatprep.subr.mxu0 0.0
    %4318 = vmatpush1.msra.mxu0 0.0
    %4319 = vmatprep.subr.mxu0 0.0
    %4320 = vmatpush1.msra.mxu0 0.0
    %4321 = vmatprep.subr.mxu0 0.0
    %4322 = vmatpush1.msra.mxu0 0.0
    %4323 = vmatprep.subr.mxu0 0.0
    %4324 = vmatpush1.msra.mxu0 0.0
    %4325 = vmatprep.subr.mxu0 0.0
    %4326 = vmatpush1.msra.mxu0 0.0
    %4327 = vmatprep.subr.mxu0 0.0
    %4328 = vmatpush1.msra.mxu0 0.0
    %4329 = vmatprep.mubr.f32.mxu0 0.0
    %4330 = vmatmul.mubr.f32.gmra.mrb[0].mxu0 %v4263
    %v4331 = vpop.f32.mrb[0].mxu0
    %v4332 = vadd.f32 %v4187, %v4331
    %v4333 = vpop.f32.mrb[0].mxu0
    %v4334 = vadd.f32 %v4189, %v4333
    %4335 = vdwg.mxu0
    %4336 = vmatprep.subr.mxu0 %v103
    %4337 = vmatpush1.msra.mxu0 %v102
    %4338 = vmatprep.subr.mxu0 %v107
    %4339 = vmatpush1.msra.mxu0 %v106
    %4340 = vmatprep.subr.mxu0 0.0
    %4341 = vmatpush1.msra.mxu0 0.0
    %4342 = vmatprep.subr.mxu0 0.0
    %4343 = vmatpush1.msra.mxu0 0.0
    %4344 = vmatprep.subr.mxu0 0.0
    %4345 = vmatpush1.msra.mxu0 0.0
    %4346 = vmatprep.subr.mxu0 0.0
    %4347 = vmatpush1.msra.mxu0 0.0
    %4348 = vmatprep.subr.mxu0 0.0
    %4349 = vmatpush1.msra.mxu0 0.0
    %4350 = vmatprep.subr.mxu0 0.0
    %4351 = vmatpush1.msra.mxu0 0.0
    %4352 = vmatprep.subr.mxu0 0.0
    %4353 = vmatpush1.msra.mxu0 0.0
    %4354 = vmatprep.subr.mxu0 0.0
    %4355 = vmatpush1.msra.mxu0 0.0
    %4356 = vmatprep.subr.mxu0 0.0
    %4357 = vmatpush1.msra.mxu0 0.0
    %4358 = vmatprep.subr.mxu0 0.0
    %4359 = vmatpush1.msra.mxu0 0.0
    %4360 = vmatprep.subr.mxu0 0.0
    %4361 = vmatpush1.msra.mxu0 0.0
    %4362 = vmatprep.subr.mxu0 0.0
    %4363 = vmatpush1.msra.mxu0 0.0
    %4364 = vmatprep.subr.mxu0 0.0
    %4365 = vmatpush1.msra.mxu0 0.0
    %4366 = vmatprep.subr.mxu0 0.0
    %4367 = vmatpush1.msra.mxu0 0.0
    %4368 = vmatprep.subr.mxu0 0.0
    %4369 = vmatpush1.msra.mxu0 0.0
    %4370 = vmatprep.subr.mxu0 0.0
    %4371 = vmatpush1.msra.mxu0 0.0
    %4372 = vmatprep.subr.mxu0 0.0
    %4373 = vmatpush1.msra.mxu0 0.0
    %4374 = vmatprep.subr.mxu0 0.0
    %4375 = vmatpush1.msra.mxu0 0.0
    %4376 = vmatprep.subr.mxu0 0.0
    %4377 = vmatpush1.msra.mxu0 0.0
    %4378 = vmatprep.subr.mxu0 0.0
    %4379 = vmatpush1.msra.mxu0 0.0
    %4380 = vmatprep.subr.mxu0 0.0
    %4381 = vmatpush1.msra.mxu0 0.0
    %4382 = vmatprep.subr.mxu0 0.0
    %4383 = vmatpush1.msra.mxu0 0.0
    %4384 = vmatprep.subr.mxu0 0.0
    %4385 = vmatpush1.msra.mxu0 0.0
    %4386 = vmatprep.subr.mxu0 0.0
    %4387 = vmatpush1.msra.mxu0 0.0
    %4388 = vmatprep.subr.mxu0 0.0
    %4389 = vmatpush1.msra.mxu0 0.0
    %4390 = vmatprep.subr.mxu0 0.0
    %4391 = vmatpush1.msra.mxu0 0.0
    %4392 = vmatprep.subr.mxu0 0.0
    %4393 = vmatpush1.msra.mxu0 0.0
    %4394 = vmatprep.subr.mxu0 0.0
    %4395 = vmatpush1.msra.mxu0 0.0
    %4396 = vmatprep.subr.mxu0 0.0
    %4397 = vmatpush1.msra.mxu0 0.0
    %4398 = vmatprep.subr.mxu0 0.0
    %4399 = vmatpush1.msra.mxu0 0.0
    %4400 = vmatprep.mubr.f32.mxu0 0.0
    %4401 = vmatmul.mubr.f32.gmra.mrb[0].mxu0 %v4263
    %v4402 = vpop.f32.mrb[0].mxu0
    %v4403 = vadd.f32 %v4258, %v4402
    %v4404 = vpop.f32.mrb[0].mxu0
    %v4405 = vadd.f32 %v4260, %v4404
    %4406 = vdwg.mxu0
    %v4407 = vadd.f32 %v4332, %v595
    %v4408 = vadd.f32 %v4334, %v599
    %v4409 = vadd.f32 %v4403, %v603
    %v4410 = vadd.f32 %v4405, %v607
    %v4411 = vxor.u32 %v4407, 2147483648
    %v4412 = vmul.f32 %v4411, 1.442695
    %v4413 = vpow.pop %v4412
    %v4414 = vadd.f32 %v4413, 1.0
    %v4415 = vrcp.pop %v4414
    %v4416 = vmul.f32 1.0, %v4415
    %v4417 = vxor.u32 %v4408, 2147483648
    %v4418 = vmul.f32 %v4417, 1.442695
    %v4419 = vpow.pop %v4418
    %v4420 = vadd.f32 %v4419, 1.0
    %v4421 = vrcp.pop %v4420
    %v4422 = vmul.f32 1.0, %v4421
    %v4423 = vtanh.pop %v4409
    %v4424 = vxor.u32 %v4410, 2147483648
    %v4425 = vmul.f32 %v4424, 1.442695
    %v4426 = vpow.pop %v4425
    %v4427 = vadd.f32 %v4426, 1.0
    %v4428 = vrcp.pop %v4427
    %v4429 = vmul.f32 1.0, %v4428
    %v4430 = vmul.f32 %v4422, %v3803
    %v4431 = vmul.f32 %v4416, %v4423
    %v4432 = vadd.f32 %v4430, %v4431
    %v4433 = vtanh.pop %v4432
    %v4434 = vmul.f32 %v4429, %v4433
    %4435 = vmatprep.subr.mxu0 %v238
    %4436 = vmatpush1.msra.mxu0 %v237
    %4437 = vmatprep.subr.mxu0 %v242
    %4438 = vmatpush1.msra.mxu0 %v241
    %4439 = vmatprep.subr.mxu0 %v246
    %4440 = vmatpush1.msra.mxu0 %v245
    %4441 = vmatprep.subr.mxu0 %v250
    %4442 = vmatpush1.msra.mxu0 %v249
    %4443 = vmatprep.subr.mxu0 %v254
    %4444 = vmatpush1.msra.mxu0 %v253
    %4445 = vmatprep.subr.mxu0 %v258
    %4446 = vmatpush1.msra.mxu0 %v257
    %4447 = vmatprep.subr.mxu0 %v262
    %4448 = vmatpush1.msra.mxu0 %v261
    %4449 = vmatprep.subr.mxu0 %v266
    %4450 = vmatpush1.msra.mxu0 %v265
    %4451 = vmatprep.subr.mxu0 %v270
    %4452 = vmatpush1.msra.mxu0 %v269
    %4453 = vmatprep.subr.mxu0 %v274
    %4454 = vmatpush1.msra.mxu0 %v273
    %4455 = vmatprep.subr.mxu0 %v278
    %4456 = vmatpush1.msra.mxu0 %v277
    %4457 = vmatprep.subr.mxu0 %v282
    %4458 = vmatpush1.msra.mxu0 %v281
    %4459 = vmatprep.subr.mxu0 %v286
    %4460 = vmatpush1.msra.mxu0 %v285
    %4461 = vmatprep.subr.mxu0 %v290
    %4462 = vmatpush1.msra.mxu0 %v289
    %4463 = vmatprep.subr.mxu0 %v294
    %4464 = vmatpush1.msra.mxu0 %v293
    %4465 = vmatprep.subr.mxu0 %v298
    %4466 = vmatpush1.msra.mxu0 %v297
    %4467 = vmatprep.subr.mxu0 0.0
    %4468 = vmatpush1.msra.mxu0 0.0
    %4469 = vmatprep.subr.mxu0 0.0
    %4470 = vmatpush1.msra.mxu0 0.0
    %4471 = vmatprep.subr.mxu0 0.0
    %4472 = vmatpush1.msra.mxu0 0.0
    %4473 = vmatprep.subr.mxu0 0.0
    %4474 = vmatpush1.msra.mxu0 0.0
    %4475 = vmatprep.subr.mxu0 0.0
    %4476 = vmatpush1.msra.mxu0 0.0
    %4477 = vmatprep.subr.mxu0 0.0
    %4478 = vmatpush1.msra.mxu0 0.0
    %4479 = vmatprep.subr.mxu0 0.0
    %4480 = vmatpush1.msra.mxu0 0.0
    %4481 = vmatprep.subr.mxu0 0.0
    %4482 = vmatpush1.msra.mxu0 0.0
    %4483 = vmatprep.subr.mxu0 0.0
    %4484 = vmatpush1.msra.mxu0 0.0
    %4485 = vmatprep.subr.mxu0 0.0
    %4486 = vmatpush1.msra.mxu0 0.0
    %4487 = vmatprep.subr.mxu0 0.0
    %4488 = vmatpush1.msra.mxu0 0.0
    %4489 = vmatprep.subr.mxu0 0.0
    %4490 = vmatpush1.msra.mxu0 0.0
    %4491 = vmatprep.subr.mxu0 0.0
    %4492 = vmatpush1.msra.mxu0 0.0
    %4493 = vmatprep.subr.mxu0 0.0
    %4494 = vmatpush1.msra.mxu0 0.0
    %4495 = vmatprep.subr.mxu0 0.0
    %4496 = vmatpush1.msra.mxu0 0.0
    %4497 = vmatprep.subr.mxu0 0.0
    %4498 = vmatpush1.msra.mxu0 0.0
    %4499 = vmatprep.mubr.f32.mxu0 0.0
    %4500 = vmatmul.mubr.f32.gmra.mrb[0].mxu0 %v4117
    %v4501 = vpop.f32.mrb[0].mxu0
    %v4502 = vadd.f32 0.0, %v4501
    %v4503 = vpop.f32.mrb[0].mxu0
    %v4504 = vadd.f32 0.0, %v4503
    %4505 = vdwg.mxu0
    %4506 = vmatprep.subr.mxu0 %v240
    %4507 = vmatpush1.msra.mxu0 %v239
    %4508 = vmatprep.subr.mxu0 %v244
    %4509 = vmatpush1.msra.mxu0 %v243
    %4510 = vmatprep.subr.mxu0 %v248
    %4511 = vmatpush1.msra.mxu0 %v247
    %4512 = vmatprep.subr.mxu0 %v252
    %4513 = vmatpush1.msra.mxu0 %v251
    %4514 = vmatprep.subr.mxu0 %v256
    %4515 = vmatpush1.msra.mxu0 %v255
    %4516 = vmatprep.subr.mxu0 %v260
    %4517 = vmatpush1.msra.mxu0 %v259
    %4518 = vmatprep.subr.mxu0 %v264
    %4519 = vmatpush1.msra.mxu0 %v263
    %4520 = vmatprep.subr.mxu0 %v268
    %4521 = vmatpush1.msra.mxu0 %v267
    %4522 = vmatprep.subr.mxu0 %v272
    %4523 = vmatpush1.msra.mxu0 %v271
    %4524 = vmatprep.subr.mxu0 %v276
    %4525 = vmatpush1.msra.mxu0 %v275
    %4526 = vmatprep.subr.mxu0 %v280
    %4527 = vmatpush1.msra.mxu0 %v279
    %4528 = vmatprep.subr.mxu0 %v284
    %4529 = vmatpush1.msra.mxu0 %v283
    %4530 = vmatprep.subr.mxu0 %v288
    %4531 = vmatpush1.msra.mxu0 %v287
    %4532 = vmatprep.subr.mxu0 %v292
    %4533 = vmatpush1.msra.mxu0 %v291
    %4534 = vmatprep.subr.mxu0 %v296
    %4535 = vmatpush1.msra.mxu0 %v295
    %4536 = vmatprep.subr.mxu0 %v300
    %4537 = vmatpush1.msra.mxu0 %v299
    %4538 = vmatprep.subr.mxu0 0.0
    %4539 = vmatpush1.msra.mxu0 0.0
    %4540 = vmatprep.subr.mxu0 0.0
    %4541 = vmatpush1.msra.mxu0 0.0
    %4542 = vmatprep.subr.mxu0 0.0
    %4543 = vmatpush1.msra.mxu0 0.0
    %4544 = vmatprep.subr.mxu0 0.0
    %4545 = vmatpush1.msra.mxu0 0.0
    %4546 = vmatprep.subr.mxu0 0.0
    %4547 = vmatpush1.msra.mxu0 0.0
    %4548 = vmatprep.subr.mxu0 0.0
    %4549 = vmatpush1.msra.mxu0 0.0
    %4550 = vmatprep.subr.mxu0 0.0
    %4551 = vmatpush1.msra.mxu0 0.0
    %4552 = vmatprep.subr.mxu0 0.0
    %4553 = vmatpush1.msra.mxu0 0.0
    %4554 = vmatprep.subr.mxu0 0.0
    %4555 = vmatpush1.msra.mxu0 0.0
    %4556 = vmatprep.subr.mxu0 0.0
    %4557 = vmatpush1.msra.mxu0 0.0
    %4558 = vmatprep.subr.mxu0 0.0
    %4559 = vmatpush1.msra.mxu0 0.0
    %4560 = vmatprep.subr.mxu0 0.0
    %4561 = vmatpush1.msra.mxu0 0.0
    %4562 = vmatprep.subr.mxu0 0.0
    %4563 = vmatpush1.msra.mxu0 0.0
    %4564 = vmatprep.subr.mxu0 0.0
    %4565 = vmatpush1.msra.mxu0 0.0
    %4566 = vmatprep.subr.mxu0 0.0
    %4567 = vmatpush1.msra.mxu0 0.0
    %4568 = vmatprep.subr.mxu0 0.0
    %4569 = vmatpush1.msra.mxu0 0.0
    %4570 = vmatprep.mubr.f32.mxu0 0.0
    %4571 = vmatmul.mubr.f32.gmra.mrb[0].mxu0 %v4117
    %v4572 = vpop.f32.mrb[0].mxu0
    %v4573 = vadd.f32 0.0, %v4572
    %v4574 = vpop.f32.mrb[0].mxu0
    %v4575 = vadd.f32 0.0, %v4574
    %4576 = vdwg.mxu0
    %4577 = vmatprep.subr.mxu0 %v174
    %4578 = vmatpush1.msra.mxu0 %v173
    %4579 = vmatprep.subr.mxu0 %v178
    %4580 = vmatpush1.msra.mxu0 %v177
    %4581 = vmatprep.subr.mxu0 %v182
    %4582 = vmatpush1.msra.mxu0 %v181
    %4583 = vmatprep.subr.mxu0 %v186
    %4584 = vmatpush1.msra.mxu0 %v185
    %4585 = vmatprep.subr.mxu0 %v190
    %4586 = vmatpush1.msra.mxu0 %v189
    %4587 = vmatprep.subr.mxu0 %v194
    %4588 = vmatpush1.msra.mxu0 %v193
    %4589 = vmatprep.subr.mxu0 %v198
    %4590 = vmatpush1.msra.mxu0 %v197
    %4591 = vmatprep.subr.mxu0 %v202
    %4592 = vmatpush1.msra.mxu0 %v201
    %4593 = vmatprep.subr.mxu0 %v206
    %4594 = vmatpush1.msra.mxu0 %v205
    %4595 = vmatprep.subr.mxu0 %v210
    %4596 = vmatpush1.msra.mxu0 %v209
    %4597 = vmatprep.subr.mxu0 %v214
    %4598 = vmatpush1.msra.mxu0 %v213
    %4599 = vmatprep.subr.mxu0 %v218
    %4600 = vmatpush1.msra.mxu0 %v217
    %4601 = vmatprep.subr.mxu0 %v222
    %4602 = vmatpush1.msra.mxu0 %v221
    %4603 = vmatprep.subr.mxu0 %v226
    %4604 = vmatpush1.msra.mxu0 %v225
    %4605 = vmatprep.subr.mxu0 %v230
    %4606 = vmatpush1.msra.mxu0 %v229
    %4607 = vmatprep.subr.mxu0 %v234
    %4608 = vmatpush1.msra.mxu0 %v233
    %4609 = vmatprep.subr.mxu0 0.0
    %4610 = vmatpush1.msra.mxu0 0.0
    %4611 = vmatprep.subr.mxu0 0.0
    %4612 = vmatpush1.msra.mxu0 0.0
    %4613 = vmatprep.subr.mxu0 0.0
    %4614 = vmatpush1.msra.mxu0 0.0
    %4615 = vmatprep.subr.mxu0 0.0
    %4616 = vmatpush1.msra.mxu0 0.0
    %4617 = vmatprep.subr.mxu0 0.0
    %4618 = vmatpush1.msra.mxu0 0.0
    %4619 = vmatprep.subr.mxu0 0.0
    %4620 = vmatpush1.msra.mxu0 0.0
    %4621 = vmatprep.subr.mxu0 0.0
    %4622 = vmatpush1.msra.mxu0 0.0
    %4623 = vmatprep.subr.mxu0 0.0
    %4624 = vmatpush1.msra.mxu0 0.0
    %4625 = vmatprep.subr.mxu0 0.0
    %4626 = vmatpush1.msra.mxu0 0.0
    %4627 = vmatprep.subr.mxu0 0.0
    %4628 = vmatpush1.msra.mxu0 0.0
    %4629 = vmatprep.subr.mxu0 0.0
    %4630 = vmatpush1.msra.mxu0 0.0
    %4631 = vmatprep.subr.mxu0 0.0
    %4632 = vmatpush1.msra.mxu0 0.0
    %4633 = vmatprep.subr.mxu0 0.0
    %4634 = vmatpush1.msra.mxu0 0.0
    %4635 = vmatprep.subr.mxu0 0.0
    %4636 = vmatpush1.msra.mxu0 0.0
    %4637 = vmatprep.subr.mxu0 0.0
    %4638 = vmatpush1.msra.mxu0 0.0
    %4639 = vmatprep.subr.mxu0 0.0
    %4640 = vmatpush1.msra.mxu0 0.0
    %4641 = vmatprep.mubr.f32.mxu0 0.0
    %4642 = vmatmul.mubr.f32.gmra.mrb[0].mxu0 %v4434
    %v4643 = vpop.f32.mrb[0].mxu0
    %v4644 = vadd.f32 %v4502, %v4643
    %v4645 = vpop.f32.mrb[0].mxu0
    %v4646 = vadd.f32 %v4504, %v4645
    %4647 = vdwg.mxu0
    %4648 = vmatprep.subr.mxu0 %v176
    %4649 = vmatpush1.msra.mxu0 %v175
    %4650 = vmatprep.subr.mxu0 %v180
    %4651 = vmatpush1.msra.mxu0 %v179
    %4652 = vmatprep.subr.mxu0 %v184
    %4653 = vmatpush1.msra.mxu0 %v183
    %4654 = vmatprep.subr.mxu0 %v188
    %4655 = vmatpush1.msra.mxu0 %v187
    %4656 = vmatprep.subr.mxu0 %v192
    %4657 = vmatpush1.msra.mxu0 %v191
    %4658 = vmatprep.subr.mxu0 %v196
    %4659 = vmatpush1.msra.mxu0 %v195
    %4660 = vmatprep.subr.mxu0 %v200
    %4661 = vmatpush1.msra.mxu0 %v199
    %4662 = vmatprep.subr.mxu0 %v204
    %4663 = vmatpush1.msra.mxu0 %v203
    %4664 = vmatprep.subr.mxu0 %v208
    %4665 = vmatpush1.msra.mxu0 %v207
    %4666 = vmatprep.subr.mxu0 %v212
    %4667 = vmatpush1.msra.mxu0 %v211
    %4668 = vmatprep.subr.mxu0 %v216
    %4669 = vmatpush1.msra.mxu0 %v215
    %4670 = vmatprep.subr.mxu0 %v220
    %4671 = vmatpush1.msra.mxu0 %v219
    %4672 = vmatprep.subr.mxu0 %v224
    %4673 = vmatpush1.msra.mxu0 %v223
    %4674 = vmatprep.subr.mxu0 %v228
    %4675 = vmatpush1.msra.mxu0 %v227
    %4676 = vmatprep.subr.mxu0 %v232
    %4677 = vmatpush1.msra.mxu0 %v231
    %4678 = vmatprep.subr.mxu0 %v236
    %4679 = vmatpush1.msra.mxu0 %v235
    %4680 = vmatprep.subr.mxu0 0.0
    %4681 = vmatpush1.msra.mxu0 0.0
    %4682 = vmatprep.subr.mxu0 0.0
    %4683 = vmatpush1.msra.mxu0 0.0
    %4684 = vmatprep.subr.mxu0 0.0
    %4685 = vmatpush1.msra.mxu0 0.0
    %4686 = vmatprep.subr.mxu0 0.0
    %4687 = vmatpush1.msra.mxu0 0.0
    %4688 = vmatprep.subr.mxu0 0.0
    %4689 = vmatpush1.msra.mxu0 0.0
    %4690 = vmatprep.subr.mxu0 0.0
    %4691 = vmatpush1.msra.mxu0 0.0
    %4692 = vmatprep.subr.mxu0 0.0
    %4693 = vmatpush1.msra.mxu0 0.0
    %4694 = vmatprep.subr.mxu0 0.0
    %4695 = vmatpush1.msra.mxu0 0.0
    %4696 = vmatprep.subr.mxu0 0.0
    %4697 = vmatpush1.msra.mxu0 0.0
    %4698 = vmatprep.subr.mxu0 0.0
    %4699 = vmatpush1.msra.mxu0 0.0
    %4700 = vmatprep.subr.mxu0 0.0
    %4701 = vmatpush1.msra.mxu0 0.0
    %4702 = vmatprep.subr.mxu0 0.0
    %4703 = vmatpush1.msra.mxu0 0.0
    %4704 = vmatprep.subr.mxu0 0.0
    %4705 = vmatpush1.msra.mxu0 0.0
    %4706 = vmatprep.subr.mxu0 0.0
    %4707 = vmatpush1.msra.mxu0 0.0
    %4708 = vmatprep.subr.mxu0 0.0
    %4709 = vmatpush1.msra.mxu0 0.0
    %4710 = vmatprep.subr.mxu0 0.0
    %4711 = vmatpush1.msra.mxu0 0.0
    %4712 = vmatprep.mubr.f32.mxu0 0.0
    %4713 = vmatmul.mubr.f32.gmra.mrb[0].mxu0 %v4434
    %v4714 = vpop.f32.mrb[0].mxu0
    %v4715 = vadd.f32 %v4573, %v4714
    %v4716 = vpop.f32.mrb[0].mxu0
    %v4717 = vadd.f32 %v4575, %v4716
    %4718 = vdwg.mxu0
    %v4719 = vadd.f32 %v4644, %v928
    %v4720 = vadd.f32 %v4646, %v932
    %v4721 = vadd.f32 %v4715, %v936
    %v4722 = vadd.f32 %v4717, %v940
    %v4723 = vxor.u32 %v4719, 2147483648
    %v4724 = vmul.f32 %v4723, 1.442695
    %v4725 = vpow.pop %v4724
    %v4726 = vadd.f32 %v4725, 1.0
    %v4727 = vrcp.pop %v4726
    %v4728 = vmul.f32 1.0, %v4727
    %v4729 = vxor.u32 %v4720, 2147483648
    %v4730 = vmul.f32 %v4729, 1.442695
    %v4731 = vpow.pop %v4730
    %v4732 = vadd.f32 %v4731, 1.0
    %v4733 = vrcp.pop %v4732
    %v4734 = vmul.f32 1.0, %v4733
    %v4735 = vtanh.pop %v4721
    %v4736 = vxor.u32 %v4722, 2147483648
    %v4737 = vmul.f32 %v4736, 1.442695
    %v4738 = vpow.pop %v4737
    %v4739 = vadd.f32 %v4738, 1.0
    %v4740 = vrcp.pop %v4739
    %v4741 = vmul.f32 1.0, %v4740
    %v4742 = vmul.f32 %v4734, %v4115
    %v4743 = vmul.f32 %v4728, %v4735
    %v4744 = vadd.f32 %v4742, %v4743
    %v4745 = vtanh.pop %v4744
    %v4746 = vmul.f32 %v4741, %v4745
    %s4747 = scalar_lea.vmem %s0, 14
    %v4748 = vld [vmem:[%s4747] sm:$0x3]
    %4749 = vmatprep.subr.mxu0 %v109
    %4750 = vmatpush1.msra.mxu0 %v108
    %4751 = vmatprep.subr.mxu0 %v113
    %4752 = vmatpush1.msra.mxu0 %v112
    %4753 = vmatprep.subr.mxu0 %v117
    %4754 = vmatpush1.msra.mxu0 %v116
    %4755 = vmatprep.subr.mxu0 %v121
    %4756 = vmatpush1.msra.mxu0 %v120
    %4757 = vmatprep.subr.mxu0 %v125
    %4758 = vmatpush1.msra.mxu0 %v124
    %4759 = vmatprep.subr.mxu0 %v129
    %4760 = vmatpush1.msra.mxu0 %v128
    %4761 = vmatprep.subr.mxu0 %v133
    %4762 = vmatpush1.msra.mxu0 %v132
    %4763 = vmatprep.subr.mxu0 %v137
    %4764 = vmatpush1.msra.mxu0 %v136
    %4765 = vmatprep.subr.mxu0 %v141
    %4766 = vmatpush1.msra.mxu0 %v140
    %4767 = vmatprep.subr.mxu0 %v145
    %4768 = vmatpush1.msra.mxu0 %v144
    %4769 = vmatprep.subr.mxu0 %v149
    %4770 = vmatpush1.msra.mxu0 %v148
    %4771 = vmatprep.subr.mxu0 %v153
    %4772 = vmatpush1.msra.mxu0 %v152
    %4773 = vmatprep.subr.mxu0 %v157
    %4774 = vmatpush1.msra.mxu0 %v156
    %4775 = vmatprep.subr.mxu0 %v161
    %4776 = vmatpush1.msra.mxu0 %v160
    %4777 = vmatprep.subr.mxu0 %v165
    %4778 = vmatpush1.msra.mxu0 %v164
    %4779 = vmatprep.subr.mxu0 %v169
    %4780 = vmatpush1.msra.mxu0 %v168
    %4781 = vmatprep.subr.mxu0 0.0
    %4782 = vmatpush1.msra.mxu0 0.0
    %4783 = vmatprep.subr.mxu0 0.0
    %4784 = vmatpush1.msra.mxu0 0.0
    %4785 = vmatprep.subr.mxu0 0.0
    %4786 = vmatpush1.msra.mxu0 0.0
    %4787 = vmatprep.subr.mxu0 0.0
    %4788 = vmatpush1.msra.mxu0 0.0
    %4789 = vmatprep.subr.mxu0 0.0
    %4790 = vmatpush1.msra.mxu0 0.0
    %4791 = vmatprep.subr.mxu0 0.0
    %4792 = vmatpush1.msra.mxu0 0.0
    %4793 = vmatprep.subr.mxu0 0.0
    %4794 = vmatpush1.msra.mxu0 0.0
    %4795 = vmatprep.subr.mxu0 0.0
    %4796 = vmatpush1.msra.mxu0 0.0
    %4797 = vmatprep.subr.mxu0 0.0
    %4798 = vmatpush1.msra.mxu0 0.0
    %4799 = vmatprep.subr.mxu0 0.0
    %4800 = vmatpush1.msra.mxu0 0.0
    %4801 = vmatprep.subr.mxu0 0.0
    %4802 = vmatpush1.msra.mxu0 0.0
    %4803 = vmatprep.subr.mxu0 0.0
    %4804 = vmatpush1.msra.mxu0 0.0
    %4805 = vmatprep.subr.mxu0 0.0
    %4806 = vmatpush1.msra.mxu0 0.0
    %4807 = vmatprep.subr.mxu0 0.0
    %4808 = vmatpush1.msra.mxu0 0.0
    %4809 = vmatprep.subr.mxu0 0.0
    %4810 = vmatpush1.msra.mxu0 0.0
    %4811 = vmatprep.subr.mxu0 0.0
    %4812 = vmatpush1.msra.mxu0 0.0
    %4813 = vmatprep.mubr.f32.mxu0 0.0
    %4814 = vmatmul.mubr.f32.gmra.mrb[0].mxu0 %v4434
    %v4815 = vpop.f32.mrb[0].mxu0
    %v4816 = vadd.f32 0.0, %v4815
    %v4817 = vpop.f32.mrb[0].mxu0
    %v4818 = vadd.f32 0.0, %v4817
    %4819 = vdwg.mxu0
    %4820 = vmatprep.subr.mxu0 %v111
    %4821 = vmatpush1.msra.mxu0 %v110
    %4822 = vmatprep.subr.mxu0 %v115
    %4823 = vmatpush1.msra.mxu0 %v114
    %4824 = vmatprep.subr.mxu0 %v119
    %4825 = vmatpush1.msra.mxu0 %v118
    %4826 = vmatprep.subr.mxu0 %v123
    %4827 = vmatpush1.msra.mxu0 %v122
    %4828 = vmatprep.subr.mxu0 %v127
    %4829 = vmatpush1.msra.mxu0 %v126
    %4830 = vmatprep.subr.mxu0 %v131
    %4831 = vmatpush1.msra.mxu0 %v130
    %4832 = vmatprep.subr.mxu0 %v135
    %4833 = vmatpush1.msra.mxu0 %v134
    %4834 = vmatprep.subr.mxu0 %v139
    %4835 = vmatpush1.msra.mxu0 %v138
    %4836 = vmatprep.subr.mxu0 %v143
    %4837 = vmatpush1.msra.mxu0 %v142
    %4838 = vmatprep.subr.mxu0 %v147
    %4839 = vmatpush1.msra.mxu0 %v146
    %4840 = vmatprep.subr.mxu0 %v151
    %4841 = vmatpush1.msra.mxu0 %v150
    %4842 = vmatprep.subr.mxu0 %v155
    %4843 = vmatpush1.msra.mxu0 %v154
    %4844 = vmatprep.subr.mxu0 %v159
    %4845 = vmatpush1.msra.mxu0 %v158
    %4846 = vmatprep.subr.mxu0 %v163
    %4847 = vmatpush1.msra.mxu0 %v162
    %4848 = vmatprep.subr.mxu0 %v167
    %4849 = vmatpush1.msra.mxu0 %v166
    %4850 = vmatprep.subr.mxu0 %v171
    %4851 = vmatpush1.msra.mxu0 %v170
    %4852 = vmatprep.subr.mxu0 0.0
    %4853 = vmatpush1.msra.mxu0 0.0
    %4854 = vmatprep.subr.mxu0 0.0
    %4855 = vmatpush1.msra.mxu0 0.0
    %4856 = vmatprep.subr.mxu0 0.0
    %4857 = vmatpush1.msra.mxu0 0.0
    %4858 = vmatprep.subr.mxu0 0.0
    %4859 = vmatpush1.msra.mxu0 0.0
    %4860 = vmatprep.subr.mxu0 0.0
    %4861 = vmatpush1.msra.mxu0 0.0
    %4862 = vmatprep.subr.mxu0 0.0
    %4863 = vmatpush1.msra.mxu0 0.0
    %4864 = vmatprep.subr.mxu0 0.0
    %4865 = vmatpush1.msra.mxu0 0.0
    %4866 = vmatprep.subr.mxu0 0.0
    %4867 = vmatpush1.msra.mxu0 0.0
    %4868 = vmatprep.subr.mxu0 0.0
    %4869 = vmatpush1.msra.mxu0 0.0
    %4870 = vmatprep.subr.mxu0 0.0
    %4871 = vmatpush1.msra.mxu0 0.0
    %4872 = vmatprep.subr.mxu0 0.0
    %4873 = vmatpush1.msra.mxu0 0.0
    %4874 = vmatprep.subr.mxu0 0.0
    %4875 = vmatpush1.msra.mxu0 0.0
    %4876 = vmatprep.subr.mxu0 0.0
    %4877 = vmatpush1.msra.mxu0 0.0
    %4878 = vmatprep.subr.mxu0 0.0
    %4879 = vmatpush1.msra.mxu0 0.0
    %4880 = vmatprep.subr.mxu0 0.0
    %4881 = vmatpush1.msra.mxu0 0.0
    %4882 = vmatprep.subr.mxu0 0.0
    %4883 = vmatpush1.msra.mxu0 0.0
    %4884 = vmatprep.mubr.f32.mxu0 0.0
    %4885 = vmatmul.mubr.f32.gmra.mrb[0].mxu0 %v4434
    %v4886 = vpop.f32.mrb[0].mxu0
    %v4887 = vadd.f32 0.0, %v4886
    %v4888 = vpop.f32.mrb[0].mxu0
    %v4889 = vadd.f32 0.0, %v4888
    %4890 = vdwg.mxu0
    %v4892 = vsel %vm445, %v4748, 0
    %4894 = vmatprep.subr.mxu0 %v101
    %4895 = vmatpush1.msra.mxu0 %v100
    %4896 = vmatprep.subr.mxu0 %v105
    %4897 = vmatpush1.msra.mxu0 %v104
    %4898 = vmatprep.subr.mxu0 0.0
    %4899 = vmatpush1.msra.mxu0 0.0
    %4900 = vmatprep.subr.mxu0 0.0
    %4901 = vmatpush1.msra.mxu0 0.0
    %4902 = vmatprep.subr.mxu0 0.0
    %4903 = vmatpush1.msra.mxu0 0.0
    %4904 = vmatprep.subr.mxu0 0.0
    %4905 = vmatpush1.msra.mxu0 0.0
    %4906 = vmatprep.subr.mxu0 0.0
    %4907 = vmatpush1.msra.mxu0 0.0
    %4908 = vmatprep.subr.mxu0 0.0
    %4909 = vmatpush1.msra.mxu0 0.0
    %4910 = vmatprep.subr.mxu0 0.0
    %4911 = vmatpush1.msra.mxu0 0.0
    %4912 = vmatprep.subr.mxu0 0.0
    %4913 = vmatpush1.msra.mxu0 0.0
    %4914 = vmatprep.subr.mxu0 0.0
    %4915 = vmatpush1.msra.mxu0 0.0
    %4916 = vmatprep.subr.mxu0 0.0
    %4917 = vmatpush1.msra.mxu0 0.0
    %4918 = vmatprep.subr.mxu0 0.0
    %4919 = vmatpush1.msra.mxu0 0.0
    %4920 = vmatprep.subr.mxu0 0.0
    %4921 = vmatpush1.msra.mxu0 0.0
    %4922 = vmatprep.subr.mxu0 0.0
    %4923 = vmatpush1.msra.mxu0 0.0
    %4924 = vmatprep.subr.mxu0 0.0
    %4925 = vmatpush1.msra.mxu0 0.0
    %4926 = vmatprep.subr.mxu0 0.0
    %4927 = vmatpush1.msra.mxu0 0.0
    %4928 = vmatprep.subr.mxu0 0.0
    %4929 = vmatpush1.msra.mxu0 0.0
    %4930 = vmatprep.subr.mxu0 0.0
    %4931 = vmatpush1.msra.mxu0 0.0
    %4932 = vmatprep.subr.mxu0 0.0
    %4933 = vmatpush1.msra.mxu0 0.0
    %4934 = vmatprep.subr.mxu0 0.0
    %4935 = vmatpush1.msra.mxu0 0.0
    %4936 = vmatprep.subr.mxu0 0.0
    %4937 = vmatpush1.msra.mxu0 0.0
    %4938 = vmatprep.subr.mxu0 0.0
    %4939 = vmatpush1.msra.mxu0 0.0
    %4940 = vmatprep.subr.mxu0 0.0
    %4941 = vmatpush1.msra.mxu0 0.0
    %4942 = vmatprep.subr.mxu0 0.0
    %4943 = vmatpush1.msra.mxu0 0.0
    %4944 = vmatprep.subr.mxu0 0.0
    %4945 = vmatpush1.msra.mxu0 0.0
    %4946 = vmatprep.subr.mxu0 0.0
    %4947 = vmatpush1.msra.mxu0 0.0
    %4948 = vmatprep.subr.mxu0 0.0
    %4949 = vmatpush1.msra.mxu0 0.0
    %4950 = vmatprep.subr.mxu0 0.0
    %4951 = vmatpush1.msra.mxu0 0.0
    %4952 = vmatprep.subr.mxu0 0.0
    %4953 = vmatpush1.msra.mxu0 0.0
    %4954 = vmatprep.subr.mxu0 0.0
    %4955 = vmatpush1.msra.mxu0 0.0
    %4956 = vmatprep.subr.mxu0 0.0
    %4957 = vmatpush1.msra.mxu0 0.0
    %4958 = vmatprep.mubr.f32.mxu0 0.0
    %4959 = vmatmul.mubr.f32.gmra.mrb[0].mxu0 %v4892
    %v4960 = vpop.f32.mrb[0].mxu0
    %v4961 = vadd.f32 %v4816, %v4960
    %v4962 = vpop.f32.mrb[0].mxu0
    %v4963 = vadd.f32 %v4818, %v4962
    %4964 = vdwg.mxu0
    %4965 = vmatprep.subr.mxu0 %v103
    %4966 = vmatpush1.msra.mxu0 %v102
    %4967 = vmatprep.subr.mxu0 %v107
    %4968 = vmatpush1.msra.mxu0 %v106
    %4969 = vmatprep.subr.mxu0 0.0
    %4970 = vmatpush1.msra.mxu0 0.0
    %4971 = vmatprep.subr.mxu0 0.0
    %4972 = vmatpush1.msra.mxu0 0.0
    %4973 = vmatprep.subr.mxu0 0.0
    %4974 = vmatpush1.msra.mxu0 0.0
    %4975 = vmatprep.subr.mxu0 0.0
    %4976 = vmatpush1.msra.mxu0 0.0
    %4977 = vmatprep.subr.mxu0 0.0
    %4978 = vmatpush1.msra.mxu0 0.0
    %4979 = vmatprep.subr.mxu0 0.0
    %4980 = vmatpush1.msra.mxu0 0.0
    %4981 = vmatprep.subr.mxu0 0.0
    %4982 = vmatpush1.msra.mxu0 0.0
    %4983 = vmatprep.subr.mxu0 0.0
    %4984 = vmatpush1.msra.mxu0 0.0
    %4985 = vmatprep.subr.mxu0 0.0
    %4986 = vmatpush1.msra.mxu0 0.0
    %4987 = vmatprep.subr.mxu0 0.0
    %4988 = vmatpush1.msra.mxu0 0.0
    %4989 = vmatprep.subr.mxu0 0.0
    %4990 = vmatpush1.msra.mxu0 0.0
    %4991 = vmatprep.subr.mxu0 0.0
    %4992 = vmatpush1.msra.mxu0 0.0
    %4993 = vmatprep.subr.mxu0 0.0
    %4994 = vmatpush1.msra.mxu0 0.0
    %4995 = vmatprep.subr.mxu0 0.0
    %4996 = vmatpush1.msra.mxu0 0.0
    %4997 = vmatprep.subr.mxu0 0.0
    %4998 = vmatpush1.msra.mxu0 0.0
    %4999 = vmatprep.subr.mxu0 0.0
    %5000 = vmatpush1.msra.mxu0 0.0
    %5001 = vmatprep.subr.mxu0 0.0
    %5002 = vmatpush1.msra.mxu0 0.0
    %5003 = vmatprep.subr.mxu0 0.0
    %5004 = vmatpush1.msra.mxu0 0.0
    %5005 = vmatprep.subr.mxu0 0.0
    %5006 = vmatpush1.msra.mxu0 0.0
    %5007 = vmatprep.subr.mxu0 0.0
    %5008 = vmatpush1.msra.mxu0 0.0
    %5009 = vmatprep.subr.mxu0 0.0
    %5010 = vmatpush1.msra.mxu0 0.0
    %5011 = vmatprep.subr.mxu0 0.0
    %5012 = vmatpush1.msra.mxu0 0.0
    %5013 = vmatprep.subr.mxu0 0.0
    %5014 = vmatpush1.msra.mxu0 0.0
    %5015 = vmatprep.subr.mxu0 0.0
    %5016 = vmatpush1.msra.mxu0 0.0
    %5017 = vmatprep.subr.mxu0 0.0
    %5018 = vmatpush1.msra.mxu0 0.0
    %5019 = vmatprep.subr.mxu0 0.0
    %5020 = vmatpush1.msra.mxu0 0.0
    %5021 = vmatprep.subr.mxu0 0.0
    %5022 = vmatpush1.msra.mxu0 0.0
    %5023 = vmatprep.subr.mxu0 0.0
    %5024 = vmatpush1.msra.mxu0 0.0
    %5025 = vmatprep.subr.mxu0 0.0
    %5026 = vmatpush1.msra.mxu0 0.0
    %5027 = vmatprep.subr.mxu0 0.0
    %5028 = vmatpush1.msra.mxu0 0.0
    %5029 = vmatprep.mubr.f32.mxu0 0.0
    %5030 = vmatmul.mubr.f32.gmra.mrb[0].mxu0 %v4892
    %v5031 = vpop.f32.mrb[0].mxu0
    %v5032 = vadd.f32 %v4887, %v5031
    %v5033 = vpop.f32.mrb[0].mxu0
    %v5034 = vadd.f32 %v4889, %v5033
    %5035 = vdwg.mxu0
    %v5036 = vadd.f32 %v4961, %v595
    %v5037 = vadd.f32 %v4963, %v599
    %v5038 = vadd.f32 %v5032, %v603
    %v5039 = vadd.f32 %v5034, %v607
    %v5040 = vxor.u32 %v5036, 2147483648
    %v5041 = vmul.f32 %v5040, 1.442695
    %v5042 = vpow.pop %v5041
    %v5043 = vadd.f32 %v5042, 1.0
    %v5044 = vrcp.pop %v5043
    %v5045 = vmul.f32 1.0, %v5044
    %v5046 = vxor.u32 %v5037, 2147483648
    %v5047 = vmul.f32 %v5046, 1.442695
    %v5048 = vpow.pop %v5047
    %v5049 = vadd.f32 %v5048, 1.0
    %v5050 = vrcp.pop %v5049
    %v5051 = vmul.f32 1.0, %v5050
    %v5052 = vtanh.pop %v5038
    %v5053 = vxor.u32 %v5039, 2147483648
    %v5054 = vmul.f32 %v5053, 1.442695
    %v5055 = vpow.pop %v5054
    %v5056 = vadd.f32 %v5055, 1.0
    %v5057 = vrcp.pop %v5056
    %v5058 = vmul.f32 1.0, %v5057
    %v5059 = vmul.f32 %v5051, %v4432
    %v5060 = vmul.f32 %v5045, %v5052
    %v5061 = vadd.f32 %v5059, %v5060
    %v5062 = vtanh.pop %v5061
    %v5063 = vmul.f32 %v5058, %v5062
    %5064 = vmatprep.subr.mxu0 %v238
    %5065 = vmatpush1.msra.mxu0 %v237
    %5066 = vmatprep.subr.mxu0 %v242
    %5067 = vmatpush1.msra.mxu0 %v241
    %5068 = vmatprep.subr.mxu0 %v246
    %5069 = vmatpush1.msra.mxu0 %v245
    %5070 = vmatprep.subr.mxu0 %v250
    %5071 = vmatpush1.msra.mxu0 %v249
    %5072 = vmatprep.subr.mxu0 %v254
    %5073 = vmatpush1.msra.mxu0 %v253
    %5074 = vmatprep.subr.mxu0 %v258
    %5075 = vmatpush1.msra.mxu0 %v257
    %5076 = vmatprep.subr.mxu0 %v262
    %5077 = vmatpush1.msra.mxu0 %v261
    %5078 = vmatprep.subr.mxu0 %v266
    %5079 = vmatpush1.msra.mxu0 %v265
    %5080 = vmatprep.subr.mxu0 %v270
    %5081 = vmatpush1.msra.mxu0 %v269
    %5082 = vmatprep.subr.mxu0 %v274
    %5083 = vmatpush1.msra.mxu0 %v273
    %5084 = vmatprep.subr.mxu0 %v278
    %5085 = vmatpush1.msra.mxu0 %v277
    %5086 = vmatprep.subr.mxu0 %v282
    %5087 = vmatpush1.msra.mxu0 %v281
    %5088 = vmatprep.subr.mxu0 %v286
    %5089 = vmatpush1.msra.mxu0 %v285
    %5090 = vmatprep.subr.mxu0 %v290
    %5091 = vmatpush1.msra.mxu0 %v289
    %5092 = vmatprep.subr.mxu0 %v294
    %5093 = vmatpush1.msra.mxu0 %v293
    %5094 = vmatprep.subr.mxu0 %v298
    %5095 = vmatpush1.msra.mxu0 %v297
    %5096 = vmatprep.subr.mxu0 0.0
    %5097 = vmatpush1.msra.mxu0 0.0
    %5098 = vmatprep.subr.mxu0 0.0
    %5099 = vmatpush1.msra.mxu0 0.0
    %5100 = vmatprep.subr.mxu0 0.0
    %5101 = vmatpush1.msra.mxu0 0.0
    %5102 = vmatprep.subr.mxu0 0.0
    %5103 = vmatpush1.msra.mxu0 0.0
    %5104 = vmatprep.subr.mxu0 0.0
    %5105 = vmatpush1.msra.mxu0 0.0
    %5106 = vmatprep.subr.mxu0 0.0
    %5107 = vmatpush1.msra.mxu0 0.0
    %5108 = vmatprep.subr.mxu0 0.0
    %5109 = vmatpush1.msra.mxu0 0.0
    %5110 = vmatprep.subr.mxu0 0.0
    %5111 = vmatpush1.msra.mxu0 0.0
    %5112 = vmatprep.subr.mxu0 0.0
    %5113 = vmatpush1.msra.mxu0 0.0
    %5114 = vmatprep.subr.mxu0 0.0
    %5115 = vmatpush1.msra.mxu0 0.0
    %5116 = vmatprep.subr.mxu0 0.0
    %5117 = vmatpush1.msra.mxu0 0.0
    %5118 = vmatprep.subr.mxu0 0.0
    %5119 = vmatpush1.msra.mxu0 0.0
    %5120 = vmatprep.subr.mxu0 0.0
    %5121 = vmatpush1.msra.mxu0 0.0
    %5122 = vmatprep.subr.mxu0 0.0
    %5123 = vmatpush1.msra.mxu0 0.0
    %5124 = vmatprep.subr.mxu0 0.0
    %5125 = vmatpush1.msra.mxu0 0.0
    %5126 = vmatprep.subr.mxu0 0.0
    %5127 = vmatpush1.msra.mxu0 0.0
    %5128 = vmatprep.mubr.f32.mxu0 0.0
    %5129 = vmatmul.mubr.f32.gmra.mrb[0].mxu0 %v4746
    %v5130 = vpop.f32.mrb[0].mxu0
    %v5131 = vadd.f32 0.0, %v5130
    %v5132 = vpop.f32.mrb[0].mxu0
    %v5133 = vadd.f32 0.0, %v5132
    %5134 = vdwg.mxu0
    %5135 = vmatprep.subr.mxu0 %v240
    %5136 = vmatpush1.msra.mxu0 %v239
    %5137 = vmatprep.subr.mxu0 %v244
    %5138 = vmatpush1.msra.mxu0 %v243
    %5139 = vmatprep.subr.mxu0 %v248
    %5140 = vmatpush1.msra.mxu0 %v247
    %5141 = vmatprep.subr.mxu0 %v252
    %5142 = vmatpush1.msra.mxu0 %v251
    %5143 = vmatprep.subr.mxu0 %v256
    %5144 = vmatpush1.msra.mxu0 %v255
    %5145 = vmatprep.subr.mxu0 %v260
    %5146 = vmatpush1.msra.mxu0 %v259
    %5147 = vmatprep.subr.mxu0 %v264
    %5148 = vmatpush1.msra.mxu0 %v263
    %5149 = vmatprep.subr.mxu0 %v268
    %5150 = vmatpush1.msra.mxu0 %v267
    %5151 = vmatprep.subr.mxu0 %v272
    %5152 = vmatpush1.msra.mxu0 %v271
    %5153 = vmatprep.subr.mxu0 %v276
    %5154 = vmatpush1.msra.mxu0 %v275
    %5155 = vmatprep.subr.mxu0 %v280
    %5156 = vmatpush1.msra.mxu0 %v279
    %5157 = vmatprep.subr.mxu0 %v284
    %5158 = vmatpush1.msra.mxu0 %v283
    %5159 = vmatprep.subr.mxu0 %v288
    %5160 = vmatpush1.msra.mxu0 %v287
    %5161 = vmatprep.subr.mxu0 %v292
    %5162 = vmatpush1.msra.mxu0 %v291
    %5163 = vmatprep.subr.mxu0 %v296
    %5164 = vmatpush1.msra.mxu0 %v295
    %5165 = vmatprep.subr.mxu0 %v300
    %5166 = vmatpush1.msra.mxu0 %v299
    %5167 = vmatprep.subr.mxu0 0.0
    %5168 = vmatpush1.msra.mxu0 0.0
    %5169 = vmatprep.subr.mxu0 0.0
    %5170 = vmatpush1.msra.mxu0 0.0
    %5171 = vmatprep.subr.mxu0 0.0
    %5172 = vmatpush1.msra.mxu0 0.0
    %5173 = vmatprep.subr.mxu0 0.0
    %5174 = vmatpush1.msra.mxu0 0.0
    %5175 = vmatprep.subr.mxu0 0.0
    %5176 = vmatpush1.msra.mxu0 0.0
    %5177 = vmatprep.subr.mxu0 0.0
    %5178 = vmatpush1.msra.mxu0 0.0
    %5179 = vmatprep.subr.mxu0 0.0
    %5180 = vmatpush1.msra.mxu0 0.0
    %5181 = vmatprep.subr.mxu0 0.0
    %5182 = vmatpush1.msra.mxu0 0.0
    %5183 = vmatprep.subr.mxu0 0.0
    %5184 = vmatpush1.msra.mxu0 0.0
    %5185 = vmatprep.subr.mxu0 0.0
    %5186 = vmatpush1.msra.mxu0 0.0
    %5187 = vmatprep.subr.mxu0 0.0
    %5188 = vmatpush1.msra.mxu0 0.0
    %5189 = vmatprep.subr.mxu0 0.0
    %5190 = vmatpush1.msra.mxu0 0.0
    %5191 = vmatprep.subr.mxu0 0.0
    %5192 = vmatpush1.msra.mxu0 0.0
    %5193 = vmatprep.subr.mxu0 0.0
    %5194 = vmatpush1.msra.mxu0 0.0
    %5195 = vmatprep.subr.mxu0 0.0
    %5196 = vmatpush1.msra.mxu0 0.0
    %5197 = vmatprep.subr.mxu0 0.0
    %5198 = vmatpush1.msra.mxu0 0.0
    %5199 = vmatprep.mubr.f32.mxu0 0.0
    %5200 = vmatmul.mubr.f32.gmra.mrb[0].mxu0 %v4746
    %v5201 = vpop.f32.mrb[0].mxu0
    %v5202 = vadd.f32 0.0, %v5201
    %v5203 = vpop.f32.mrb[0].mxu0
    %v5204 = vadd.f32 0.0, %v5203
    %5205 = vdwg.mxu0
    %5206 = vmatprep.subr.mxu0 %v174
    %5207 = vmatpush1.msra.mxu0 %v173
    %5208 = vmatprep.subr.mxu0 %v178
    %5209 = vmatpush1.msra.mxu0 %v177
    %5210 = vmatprep.subr.mxu0 %v182
    %5211 = vmatpush1.msra.mxu0 %v181
    %5212 = vmatprep.subr.mxu0 %v186
    %5213 = vmatpush1.msra.mxu0 %v185
    %5214 = vmatprep.subr.mxu0 %v190
    %5215 = vmatpush1.msra.mxu0 %v189
    %5216 = vmatprep.subr.mxu0 %v194
    %5217 = vmatpush1.msra.mxu0 %v193
    %5218 = vmatprep.subr.mxu0 %v198
    %5219 = vmatpush1.msra.mxu0 %v197
    %5220 = vmatprep.subr.mxu0 %v202
    %5221 = vmatpush1.msra.mxu0 %v201
    %5222 = vmatprep.subr.mxu0 %v206
    %5223 = vmatpush1.msra.mxu0 %v205
    %5224 = vmatprep.subr.mxu0 %v210
    %5225 = vmatpush1.msra.mxu0 %v209
    %5226 = vmatprep.subr.mxu0 %v214
    %5227 = vmatpush1.msra.mxu0 %v213
    %5228 = vmatprep.subr.mxu0 %v218
    %5229 = vmatpush1.msra.mxu0 %v217
    %5230 = vmatprep.subr.mxu0 %v222
    %5231 = vmatpush1.msra.mxu0 %v221
    %5232 = vmatprep.subr.mxu0 %v226
    %5233 = vmatpush1.msra.mxu0 %v225
    %5234 = vmatprep.subr.mxu0 %v230
    %5235 = vmatpush1.msra.mxu0 %v229
    %5236 = vmatprep.subr.mxu0 %v234
    %5237 = vmatpush1.msra.mxu0 %v233
    %5238 = vmatprep.subr.mxu0 0.0
    %5239 = vmatpush1.msra.mxu0 0.0
    %5240 = vmatprep.subr.mxu0 0.0
    %5241 = vmatpush1.msra.mxu0 0.0
    %5242 = vmatprep.subr.mxu0 0.0
    %5243 = vmatpush1.msra.mxu0 0.0
    %5244 = vmatprep.subr.mxu0 0.0
    %5245 = vmatpush1.msra.mxu0 0.0
    %5246 = vmatprep.subr.mxu0 0.0
    %5247 = vmatpush1.msra.mxu0 0.0
    %5248 = vmatprep.subr.mxu0 0.0
    %5249 = vmatpush1.msra.mxu0 0.0
    %5250 = vmatprep.subr.mxu0 0.0
    %5251 = vmatpush1.msra.mxu0 0.0
    %5252 = vmatprep.subr.mxu0 0.0
    %5253 = vmatpush1.msra.mxu0 0.0
    %5254 = vmatprep.subr.mxu0 0.0
    %5255 = vmatpush1.msra.mxu0 0.0
    %5256 = vmatprep.subr.mxu0 0.0
    %5257 = vmatpush1.msra.mxu0 0.0
    %5258 = vmatprep.subr.mxu0 0.0
    %5259 = vmatpush1.msra.mxu0 0.0
    %5260 = vmatprep.subr.mxu0 0.0
    %5261 = vmatpush1.msra.mxu0 0.0
    %5262 = vmatprep.subr.mxu0 0.0
    %5263 = vmatpush1.msra.mxu0 0.0
    %5264 = vmatprep.subr.mxu0 0.0
    %5265 = vmatpush1.msra.mxu0 0.0
    %5266 = vmatprep.subr.mxu0 0.0
    %5267 = vmatpush1.msra.mxu0 0.0
    %5268 = vmatprep.subr.mxu0 0.0
    %5269 = vmatpush1.msra.mxu0 0.0
    %5270 = vmatprep.mubr.f32.mxu0 0.0
    %5271 = vmatmul.mubr.f32.gmra.mrb[0].mxu0 %v5063
    %v5272 = vpop.f32.mrb[0].mxu0
    %v5273 = vadd.f32 %v5131, %v5272
    %v5274 = vpop.f32.mrb[0].mxu0
    %v5275 = vadd.f32 %v5133, %v5274
    %5276 = vdwg.mxu0
    %5277 = vmatprep.subr.mxu0 %v176
    %5278 = vmatpush1.msra.mxu0 %v175
    %5279 = vmatprep.subr.mxu0 %v180
    %5280 = vmatpush1.msra.mxu0 %v179
    %5281 = vmatprep.subr.mxu0 %v184
    %5282 = vmatpush1.msra.mxu0 %v183
    %5283 = vmatprep.subr.mxu0 %v188
    %5284 = vmatpush1.msra.mxu0 %v187
    %5285 = vmatprep.subr.mxu0 %v192
    %5286 = vmatpush1.msra.mxu0 %v191
    %5287 = vmatprep.subr.mxu0 %v196
    %5288 = vmatpush1.msra.mxu0 %v195
    %5289 = vmatprep.subr.mxu0 %v200
    %5290 = vmatpush1.msra.mxu0 %v199
    %5291 = vmatprep.subr.mxu0 %v204
    %5292 = vmatpush1.msra.mxu0 %v203
    %5293 = vmatprep.subr.mxu0 %v208
    %5294 = vmatpush1.msra.mxu0 %v207
    %5295 = vmatprep.subr.mxu0 %v212
    %5296 = vmatpush1.msra.mxu0 %v211
    %5297 = vmatprep.subr.mxu0 %v216
    %5298 = vmatpush1.msra.mxu0 %v215
    %5299 = vmatprep.subr.mxu0 %v220
    %5300 = vmatpush1.msra.mxu0 %v219
    %5301 = vmatprep.subr.mxu0 %v224
    %5302 = vmatpush1.msra.mxu0 %v223
    %5303 = vmatprep.subr.mxu0 %v228
    %5304 = vmatpush1.msra.mxu0 %v227
    %5305 = vmatprep.subr.mxu0 %v232
    %5306 = vmatpush1.msra.mxu0 %v231
    %5307 = vmatprep.subr.mxu0 %v236
    %5308 = vmatpush1.msra.mxu0 %v235
    %5309 = vmatprep.subr.mxu0 0.0
    %5310 = vmatpush1.msra.mxu0 0.0
    %5311 = vmatprep.subr.mxu0 0.0
    %5312 = vmatpush1.msra.mxu0 0.0
    %5313 = vmatprep.subr.mxu0 0.0
    %5314 = vmatpush1.msra.mxu0 0.0
    %5315 = vmatprep.subr.mxu0 0.0
    %5316 = vmatpush1.msra.mxu0 0.0
    %5317 = vmatprep.subr.mxu0 0.0
    %5318 = vmatpush1.msra.mxu0 0.0
    %5319 = vmatprep.subr.mxu0 0.0
    %5320 = vmatpush1.msra.mxu0 0.0
    %5321 = vmatprep.subr.mxu0 0.0
    %5322 = vmatpush1.msra.mxu0 0.0
    %5323 = vmatprep.subr.mxu0 0.0
    %5324 = vmatpush1.msra.mxu0 0.0
    %5325 = vmatprep.subr.mxu0 0.0
    %5326 = vmatpush1.msra.mxu0 0.0
    %5327 = vmatprep.subr.mxu0 0.0
    %5328 = vmatpush1.msra.mxu0 0.0
    %5329 = vmatprep.subr.mxu0 0.0
    %5330 = vmatpush1.msra.mxu0 0.0
    %5331 = vmatprep.subr.mxu0 0.0
    %5332 = vmatpush1.msra.mxu0 0.0
    %5333 = vmatprep.subr.mxu0 0.0
    %5334 = vmatpush1.msra.mxu0 0.0
    %5335 = vmatprep.subr.mxu0 0.0
    %5336 = vmatpush1.msra.mxu0 0.0
    %5337 = vmatprep.subr.mxu0 0.0
    %5338 = vmatpush1.msra.mxu0 0.0
    %5339 = vmatprep.subr.mxu0 0.0
    %5340 = vmatpush1.msra.mxu0 0.0
    %5341 = vmatprep.mubr.f32.mxu0 0.0
    %5342 = vmatmul.mubr.f32.gmra.mrb[0].mxu0 %v5063
    %v5343 = vpop.f32.mrb[0].mxu0
    %v5344 = vadd.f32 %v5202, %v5343
    %v5345 = vpop.f32.mrb[0].mxu0
    %v5346 = vadd.f32 %v5204, %v5345
    %5347 = vdwg.mxu0
    %v5348 = vadd.f32 %v5273, %v928
    %v5349 = vadd.f32 %v5275, %v932
    %v5350 = vadd.f32 %v5344, %v936
    %v5351 = vadd.f32 %v5346, %v940
    %v5352 = vxor.u32 %v5348, 2147483648
    %v5353 = vmul.f32 %v5352, 1.442695
    %v5354 = vpow.pop %v5353
    %v5355 = vadd.f32 %v5354, 1.0
    %v5356 = vrcp.pop %v5355
    %v5357 = vmul.f32 1.0, %v5356
    %v5358 = vxor.u32 %v5349, 2147483648
    %v5359 = vmul.f32 %v5358, 1.442695
    %v5360 = vpow.pop %v5359
    %v5361 = vadd.f32 %v5360, 1.0
    %v5362 = vrcp.pop %v5361
    %v5363 = vmul.f32 1.0, %v5362
    %v5364 = vtanh.pop %v5350
    %v5365 = vxor.u32 %v5351, 2147483648
    %v5366 = vmul.f32 %v5365, 1.442695
    %v5367 = vpow.pop %v5366
    %v5368 = vadd.f32 %v5367, 1.0
    %v5369 = vrcp.pop %v5368
    %v5370 = vmul.f32 1.0, %v5369
    %v5371 = vmul.f32 %v5363, %v4744
    %v5372 = vmul.f32 %v5357, %v5364
    %v5373 = vadd.f32 %v5371, %v5372
    %v5374 = vtanh.pop %v5373
    %v5375 = vmul.f32 %v5370, %v5374
    %v5376 = vld [vmem:[#allocation9] sm:$0xff]
    %v5377 = vld [vmem:[#allocation9 + $0x8] sm:$0xff]
    %v5378 = vld [vmem:[#allocation9 + $0x10] sm:$0xff]
    %v5379 = vld [vmem:[#allocation9 + $0x18] sm:$0xff]
    %v5380 = vld [vmem:[#allocation9 + $0x20] sm:$0xff]
    %v5381 = vld [vmem:[#allocation9 + $0x28] sm:$0xff]
    %v5382 = vld [vmem:[#allocation9 + $0x30] sm:$0xff]
    %v5383 = vld [vmem:[#allocation9 + $0x38] sm:$0xff]
    %v5384 = vld [vmem:[#allocation9 + $0x40] sm:$0xff]
    %v5385 = vld [vmem:[#allocation9 + $0x48] sm:$0xff]
    %v5386 = vld [vmem:[#allocation9 + $0x50] sm:$0xff]
    %v5387 = vld [vmem:[#allocation9 + $0x58] sm:$0xff]
    %v5388 = vld [vmem:[#allocation9 + $0x60] sm:$0xff]
    %v5389 = vld [vmem:[#allocation9 + $0x68] sm:$0xff]
    %v5390 = vld [vmem:[#allocation9 + $0x70] sm:$0xff]
    %v5391 = vld [vmem:[#allocation9 + $0x78] sm:$0xff]
    %v5392 = vld [vmem:[%s8] sm:$0x1]
    %v5394 = vlaneseq
    %v5395 = vshrl.u32 %v5394, 7
    %v5396 = vsub.s32 0, %v5395
    %v5397 = vrot.slane %v5392, %v5396
    %5399 = vmatprep.subr.mxu0 0.0
    %5400 = vmatpush1.msra.mxu0 %v5376
    %5401 = vmatprep.subr.mxu0 0.0
    %5402 = vmatpush1.msra.mxu0 %v5377
    %5403 = vmatprep.subr.mxu0 0.0
    %5404 = vmatpush1.msra.mxu0 %v5378
    %5405 = vmatprep.subr.mxu0 0.0
    %5406 = vmatpush1.msra.mxu0 %v5379
    %5407 = vmatprep.subr.mxu0 0.0
    %5408 = vmatpush1.msra.mxu0 %v5380
    %5409 = vmatprep.subr.mxu0 0.0
    %5410 = vmatpush1.msra.mxu0 %v5381
    %5411 = vmatprep.subr.mxu0 0.0
    %5412 = vmatpush1.msra.mxu0 %v5382
    %5413 = vmatprep.subr.mxu0 0.0
    %5414 = vmatpush1.msra.mxu0 %v5383
    %5415 = vmatprep.subr.mxu0 0.0
    %5416 = vmatpush1.msra.mxu0 %v5384
    %5417 = vmatprep.subr.mxu0 0.0
    %5418 = vmatpush1.msra.mxu0 %v5385
    %5419 = vmatprep.subr.mxu0 0.0
    %5420 = vmatpush1.msra.mxu0 %v5386
    %5421 = vmatprep.subr.mxu0 0.0
    %5422 = vmatpush1.msra.mxu0 %v5387
    %5423 = vmatprep.subr.mxu0 0.0
    %5424 = vmatpush1.msra.mxu0 %v5388
    %5425 = vmatprep.subr.mxu0 0.0
    %5426 = vmatpush1.msra.mxu0 %v5389
    %5427 = vmatprep.subr.mxu0 0.0
    %5428 = vmatpush1.msra.mxu0 %v5390
    %5429 = vmatprep.subr.mxu0 0.0
    %5430 = vmatpush1.msra.mxu0 %v5391
    %5431 = vmatprep.subr.mxu0 0.0
    %5432 = vmatpush1.msra.mxu0 0.0
    %5433 = vmatprep.subr.mxu0 0.0
    %5434 = vmatpush1.msra.mxu0 0.0
    %5435 = vmatprep.subr.mxu0 0.0
    %5436 = vmatpush1.msra.mxu0 0.0
    %5437 = vmatprep.subr.mxu0 0.0
    %5438 = vmatpush1.msra.mxu0 0.0
    %5439 = vmatprep.subr.mxu0 0.0
    %5440 = vmatpush1.msra.mxu0 0.0
    %5441 = vmatprep.subr.mxu0 0.0
    %5442 = vmatpush1.msra.mxu0 0.0
    %5443 = vmatprep.subr.mxu0 0.0
    %5444 = vmatpush1.msra.mxu0 0.0
    %5445 = vmatprep.subr.mxu0 0.0
    %5446 = vmatpush1.msra.mxu0 0.0
    %5447 = vmatprep.subr.mxu0 0.0
    %5448 = vmatpush1.msra.mxu0 0.0
    %5449 = vmatprep.subr.mxu0 0.0
    %5450 = vmatpush1.msra.mxu0 0.0
    %5451 = vmatprep.subr.mxu0 0.0
    %5452 = vmatpush1.msra.mxu0 0.0
    %5453 = vmatprep.subr.mxu0 0.0
    %5454 = vmatpush1.msra.mxu0 0.0
    %5455 = vmatprep.subr.mxu0 0.0
    %5456 = vmatpush1.msra.mxu0 0.0
    %5457 = vmatprep.subr.mxu0 0.0
    %5458 = vmatpush1.msra.mxu0 0.0
    %5459 = vmatprep.subr.mxu0 0.0
    %5460 = vmatpush1.msra.mxu0 0.0
    %5461 = vmatprep.subr.mxu0 0.0
    %5462 = vmatpush1.msra.mxu0 0.0
    %5463 = vmatprep.mubr.f32.mxu0 0.0
    %5464 = vmatmul.mubr.f32.gmra.mrb[0].mxu0 %v5375
    %v5465 = vpop.f32.mrb[0].mxu0
    %v5466 = vadd.f32 %v5397, %v5465
    %v5467 = vpop.f32.mrb[0].mxu0
    %5468 = vdwg.mxu0
    %5469 = vst [vmem:[%s9] sm:$0x3] %v5466
    // Predicated region
    $region58: #{forward.1} parent=1 // pred_check
      _
    $region59: #{forward.1} parent=1 // pred_check_branch
      %5471 = sbr.rel (0) target = $region61
    $region60: #{forward.1} parent=1 // pred_region
      _
    $region61: #{forward.1} parent=1 // pred_fallthru
      _
    // Predicated region
    $region62: #{forward.1} parent=1 // pred_check
      _
    $region63: #{forward.1} parent=1 // pred_check_branch
      %5473 = sbr.rel (0) target = $region65
    $region64: #{forward.1} parent=1 // pred_region
      _
    $region65: #{forward.1} parent=1 // pred_fallthru
      _
    %5474 = vsyncpa [#allocation3], 1
    %5475 = vsyncpa [#allocation5], 1
    %5476 = vsyncpa [#allocation8], 1

</llo_original>
